<compile_context>
chip_gen: v7x
topology: tpu7x:2x2x1
jax: 0.10.0
libtpu: 0.0.40
codegen_flags: <defaults>
</compile_context>

<pallas_src>
import functools

import jax
import jax.numpy as jnp
from jax.experimental import pallas as pl
from jax.experimental.pallas import tpu as pltpu


# ------------------------------ fused kernel --------------------------------

def _lenet_kernel(x_ref, w1_ref, b1_ref, w2_ref, b2_ref, w3_ref, b3_ref,
                  w4_ref, b4_ref, w5_ref, b5_ref, o_ref,
                  s1_ref, s2_ref, g_ref, *, img, bt):
    """Whole LeNet_tail forward on one batch tile, fully VMEM-resident.

    Activation layout: (channels, flat) with flat = (h*img + w)*bt + b_local
    (batch innermost on lanes).  Conv / pool taps are statically shifted lane
    slices; pooled maps stay at strided ("holey") lane positions (stride 2*bt
    after pool1, 4*bt after pool2).  Each stage crops only its tail by the
    maximum shift it uses, so every slice is static and in-bounds and valid
    positions are never dropped.
    """
    kh = kw = 5
    f32 = jnp.float32
    bf16 = jnp.bfloat16

    def stack_taps(a, s_ref, step):
        # a: (Cin, L_in) f32 value.  Writes the 25 shifted slices tap-major
        # into the (25*Cin, L_out) f32 scratch and returns it as bf16.
        cin, l_in = a.shape
        l_out = s_ref.shape[1]
        assert s_ref.shape[0] == kh * kw * cin
        # tail-crop accounting: max shift + output length == input length
        assert step * bt * ((kh - 1) * img + (kw - 1)) + l_out == l_in
        for i in range(kh):
            for j in range(kw):
                d = step * bt * (i * img + j)
                t = i * kw + j
                s_ref[pl.ds(t * cin, cin), :] = a[:, d:d + l_out]
        return s_ref[...].astype(bf16)

    def conv_block(a, s_ref, w_ref_, b_ref_, step):
        # ONE MXU dot per conv: (Cout, 25*Cin) x (25*Cin, L_out), f32 accum.
        stacked = stack_taps(a, s_ref, step)
        out = jnp.dot(w_ref_[...], stacked, preferred_element_type=f32)
        return jnp.maximum(out + b_ref_[...], 0.0)          # bias + ReLU in f32

    def max_pool_2x2(a, step):
        d = step * bt
        l_out = a.shape[1] - d * (img + 1)

        def win(off):
            return a[:, off:off + l_out]

        return jnp.maximum(jnp.maximum(win(0), win(d)),
                           jnp.maximum(win(d * img), win(d * (img + 1))))

    x = x_ref[...]                                  # (3, bt*img*img) f32
    y = conv_block(x, s1_ref, w1_ref, b1_ref, 1)    # conv1+ReLU (6, 892*bt)
    y = max_pool_2x2(y, 1)                          # pool1      (6, 859*bt)  stride-2
    y = conv_block(y, s2_ref, w2_ref, b2_ref, 2)    # conv2+ReLU (16, 595*bt) stride-2
    y = max_pool_2x2(y, 2)                          # pool2      (16, 529*bt) stride-4

    # fc1 input gather: with batch innermost on lanes, the valid values for
    # tap (i, j) over all bt images are one contiguous bt-wide lane slice.
    c2 = y.shape[0]                                 # 16
    assert 4 * bt * ((kh - 1) * img + (kw - 1)) + bt <= y.shape[1]
    for i in range(kh):
        for j in range(kw):
            d = 4 * bt * (i * img + j)
            t = i * kw + j
            g_ref[pl.ds(t * c2, c2), :] = y[:, d:d + bt]
    g = g_ref[...].astype(bf16)                     # (400, bt) dense fc1 input

    a3 = jnp.maximum(
        jnp.dot(w3_ref[...], g, preferred_element_type=f32) + b3_ref[...], 0.0)
    a4 = jnp.maximum(
        jnp.dot(w4_ref[...], a3.astype(bf16),
                preferred_element_type=f32) + b4_ref[...], 0.0)
    a5 = jnp.dot(w5_ref[...], a4.astype(bf16),
                 preferred_element_type=f32) + b5_ref[...]
    o_ref[0] = a5.astype(o_ref.dtype)               # (10, bt)


# ------------------------------ host wrappers --------------------------------

def init_params(key):
    """Parameters in the original PyTorch layouts (f32)."""
    ks = jax.random.split(key, 10)
    f32 = jnp.float32
    return {
        "w1": jax.random.normal(ks[0], (6, 3, 5, 5), f32) * 0.1,
        "b1": jax.random.normal(ks[1], (6,), f32) * 0.1,
        "w2": jax.random.normal(ks[2], (16, 6, 5, 5), f32) * 0.1,
        "b2": jax.random.normal(ks[3], (16,), f32) * 0.1,
        "w3": jax.random.normal(ks[4], (120, 400), f32) * 0.05,
        "b3": jax.random.normal(ks[5], (120,), f32) * 0.05,
        "w4": jax.random.normal(ks[6], (84, 120), f32) * 0.05,
        "b4": jax.random.normal(ks[7], (84,), f32) * 0.05,
        "w5": jax.random.normal(ks[8], (10, 84), f32) * 0.05,
        "b5": jax.random.normal(ks[9], (10,), f32) * 0.05,
    }


def prepare_params(p):
    """One-time weight repack into kernel layouts (outside the jit hot path).

    Conv weights -> lane-dense bf16 (Cout, kh*kw*Cin), column = tap*Cin + c.
    fc1 weight   -> columns permuted to the tap-major gather order.
    Biases stay f32, shape (C, 1) (bias/ReLU are applied in f32).
    """
    bf16 = jnp.bfloat16

    def conv_pack(w):                                 # (O, C, kh, kw) -> (O, kh*kw*C)
        o, c, kh, kw = w.shape
        return jnp.transpose(w, (0, 2, 3, 1)).reshape(o, kh * kw * c).astype(bf16)

    w3 = p["w3"].reshape(120, 16, 5, 5)               # PyTorch flatten: c*25 + i*5 + j
    w3 = jnp.transpose(w3, (0, 2, 3, 1)).reshape(120, 400).astype(bf16)
    return {
        "w1": conv_pack(p["w1"]), "b1": p["b1"].reshape(6, 1),
        "w2": conv_pack(p["w2"]), "b2": p["b2"].reshape(16, 1),
        "w3": w3, "b3": p["b3"].reshape(120, 1),
        "w4": p["w4"].astype(bf16), "b4": p["b4"].reshape(84, 1),
        "w5": p["w5"].astype(bf16), "b5": p["b5"].reshape(10, 1),
    }


def lenet_tail_forward(x, pp, *, batch_block=None, vmem_limit_mb=None):
    """x: (B, 3, 32, 32) NCHW float32; pp: prepare_params(...) output.

    batch_block: batch tile per grid step.  Default nb=1 (best on single-TC
    v5e/v6e, where the grid is a serial loop).  On v7x pass batch_block=B//2
    so the "parallel" grid axis shards across both TensorCores.  Keep
    batch_block <= ~32 on v7x (64 MiB VMEM); larger tiles are fine on
    v5e/v6e if vmem_limit_mb is raised.
    """
    B, C, H, W = x.shape
    assert (C, H, W) == (3, 32, 32), "LeNet_tail geometry requires 3x32x32 input"
    if batch_block is None:
        batch_block = B if (B <= 16 or B % 16 != 0) else 16
    assert B % batch_block == 0
    bt = batch_block
    nb = B // bt
    P = H * W

    # Tail-crop accounting (all lengths in lanes; bt = lanes per spatial pos).
    dmax = (5 - 1) * W + (5 - 1)            # 132: max conv tap shift (step 1)
    l1 = (P - dmax) * bt                    # conv1 out
    l2 = l1 - (W + 1) * bt                  # pool1 out
    l3 = l2 - 2 * dmax * bt                 # conv2 out
    l4 = l3 - 2 * (W + 1) * bt              # pool2 out
    assert l4 >= 4 * dmax * bt + bt         # final gather stays in bounds

    # Single cheap layout transform: (B,3,H,W) -> (3, nb * H*W * bt) with
    # batch INNERMOST on lanes inside each batch tile.
    x_flat = (x.reshape(nb, bt, C, P)
              .transpose(2, 0, 3, 1)
              .reshape(C, nb * P * bt))

    kernel = functools.partial(_lenet_kernel, img=W, bt=bt)

    def fixed(a):
        nd = a.ndim
        return pl.BlockSpec(a.shape, lambda i, nd=nd: (0,) * nd)

    if vmem_limit_mb is None and bt > 16:
        # ~1 MiB of f32 scratch/activations per batch element; raise the
        # scoped-VMEM limit for large tiles (v5e default is only 16 MiB).
        vmem_limit_mb = 64

    flops = nb * 2 * (6 * 75 * l1 + 16 * 150 * l3
                      + (120 * 400 + 84 * 120 + 10 * 84) * bt)
    bytes_accessed = (int(x_flat.size) * 4
                      + sum(int(v.size) * v.dtype.itemsize for v in pp.values())
                      + nb * 10 * bt * 4)

    out = pl.pallas_call(
        kernel,
        out_shape=jax.ShapeDtypeStruct((nb, 10, bt), jnp.float32),
        grid=(nb,),
        in_specs=[
            pl.BlockSpec((C, P * bt), lambda i: (0, i)),
            fixed(pp["w1"]), fixed(pp["b1"]),
            fixed(pp["w2"]), fixed(pp["b2"]),
            fixed(pp["w3"]), fixed(pp["b3"]),
            fixed(pp["w4"]), fixed(pp["b4"]),
            fixed(pp["w5"]), fixed(pp["b5"]),
        ],
        out_specs=pl.BlockSpec((1, 10, bt), lambda i: (i, 0, 0)),
        scratch_shapes=[
            pltpu.VMEM((75, l1), jnp.float32),    # stacked conv1 operand
            pltpu.VMEM((150, l3), jnp.float32),   # stacked conv2 operand
            pltpu.VMEM((400, bt), jnp.float32),   # dense fc1 input gather
        ],
        compiler_params=pltpu.CompilerParams(
            dimension_semantics=("parallel",),
            vmem_limit_bytes=None if vmem_limit_mb is None
            else vmem_limit_mb * 1024 * 1024),
        cost_estimate=pl.CostEstimate(flops=int(flops), transcendentals=0,
                                      bytes_accessed=int(bytes_accessed)),
    )(x_flat, pp["w1"], pp["b1"], pp["w2"], pp["b2"], pp["w3"], pp["b3"],
      pp["w4"], pp["b4"], pp["w5"], pp["b5"])

    return out.transpose(0, 2, 1).reshape(B, 10)


# --------------------------- pure-JAX reference ------------------------------

def lenet_tail_reference(x, p):
    def conv(x, w, b):
        y = jax.lax.conv_general_dilated(
            x, w, window_strides=(1, 1), padding="VALID",
            dimension_numbers=("NCHW", "OIHW", "NCHW"))
        return y + b[None, :, None, None]

    def pool(x):
        return jax.lax.reduce_window(x, -jnp.inf, jax.lax.max,
                                     (1, 1, 2, 2), (1, 1, 2, 2), "VALID")

    out = jax.nn.relu(conv(x, p["w1"], p["b1"]))
    out = pool(out)
    out = jax.nn.relu(conv(out, p["w2"], p["b2"]))
    out = pool(out)
    out = out.reshape(out.shape[0], -1)
    out = jax.nn.relu(out @ p["w3"].T + p["b3"])
    out = jax.nn.relu(out @ p["w4"].T + p["b4"])
    out = out @ p["w5"].T + p["b5"]
    return out


if __name__ == "__main__":
    key = jax.random.PRNGKey(0)
    k_param, k_x = jax.random.split(key)
    params = init_params(k_param)
    prepped = prepare_params(params)          # one-time bf16 / lane-dense repack

    # LeNet geometry requires 32x32 spatial input (-> 16*5*5 = 400 flatten).
    x = jax.random.normal(k_x, (2, 3, 32, 32), jnp.float32)

    out = jax.jit(lenet_tail_forward)(x, prepped)
    out = jax.block_until_ready(out)

    ref = lenet_tail_reference(x, params)
    assert out.shape == (2, 10), out.shape
    max_err = float(jnp.max(jnp.abs(out - ref)))
    # bf16 MXU operands (f32 accumulation) -> looser tolerance than pure f32.
    assert jnp.allclose(out, ref, atol=5e-2, rtol=5e-2), max_err
    print("KERNEL_OK")
</pallas_src>

<mosaic_0001>
module attributes {stable_mosaic.version = 11 : i64} {
  func.func @_lenet_kernel(%arg0: i32, %arg1: memref<3x2048xf32, #tpu.memory_space<vmem>>, %arg2: memref<6x75xbf16, #tpu.memory_space<vmem>>, %arg3: memref<6x1xf32, #tpu.memory_space<vmem>>, %arg4: memref<16x150xbf16, #tpu.memory_space<vmem>>, %arg5: memref<16x1xf32, #tpu.memory_space<vmem>>, %arg6: memref<120x400xbf16, #tpu.memory_space<vmem>>, %arg7: memref<120x1xf32, #tpu.memory_space<vmem>>, %arg8: memref<84x120xbf16, #tpu.memory_space<vmem>>, %arg9: memref<84x1xf32, #tpu.memory_space<vmem>>, %arg10: memref<10x84xbf16, #tpu.memory_space<vmem>>, %arg11: memref<10x1xf32, #tpu.memory_space<vmem>>, %arg12: memref<1x10x2xf32, #tpu.memory_space<vmem>>, %arg13: memref<75x1784xf32, #tpu.memory_space<vmem>>, %arg14: memref<150x1190xf32, #tpu.memory_space<vmem>>, %arg15: memref<400x2xf32, #tpu.memory_space<vmem>>) attributes {dimension_semantics = [#tpu.dimension_semantics<parallel>], iteration_bounds = array<i64: 1>, scalar_prefetch = 0 : i64, scratch_operands = 3 : i64, tpu.core_type = #tpu.core_type<tc>, window_params = [{transform_indices = @transform_0, window_bounds = array<i64: 3, 2048>}, {pipeline_mode = #tpu.pipeline_mode<synchronous>, transform_indices = @transform_1, window_bounds = array<i64: 6, 75>}, {pipeline_mode = #tpu.pipeline_mode<synchronous>, transform_indices = @transform_2, window_bounds = array<i64: 6, 1>}, {pipeline_mode = #tpu.pipeline_mode<synchronous>, transform_indices = @transform_3, window_bounds = array<i64: 16, 150>}, {pipeline_mode = #tpu.pipeline_mode<synchronous>, transform_indices = @transform_4, window_bounds = array<i64: 16, 1>}, {pipeline_mode = #tpu.pipeline_mode<synchronous>, transform_indices = @transform_5, window_bounds = array<i64: 120, 400>}, {pipeline_mode = #tpu.pipeline_mode<synchronous>, transform_indices = @transform_6, window_bounds = array<i64: 120, 1>}, {pipeline_mode = #tpu.pipeline_mode<synchronous>, transform_indices = @transform_7, window_bounds = array<i64: 84, 120>}, {pipeline_mode = #tpu.pipeline_mode<synchronous>, transform_indices = @transform_8, window_bounds = array<i64: 84, 1>}, {pipeline_mode = #tpu.pipeline_mode<synchronous>, transform_indices = @transform_9, window_bounds = array<i64: 10, 84>}, {pipeline_mode = #tpu.pipeline_mode<synchronous>, transform_indices = @transform_10, window_bounds = array<i64: 10, 1>}, {transform_indices = @transform_11, window_bounds = array<i64: 1, 10, 2>}]} {
    %c0 = arith.constant 0 : index
    %c0_0 = arith.constant 0 : index
    %0 = vector.load %arg1[%c0, %c0_0] : memref<3x2048xf32, #tpu.memory_space<vmem>>, vector<3x2048xf32>
    %1 = vector.extract_strided_slice %0 {offsets = [0, 0], sizes = [3, 1784], strides = [1, 1]} : vector<3x2048xf32> to vector<3x1784xf32>
    %c0_1 = arith.constant 0 : index
    %c0_2 = arith.constant 0 : index
    %2 = vector.load %arg13[%c0_1, %c0_2] : memref<75x1784xf32, #tpu.memory_space<vmem>>, vector<3x1784xf32>
    tpu.vector_store %arg13[%c0_1, %c0_2], %1 {strides = array<i32>} : memref<75x1784xf32, #tpu.memory_space<vmem>>, vector<3x1784xf32>,
    %3 = vector.extract_strided_slice %0 {offsets = [0, 2], sizes = [3, 1784], strides = [1, 1]} : vector<3x2048xf32> to vector<3x1784xf32>
    %c3 = arith.constant 3 : index
    %c0_3 = arith.constant 0 : index
    %4 = vector.load %arg13[%c3, %c0_3] : memref<75x1784xf32, #tpu.memory_space<vmem>>, vector<3x1784xf32>
    tpu.vector_store %arg13[%c3, %c0_3], %3 {strides = array<i32>} : memref<75x1784xf32, #tpu.memory_space<vmem>>, vector<3x1784xf32>,
    %5 = vector.extract_strided_slice %0 {offsets = [0, 4], sizes = [3, 1784], strides = [1, 1]} : vector<3x2048xf32> to vector<3x1784xf32>
    %c6 = arith.constant 6 : index
    %c0_4 = arith.constant 0 : index
    %6 = vector.load %arg13[%c6, %c0_4] : memref<75x1784xf32, #tpu.memory_space<vmem>>, vector<3x1784xf32>
    tpu.vector_store %arg13[%c6, %c0_4], %5 {strides = array<i32>} : memref<75x1784xf32, #tpu.memory_space<vmem>>, vector<3x1784xf32>,
    %7 = vector.extract_strided_slice %0 {offsets = [0, 6], sizes = [3, 1784], strides = [1, 1]} : vector<3x2048xf32> to vector<3x1784xf32>
    %c9 = arith.constant 9 : index
    %c0_5 = arith.constant 0 : index
    %8 = vector.load %arg13[%c9, %c0_5] : memref<75x1784xf32, #tpu.memory_space<vmem>>, vector<3x1784xf32>
    tpu.vector_store %arg13[%c9, %c0_5], %7 {strides = array<i32>} : memref<75x1784xf32, #tpu.memory_space<vmem>>, vector<3x1784xf32>,
    %9 = vector.extract_strided_slice %0 {offsets = [0, 8], sizes = [3, 1784], strides = [1, 1]} : vector<3x2048xf32> to vector<3x1784xf32>
    %c12 = arith.constant 12 : index
    %c0_6 = arith.constant 0 : index
    %10 = vector.load %arg13[%c12, %c0_6] : memref<75x1784xf32, #tpu.memory_space<vmem>>, vector<3x1784xf32>
    tpu.vector_store %arg13[%c12, %c0_6], %9 {strides = array<i32>} : memref<75x1784xf32, #tpu.memory_space<vmem>>, vector<3x1784xf32>,
    %11 = vector.extract_strided_slice %0 {offsets = [0, 64], sizes = [3, 1784], strides = [1, 1]} : vector<3x2048xf32> to vector<3x1784xf32>
    %c15 = arith.constant 15 : index
    %c0_7 = arith.constant 0 : index
    %12 = vector.load %arg13[%c15, %c0_7] : memref<75x1784xf32, #tpu.memory_space<vmem>>, vector<3x1784xf32>
    tpu.vector_store %arg13[%c15, %c0_7], %11 {strides = array<i32>} : memref<75x1784xf32, #tpu.memory_space<vmem>>, vector<3x1784xf32>,
    %13 = vector.extract_strided_slice %0 {offsets = [0, 66], sizes = [3, 1784], strides = [1, 1]} : vector<3x2048xf32> to vector<3x1784xf32>
    %c18 = arith.constant 18 : index
    %c0_8 = arith.constant 0 : index
    %14 = vector.load %arg13[%c18, %c0_8] : memref<75x1784xf32, #tpu.memory_space<vmem>>, vector<3x1784xf32>
    tpu.vector_store %arg13[%c18, %c0_8], %13 {strides = array<i32>} : memref<75x1784xf32, #tpu.memory_space<vmem>>, vector<3x1784xf32>,
    %15 = vector.extract_strided_slice %0 {offsets = [0, 68], sizes = [3, 1784], strides = [1, 1]} : vector<3x2048xf32> to vector<3x1784xf32>
    %c21 = arith.constant 21 : index
    %c0_9 = arith.constant 0 : index
    %16 = vector.load %arg13[%c21, %c0_9] : memref<75x1784xf32, #tpu.memory_space<vmem>>, vector<3x1784xf32>
    tpu.vector_store %arg13[%c21, %c0_9], %15 {strides = array<i32>} : memref<75x1784xf32, #tpu.memory_space<vmem>>, vector<3x1784xf32>,
    %17 = vector.extract_strided_slice %0 {offsets = [0, 70], sizes = [3, 1784], strides = [1, 1]} : vector<3x2048xf32> to vector<3x1784xf32>
    %c24 = arith.constant 24 : index
    %c0_10 = arith.constant 0 : index
    %18 = vector.load %arg13[%c24, %c0_10] : memref<75x1784xf32, #tpu.memory_space<vmem>>, vector<3x1784xf32>
    tpu.vector_store %arg13[%c24, %c0_10], %17 {strides = array<i32>} : memref<75x1784xf32, #tpu.memory_space<vmem>>, vector<3x1784xf32>,
    %19 = vector.extract_strided_slice %0 {offsets = [0, 72], sizes = [3, 1784], strides = [1, 1]} : vector<3x2048xf32> to vector<3x1784xf32>
    %c27 = arith.constant 27 : index
    %c0_11 = arith.constant 0 : index
    %20 = vector.load %arg13[%c27, %c0_11] : memref<75x1784xf32, #tpu.memory_space<vmem>>, vector<3x1784xf32>
    tpu.vector_store %arg13[%c27, %c0_11], %19 {strides = array<i32>} : memref<75x1784xf32, #tpu.memory_space<vmem>>, vector<3x1784xf32>,
    %21 = vector.extract_strided_slice %0 {offsets = [0, 128], sizes = [3, 1784], strides = [1, 1]} : vector<3x2048xf32> to vector<3x1784xf32>
    %c30 = arith.constant 30 : index
    %c0_12 = arith.constant 0 : index
    %22 = vector.load %arg13[%c30, %c0_12] : memref<75x1784xf32, #tpu.memory_space<vmem>>, vector<3x1784xf32>
    tpu.vector_store %arg13[%c30, %c0_12], %21 {strides = array<i32>} : memref<75x1784xf32, #tpu.memory_space<vmem>>, vector<3x1784xf32>,
    %23 = vector.extract_strided_slice %0 {offsets = [0, 130], sizes = [3, 1784], strides = [1, 1]} : vector<3x2048xf32> to vector<3x1784xf32>
    %c33 = arith.constant 33 : index
    %c0_13 = arith.constant 0 : index
    %24 = vector.load %arg13[%c33, %c0_13] : memref<75x1784xf32, #tpu.memory_space<vmem>>, vector<3x1784xf32>
    tpu.vector_store %arg13[%c33, %c0_13], %23 {strides = array<i32>} : memref<75x1784xf32, #tpu.memory_space<vmem>>, vector<3x1784xf32>,
    %25 = vector.extract_strided_slice %0 {offsets = [0, 132], sizes = [3, 1784], strides = [1, 1]} : vector<3x2048xf32> to vector<3x1784xf32>
    %c36 = arith.constant 36 : index
    %c0_14 = arith.constant 0 : index
    %26 = vector.load %arg13[%c36, %c0_14] : memref<75x1784xf32, #tpu.memory_space<vmem>>, vector<3x1784xf32>
    tpu.vector_store %arg13[%c36, %c0_14], %25 {strides = array<i32>} : memref<75x1784xf32, #tpu.memory_space<vmem>>, vector<3x1784xf32>,
    %27 = vector.extract_strided_slice %0 {offsets = [0, 134], sizes = [3, 1784], strides = [1, 1]} : vector<3x2048xf32> to vector<3x1784xf32>
    %c39 = arith.constant 39 : index
    %c0_15 = arith.constant 0 : index
    %28 = vector.load %arg13[%c39, %c0_15] : memref<75x1784xf32, #tpu.memory_space<vmem>>, vector<3x1784xf32>
    tpu.vector_store %arg13[%c39, %c0_15], %27 {strides = array<i32>} : memref<75x1784xf32, #tpu.memory_space<vmem>>, vector<3x1784xf32>,
    %29 = vector.extract_strided_slice %0 {offsets = [0, 136], sizes = [3, 1784], strides = [1, 1]} : vector<3x2048xf32> to vector<3x1784xf32>
    %c42 = arith.constant 42 : index
    %c0_16 = arith.constant 0 : index
    %30 = vector.load %arg13[%c42, %c0_16] : memref<75x1784xf32, #tpu.memory_space<vmem>>, vector<3x1784xf32>
    tpu.vector_store %arg13[%c42, %c0_16], %29 {strides = array<i32>} : memref<75x1784xf32, #tpu.memory_space<vmem>>, vector<3x1784xf32>,
    %31 = vector.extract_strided_slice %0 {offsets = [0, 192], sizes = [3, 1784], strides = [1, 1]} : vector<3x2048xf32> to vector<3x1784xf32>
    %c45 = arith.constant 45 : index
    %c0_17 = arith.constant 0 : index
    %32 = vector.load %arg13[%c45, %c0_17] : memref<75x1784xf32, #tpu.memory_space<vmem>>, vector<3x1784xf32>
    tpu.vector_store %arg13[%c45, %c0_17], %31 {strides = array<i32>} : memref<75x1784xf32, #tpu.memory_space<vmem>>, vector<3x1784xf32>,
    %33 = vector.extract_strided_slice %0 {offsets = [0, 194], sizes = [3, 1784], strides = [1, 1]} : vector<3x2048xf32> to vector<3x1784xf32>
    %c48 = arith.constant 48 : index
    %c0_18 = arith.constant 0 : index
    %34 = vector.load %arg13[%c48, %c0_18] : memref<75x1784xf32, #tpu.memory_space<vmem>>, vector<3x1784xf32>
    tpu.vector_store %arg13[%c48, %c0_18], %33 {strides = array<i32>} : memref<75x1784xf32, #tpu.memory_space<vmem>>, vector<3x1784xf32>,
    %35 = vector.extract_strided_slice %0 {offsets = [0, 196], sizes = [3, 1784], strides = [1, 1]} : vector<3x2048xf32> to vector<3x1784xf32>
    %c51 = arith.constant 51 : index
    %c0_19 = arith.constant 0 : index
    %36 = vector.load %arg13[%c51, %c0_19] : memref<75x1784xf32, #tpu.memory_space<vmem>>, vector<3x1784xf32>
    tpu.vector_store %arg13[%c51, %c0_19], %35 {strides = array<i32>} : memref<75x1784xf32, #tpu.memory_space<vmem>>, vector<3x1784xf32>,
    %37 = vector.extract_strided_slice %0 {offsets = [0, 198], sizes = [3, 1784], strides = [1, 1]} : vector<3x2048xf32> to vector<3x1784xf32>
    %c54 = arith.constant 54 : index
    %c0_20 = arith.constant 0 : index
    %38 = vector.load %arg13[%c54, %c0_20] : memref<75x1784xf32, #tpu.memory_space<vmem>>, vector<3x1784xf32>
    tpu.vector_store %arg13[%c54, %c0_20], %37 {strides = array<i32>} : memref<75x1784xf32, #tpu.memory_space<vmem>>, vector<3x1784xf32>,
    %39 = vector.extract_strided_slice %0 {offsets = [0, 200], sizes = [3, 1784], strides = [1, 1]} : vector<3x2048xf32> to vector<3x1784xf32>
    %c57 = arith.constant 57 : index
    %c0_21 = arith.constant 0 : index
    %40 = vector.load %arg13[%c57, %c0_21] : memref<75x1784xf32, #tpu.memory_space<vmem>>, vector<3x1784xf32>
    tpu.vector_store %arg13[%c57, %c0_21], %39 {strides = array<i32>} : memref<75x1784xf32, #tpu.memory_space<vmem>>, vector<3x1784xf32>,
    %41 = vector.extract_strided_slice %0 {offsets = [0, 256], sizes = [3, 1784], strides = [1, 1]} : vector<3x2048xf32> to vector<3x1784xf32>
    %c60 = arith.constant 60 : index
    %c0_22 = arith.constant 0 : index
    %42 = vector.load %arg13[%c60, %c0_22] : memref<75x1784xf32, #tpu.memory_space<vmem>>, vector<3x1784xf32>
    tpu.vector_store %arg13[%c60, %c0_22], %41 {strides = array<i32>} : memref<75x1784xf32, #tpu.memory_space<vmem>>, vector<3x1784xf32>,
    %43 = vector.extract_strided_slice %0 {offsets = [0, 258], sizes = [3, 1784], strides = [1, 1]} : vector<3x2048xf32> to vector<3x1784xf32>
    %c63 = arith.constant 63 : index
    %c0_23 = arith.constant 0 : index
    %44 = vector.load %arg13[%c63, %c0_23] : memref<75x1784xf32, #tpu.memory_space<vmem>>, vector<3x1784xf32>
    tpu.vector_store %arg13[%c63, %c0_23], %43 {strides = array<i32>} : memref<75x1784xf32, #tpu.memory_space<vmem>>, vector<3x1784xf32>,
    %45 = vector.extract_strided_slice %0 {offsets = [0, 260], sizes = [3, 1784], strides = [1, 1]} : vector<3x2048xf32> to vector<3x1784xf32>
    %c66 = arith.constant 66 : index
    %c0_24 = arith.constant 0 : index
    %46 = vector.load %arg13[%c66, %c0_24] : memref<75x1784xf32, #tpu.memory_space<vmem>>, vector<3x1784xf32>
    tpu.vector_store %arg13[%c66, %c0_24], %45 {strides = array<i32>} : memref<75x1784xf32, #tpu.memory_space<vmem>>, vector<3x1784xf32>,
    %47 = vector.extract_strided_slice %0 {offsets = [0, 262], sizes = [3, 1784], strides = [1, 1]} : vector<3x2048xf32> to vector<3x1784xf32>
    %c69 = arith.constant 69 : index
    %c0_25 = arith.constant 0 : index
    %48 = vector.load %arg13[%c69, %c0_25] : memref<75x1784xf32, #tpu.memory_space<vmem>>, vector<3x1784xf32>
    tpu.vector_store %arg13[%c69, %c0_25], %47 {strides = array<i32>} : memref<75x1784xf32, #tpu.memory_space<vmem>>, vector<3x1784xf32>,
    %49 = vector.extract_strided_slice %0 {offsets = [0, 264], sizes = [3, 1784], strides = [1, 1]} : vector<3x2048xf32> to vector<3x1784xf32>
    %c72 = arith.constant 72 : index
    %c0_26 = arith.constant 0 : index
    %50 = vector.load %arg13[%c72, %c0_26] : memref<75x1784xf32, #tpu.memory_space<vmem>>, vector<3x1784xf32>
    tpu.vector_store %arg13[%c72, %c0_26], %49 {strides = array<i32>} : memref<75x1784xf32, #tpu.memory_space<vmem>>, vector<3x1784xf32>,
    %c0_27 = arith.constant 0 : index
    %c0_28 = arith.constant 0 : index
    %51 = vector.load %arg13[%c0_27, %c0_28] : memref<75x1784xf32, #tpu.memory_space<vmem>>, vector<75x1784xf32>
    %52 = arith.truncf %51 : vector<75x1784xf32> to vector<75x1784xbf16>
    %c0_29 = arith.constant 0 : index
    %c0_30 = arith.constant 0 : index
    %53 = vector.load %arg2[%c0_29, %c0_30] : memref<6x75xbf16, #tpu.memory_space<vmem>>, vector<6x75xbf16>
    %cst = arith.constant dense<0.000000e+00> : vector<6x1784xf32>
    %54 = tpu.matmul %53, %52, %cst {dimension_numbers = #tpu.dot_dimension_numbers<[1], [0], [0], [1], [0, 0, 1, 1], [], []>} : vector<6x75xbf16>, vector<75x1784xbf16>, vector<6x1784xf32> -> vector<6x1784xf32>
    %c0_31 = arith.constant 0 : index
    %c0_32 = arith.constant 0 : index
    %55 = vector.load %arg3[%c0_31, %c0_32] : memref<6x1xf32, #tpu.memory_space<vmem>>, vector<6x1xf32>
    %56 = vector.broadcast %55 : vector<6x1xf32> to vector<6x1784xf32>
    %57 = arith.addf %54, %56 : vector<6x1784xf32>
    %cst_33 = arith.constant 0.000000e+00 : f32
    %58 = vector.broadcast %cst_33 : f32 to vector<6x1784xf32>
    %59 = arith.maximumf %57, %58 : vector<6x1784xf32>
    %60 = vector.extract_strided_slice %59 {offsets = [0, 0], sizes = [6, 1718], strides = [1, 1]} : vector<6x1784xf32> to vector<6x1718xf32>
    %61 = vector.extract_strided_slice %59 {offsets = [0, 2], sizes = [6, 1718], strides = [1, 1]} : vector<6x1784xf32> to vector<6x1718xf32>
    %62 = arith.maximumf %60, %61 : vector<6x1718xf32>
    %63 = vector.extract_strided_slice %59 {offsets = [0, 64], sizes = [6, 1718], strides = [1, 1]} : vector<6x1784xf32> to vector<6x1718xf32>
    %64 = vector.extract_strided_slice %59 {offsets = [0, 66], sizes = [6, 1718], strides = [1, 1]} : vector<6x1784xf32> to vector<6x1718xf32>
    %65 = arith.maximumf %63, %64 : vector<6x1718xf32>
    %66 = arith.maximumf %62, %65 : vector<6x1718xf32>
    %67 = vector.extract_strided_slice %66 {offsets = [0, 0], sizes = [6, 1190], strides = [1, 1]} : vector<6x1718xf32> to vector<6x1190xf32>
    %c0_34 = arith.constant 0 : index
    %c0_35 = arith.constant 0 : index
    %68 = vector.load %arg14[%c0_34, %c0_35] : memref<150x1190xf32, #tpu.memory_space<vmem>>, vector<6x1190xf32>
    tpu.vector_store %arg14[%c0_34, %c0_35], %67 {strides = array<i32>} : memref<150x1190xf32, #tpu.memory_space<vmem>>, vector<6x1190xf32>,
    %69 = vector.extract_strided_slice %66 {offsets = [0, 4], sizes = [6, 1190], strides = [1, 1]} : vector<6x1718xf32> to vector<6x1190xf32>
    %c6_36 = arith.constant 6 : index
    %c0_37 = arith.constant 0 : index
    %70 = vector.load %arg14[%c6_36, %c0_37] : memref<150x1190xf32, #tpu.memory_space<vmem>>, vector<6x1190xf32>
    tpu.vector_store %arg14[%c6_36, %c0_37], %69 {strides = array<i32>} : memref<150x1190xf32, #tpu.memory_space<vmem>>, vector<6x1190xf32>,
    %71 = vector.extract_strided_slice %66 {offsets = [0, 8], sizes = [6, 1190], strides = [1, 1]} : vector<6x1718xf32> to vector<6x1190xf32>
    %c12_38 = arith.constant 12 : index
    %c0_39 = arith.constant 0 : index
    %72 = vector.load %arg14[%c12_38, %c0_39] : memref<150x1190xf32, #tpu.memory_space<vmem>>, vector<6x1190xf32>
    tpu.vector_store %arg14[%c12_38, %c0_39], %71 {strides = array<i32>} : memref<150x1190xf32, #tpu.memory_space<vmem>>, vector<6x1190xf32>,
    %73 = vector.extract_strided_slice %66 {offsets = [0, 12], sizes = [6, 1190], strides = [1, 1]} : vector<6x1718xf32> to vector<6x1190xf32>
    %c18_40 = arith.constant 18 : index
    %c0_41 = arith.constant 0 : index
    %74 = vector.load %arg14[%c18_40, %c0_41] : memref<150x1190xf32, #tpu.memory_space<vmem>>, vector<6x1190xf32>
    tpu.vector_store %arg14[%c18_40, %c0_41], %73 {strides = array<i32>} : memref<150x1190xf32, #tpu.memory_space<vmem>>, vector<6x1190xf32>,
    %75 = vector.extract_strided_slice %66 {offsets = [0, 16], sizes = [6, 1190], strides = [1, 1]} : vector<6x1718xf32> to vector<6x1190xf32>
    %c24_42 = arith.constant 24 : index
    %c0_43 = arith.constant 0 : index
    %76 = vector.load %arg14[%c24_42, %c0_43] : memref<150x1190xf32, #tpu.memory_space<vmem>>, vector<6x1190xf32>
    tpu.vector_store %arg14[%c24_42, %c0_43], %75 {strides = array<i32>} : memref<150x1190xf32, #tpu.memory_space<vmem>>, vector<6x1190xf32>,
    %77 = vector.extract_strided_slice %66 {offsets = [0, 128], sizes = [6, 1190], strides = [1, 1]} : vector<6x1718xf32> to vector<6x1190xf32>
    %c30_44 = arith.constant 30 : index
    %c0_45 = arith.constant 0 : index
    %78 = vector.load %arg14[%c30_44, %c0_45] : memref<150x1190xf32, #tpu.memory_space<vmem>>, vector<6x1190xf32>
    tpu.vector_store %arg14[%c30_44, %c0_45], %77 {strides = array<i32>} : memref<150x1190xf32, #tpu.memory_space<vmem>>, vector<6x1190xf32>,
    %79 = vector.extract_strided_slice %66 {offsets = [0, 132], sizes = [6, 1190], strides = [1, 1]} : vector<6x1718xf32> to vector<6x1190xf32>
    %c36_46 = arith.constant 36 : index
    %c0_47 = arith.constant 0 : index
    %80 = vector.load %arg14[%c36_46, %c0_47] : memref<150x1190xf32, #tpu.memory_space<vmem>>, vector<6x1190xf32>
    tpu.vector_store %arg14[%c36_46, %c0_47], %79 {strides = array<i32>} : memref<150x1190xf32, #tpu.memory_space<vmem>>, vector<6x1190xf32>,
    %81 = vector.extract_strided_slice %66 {offsets = [0, 136], sizes = [6, 1190], strides = [1, 1]} : vector<6x1718xf32> to vector<6x1190xf32>
    %c42_48 = arith.constant 42 : index
    %c0_49 = arith.constant 0 : index
    %82 = vector.load %arg14[%c42_48, %c0_49] : memref<150x1190xf32, #tpu.memory_space<vmem>>, vector<6x1190xf32>
    tpu.vector_store %arg14[%c42_48, %c0_49], %81 {strides = array<i32>} : memref<150x1190xf32, #tpu.memory_space<vmem>>, vector<6x1190xf32>,
    %83 = vector.extract_strided_slice %66 {offsets = [0, 140], sizes = [6, 1190], strides = [1, 1]} : vector<6x1718xf32> to vector<6x1190xf32>
    %c48_50 = arith.constant 48 : index
    %c0_51 = arith.constant 0 : index
    %84 = vector.load %arg14[%c48_50, %c0_51] : memref<150x1190xf32, #tpu.memory_space<vmem>>, vector<6x1190xf32>
    tpu.vector_store %arg14[%c48_50, %c0_51], %83 {strides = array<i32>} : memref<150x1190xf32, #tpu.memory_space<vmem>>, vector<6x1190xf32>,
    %85 = vector.extract_strided_slice %66 {offsets = [0, 144], sizes = [6, 1190], strides = [1, 1]} : vector<6x1718xf32> to vector<6x1190xf32>
    %c54_52 = arith.constant 54 : index
    %c0_53 = arith.constant 0 : index
    %86 = vector.load %arg14[%c54_52, %c0_53] : memref<150x1190xf32, #tpu.memory_space<vmem>>, vector<6x1190xf32>
    tpu.vector_store %arg14[%c54_52, %c0_53], %85 {strides = array<i32>} : memref<150x1190xf32, #tpu.memory_space<vmem>>, vector<6x1190xf32>,
    %87 = vector.extract_strided_slice %66 {offsets = [0, 256], sizes = [6, 1190], strides = [1, 1]} : vector<6x1718xf32> to vector<6x1190xf32>
    %c60_54 = arith.constant 60 : index
    %c0_55 = arith.constant 0 : index
    %88 = vector.load %arg14[%c60_54, %c0_55] : memref<150x1190xf32, #tpu.memory_space<vmem>>, vector<6x1190xf32>
    tpu.vector_store %arg14[%c60_54, %c0_55], %87 {strides = array<i32>} : memref<150x1190xf32, #tpu.memory_space<vmem>>, vector<6x1190xf32>,
    %89 = vector.extract_strided_slice %66 {offsets = [0, 260], sizes = [6, 1190], strides = [1, 1]} : vector<6x1718xf32> to vector<6x1190xf32>
    %c66_56 = arith.constant 66 : index
    %c0_57 = arith.constant 0 : index
    %90 = vector.load %arg14[%c66_56, %c0_57] : memref<150x1190xf32, #tpu.memory_space<vmem>>, vector<6x1190xf32>
    tpu.vector_store %arg14[%c66_56, %c0_57], %89 {strides = array<i32>} : memref<150x1190xf32, #tpu.memory_space<vmem>>, vector<6x1190xf32>,
    %91 = vector.extract_strided_slice %66 {offsets = [0, 264], sizes = [6, 1190], strides = [1, 1]} : vector<6x1718xf32> to vector<6x1190xf32>
    %c72_58 = arith.constant 72 : index
    %c0_59 = arith.constant 0 : index
    %92 = vector.load %arg14[%c72_58, %c0_59] : memref<150x1190xf32, #tpu.memory_space<vmem>>, vector<6x1190xf32>
    tpu.vector_store %arg14[%c72_58, %c0_59], %91 {strides = array<i32>} : memref<150x1190xf32, #tpu.memory_space<vmem>>, vector<6x1190xf32>,
    %93 = vector.extract_strided_slice %66 {offsets = [0, 268], sizes = [6, 1190], strides = [1, 1]} : vector<6x1718xf32> to vector<6x1190xf32>
    %c78 = arith.constant 78 : index
    %c0_60 = arith.constant 0 : index
    %94 = vector.load %arg14[%c78, %c0_60] : memref<150x1190xf32, #tpu.memory_space<vmem>>, vector<6x1190xf32>
    tpu.vector_store %arg14[%c78, %c0_60], %93 {strides = array<i32>} : memref<150x1190xf32, #tpu.memory_space<vmem>>, vector<6x1190xf32>,
    %95 = vector.extract_strided_slice %66 {offsets = [0, 272], sizes = [6, 1190], strides = [1, 1]} : vector<6x1718xf32> to vector<6x1190xf32>
    %c84 = arith.constant 84 : index
    %c0_61 = arith.constant 0 : index
    %96 = vector.load %arg14[%c84, %c0_61] : memref<150x1190xf32, #tpu.memory_space<vmem>>, vector<6x1190xf32>
    tpu.vector_store %arg14[%c84, %c0_61], %95 {strides = array<i32>} : memref<150x1190xf32, #tpu.memory_space<vmem>>, vector<6x1190xf32>,
    %97 = vector.extract_strided_slice %66 {offsets = [0, 384], sizes = [6, 1190], strides = [1, 1]} : vector<6x1718xf32> to vector<6x1190xf32>
    %c90 = arith.constant 90 : index
    %c0_62 = arith.constant 0 : index
    %98 = vector.load %arg14[%c90, %c0_62] : memref<150x1190xf32, #tpu.memory_space<vmem>>, vector<6x1190xf32>
    tpu.vector_store %arg14[%c90, %c0_62], %97 {strides = array<i32>} : memref<150x1190xf32, #tpu.memory_space<vmem>>, vector<6x1190xf32>,
    %99 = vector.extract_strided_slice %66 {offsets = [0, 388], sizes = [6, 1190], strides = [1, 1]} : vector<6x1718xf32> to vector<6x1190xf32>
    %c96 = arith.constant 96 : index
    %c0_63 = arith.constant 0 : index
    %100 = vector.load %arg14[%c96, %c0_63] : memref<150x1190xf32, #tpu.memory_space<vmem>>, vector<6x1190xf32>
    tpu.vector_store %arg14[%c96, %c0_63], %99 {strides = array<i32>} : memref<150x1190xf32, #tpu.memory_space<vmem>>, vector<6x1190xf32>,
    %101 = vector.extract_strided_slice %66 {offsets = [0, 392], sizes = [6, 1190], strides = [1, 1]} : vector<6x1718xf32> to vector<6x1190xf32>
    %c102 = arith.constant 102 : index
    %c0_64 = arith.constant 0 : index
    %102 = vector.load %arg14[%c102, %c0_64] : memref<150x1190xf32, #tpu.memory_space<vmem>>, vector<6x1190xf32>
    tpu.vector_store %arg14[%c102, %c0_64], %101 {strides = array<i32>} : memref<150x1190xf32, #tpu.memory_space<vmem>>, vector<6x1190xf32>,
    %103 = vector.extract_strided_slice %66 {offsets = [0, 396], sizes = [6, 1190], strides = [1, 1]} : vector<6x1718xf32> to vector<6x1190xf32>
    %c108 = arith.constant 108 : index
    %c0_65 = arith.constant 0 : index
    %104 = vector.load %arg14[%c108, %c0_65] : memref<150x1190xf32, #tpu.memory_space<vmem>>, vector<6x1190xf32>
    tpu.vector_store %arg14[%c108, %c0_65], %103 {strides = array<i32>} : memref<150x1190xf32, #tpu.memory_space<vmem>>, vector<6x1190xf32>,
    %105 = vector.extract_strided_slice %66 {offsets = [0, 400], sizes = [6, 1190], strides = [1, 1]} : vector<6x1718xf32> to vector<6x1190xf32>
    %c114 = arith.constant 114 : index
    %c0_66 = arith.constant 0 : index
    %106 = vector.load %arg14[%c114, %c0_66] : memref<150x1190xf32, #tpu.memory_space<vmem>>, vector<6x1190xf32>
    tpu.vector_store %arg14[%c114, %c0_66], %105 {strides = array<i32>} : memref<150x1190xf32, #tpu.memory_space<vmem>>, vector<6x1190xf32>,
    %107 = vector.extract_strided_slice %66 {offsets = [0, 512], sizes = [6, 1190], strides = [1, 1]} : vector<6x1718xf32> to vector<6x1190xf32>
    %c120 = arith.constant 120 : index
    %c0_67 = arith.constant 0 : index
    %108 = vector.load %arg14[%c120, %c0_67] : memref<150x1190xf32, #tpu.memory_space<vmem>>, vector<6x1190xf32>
    tpu.vector_store %arg14[%c120, %c0_67], %107 {strides = array<i32>} : memref<150x1190xf32, #tpu.memory_space<vmem>>, vector<6x1190xf32>,
    %109 = vector.extract_strided_slice %66 {offsets = [0, 516], sizes = [6, 1190], strides = [1, 1]} : vector<6x1718xf32> to vector<6x1190xf32>
    %c126 = arith.constant 126 : index
    %c0_68 = arith.constant 0 : index
    %110 = vector.load %arg14[%c126, %c0_68] : memref<150x1190xf32, #tpu.memory_space<vmem>>, vector<6x1190xf32>
    tpu.vector_store %arg14[%c126, %c0_68], %109 {strides = array<i32>} : memref<150x1190xf32, #tpu.memory_space<vmem>>, vector<6x1190xf32>,
    %111 = vector.extract_strided_slice %66 {offsets = [0, 520], sizes = [6, 1190], strides = [1, 1]} : vector<6x1718xf32> to vector<6x1190xf32>
    %c132 = arith.constant 132 : index
    %c0_69 = arith.constant 0 : index
    %112 = vector.load %arg14[%c132, %c0_69] : memref<150x1190xf32, #tpu.memory_space<vmem>>, vector<6x1190xf32>
    tpu.vector_store %arg14[%c132, %c0_69], %111 {strides = array<i32>} : memref<150x1190xf32, #tpu.memory_space<vmem>>, vector<6x1190xf32>,
    %113 = vector.extract_strided_slice %66 {offsets = [0, 524], sizes = [6, 1190], strides = [1, 1]} : vector<6x1718xf32> to vector<6x1190xf32>
    %c138 = arith.constant 138 : index
    %c0_70 = arith.constant 0 : index
    %114 = vector.load %arg14[%c138, %c0_70] : memref<150x1190xf32, #tpu.memory_space<vmem>>, vector<6x1190xf32>
    tpu.vector_store %arg14[%c138, %c0_70], %113 {strides = array<i32>} : memref<150x1190xf32, #tpu.memory_space<vmem>>, vector<6x1190xf32>,
    %115 = vector.extract_strided_slice %66 {offsets = [0, 528], sizes = [6, 1190], strides = [1, 1]} : vector<6x1718xf32> to vector<6x1190xf32>
    %c144 = arith.constant 144 : index
    %c0_71 = arith.constant 0 : index
    %116 = vector.load %arg14[%c144, %c0_71] : memref<150x1190xf32, #tpu.memory_space<vmem>>, vector<6x1190xf32>
    tpu.vector_store %arg14[%c144, %c0_71], %115 {strides = array<i32>} : memref<150x1190xf32, #tpu.memory_space<vmem>>, vector<6x1190xf32>,
    %c0_72 = arith.constant 0 : index
    %c0_73 = arith.constant 0 : index
    %117 = vector.load %arg14[%c0_72, %c0_73] : memref<150x1190xf32, #tpu.memory_space<vmem>>, vector<150x1190xf32>
    %118 = arith.truncf %117 : vector<150x1190xf32> to vector<150x1190xbf16>
    %c0_74 = arith.constant 0 : index
    %c0_75 = arith.constant 0 : index
    %119 = vector.load %arg4[%c0_74, %c0_75] : memref<16x150xbf16, #tpu.memory_space<vmem>>, vector<16x150xbf16>
    %cst_76 = arith.constant dense<0.000000e+00> : vector<16x1190xf32>
    %120 = tpu.matmul %119, %118, %cst_76 {dimension_numbers = #tpu.dot_dimension_numbers<[1], [0], [0], [1], [0, 0, 1, 1], [], []>} : vector<16x150xbf16>, vector<150x1190xbf16>, vector<16x1190xf32> -> vector<16x1190xf32>
    %c0_77 = arith.constant 0 : index
    %c0_78 = arith.constant 0 : index
    %121 = vector.load %arg5[%c0_77, %c0_78] : memref<16x1xf32, #tpu.memory_space<vmem>>, vector<16x1xf32>
    %122 = vector.broadcast %121 : vector<16x1xf32> to vector<16x1190xf32>
    %123 = arith.addf %120, %122 : vector<16x1190xf32>
    %cst_79 = arith.constant 0.000000e+00 : f32
    %124 = vector.broadcast %cst_79 : f32 to vector<16x1190xf32>
    %125 = arith.maximumf %123, %124 : vector<16x1190xf32>
    %126 = vector.extract_strided_slice %125 {offsets = [0, 0], sizes = [16, 1058], strides = [1, 1]} : vector<16x1190xf32> to vector<16x1058xf32>
    %127 = vector.extract_strided_slice %125 {offsets = [0, 4], sizes = [16, 1058], strides = [1, 1]} : vector<16x1190xf32> to vector<16x1058xf32>
    %128 = arith.maximumf %126, %127 : vector<16x1058xf32>
    %129 = vector.extract_strided_slice %125 {offsets = [0, 128], sizes = [16, 1058], strides = [1, 1]} : vector<16x1190xf32> to vector<16x1058xf32>
    %130 = vector.extract_strided_slice %125 {offsets = [0, 132], sizes = [16, 1058], strides = [1, 1]} : vector<16x1190xf32> to vector<16x1058xf32>
    %131 = arith.maximumf %129, %130 : vector<16x1058xf32>
    %132 = arith.maximumf %128, %131 : vector<16x1058xf32>
    %133 = vector.extract_strided_slice %132 {offsets = [0, 0], sizes = [16, 2], strides = [1, 1]} : vector<16x1058xf32> to vector<16x2xf32>
    %c0_80 = arith.constant 0 : index
    %c0_81 = arith.constant 0 : index
    %134 = vector.load %arg15[%c0_80, %c0_81] : memref<400x2xf32, #tpu.memory_space<vmem>>, vector<16x2xf32>
    tpu.vector_store %arg15[%c0_80, %c0_81], %133 {strides = array<i32>} : memref<400x2xf32, #tpu.memory_space<vmem>>, vector<16x2xf32>,
    %135 = vector.extract_strided_slice %132 {offsets = [0, 8], sizes = [16, 2], strides = [1, 1]} : vector<16x1058xf32> to vector<16x2xf32>
    %c16 = arith.constant 16 : index
    %c0_82 = arith.constant 0 : index
    %136 = vector.load %arg15[%c16, %c0_82] : memref<400x2xf32, #tpu.memory_space<vmem>>, vector<16x2xf32>
    tpu.vector_store %arg15[%c16, %c0_82], %135 {strides = array<i32>} : memref<400x2xf32, #tpu.memory_space<vmem>>, vector<16x2xf32>,
    %137 = vector.extract_strided_slice %132 {offsets = [0, 16], sizes = [16, 2], strides = [1, 1]} : vector<16x1058xf32> to vector<16x2xf32>
    %c32 = arith.constant 32 : index
    %c0_83 = arith.constant 0 : index
    %138 = vector.load %arg15[%c32, %c0_83] : memref<400x2xf32, #tpu.memory_space<vmem>>, vector<16x2xf32>
    tpu.vector_store %arg15[%c32, %c0_83], %137 {strides = array<i32>} : memref<400x2xf32, #tpu.memory_space<vmem>>, vector<16x2xf32>,
    %139 = vector.extract_strided_slice %132 {offsets = [0, 24], sizes = [16, 2], strides = [1, 1]} : vector<16x1058xf32> to vector<16x2xf32>
    %c48_84 = arith.constant 48 : index
    %c0_85 = arith.constant 0 : index
    %140 = vector.load %arg15[%c48_84, %c0_85] : memref<400x2xf32, #tpu.memory_space<vmem>>, vector<16x2xf32>
    tpu.vector_store %arg15[%c48_84, %c0_85], %139 {strides = array<i32>} : memref<400x2xf32, #tpu.memory_space<vmem>>, vector<16x2xf32>,
    %141 = vector.extract_strided_slice %132 {offsets = [0, 32], sizes = [16, 2], strides = [1, 1]} : vector<16x1058xf32> to vector<16x2xf32>
    %c64 = arith.constant 64 : index
    %c0_86 = arith.constant 0 : index
    %142 = vector.load %arg15[%c64, %c0_86] : memref<400x2xf32, #tpu.memory_space<vmem>>, vector<16x2xf32>
    tpu.vector_store %arg15[%c64, %c0_86], %141 {strides = array<i32>} : memref<400x2xf32, #tpu.memory_space<vmem>>, vector<16x2xf32>,
    %143 = vector.extract_strided_slice %132 {offsets = [0, 256], sizes = [16, 2], strides = [1, 1]} : vector<16x1058xf32> to vector<16x2xf32>
    %c80 = arith.constant 80 : index
    %c0_87 = arith.constant 0 : index
    %144 = vector.load %arg15[%c80, %c0_87] : memref<400x2xf32, #tpu.memory_space<vmem>>, vector<16x2xf32>
    tpu.vector_store %arg15[%c80, %c0_87], %143 {strides = array<i32>} : memref<400x2xf32, #tpu.memory_space<vmem>>, vector<16x2xf32>,
    %145 = vector.extract_strided_slice %132 {offsets = [0, 264], sizes = [16, 2], strides = [1, 1]} : vector<16x1058xf32> to vector<16x2xf32>
    %c96_88 = arith.constant 96 : index
    %c0_89 = arith.constant 0 : index
    %146 = vector.load %arg15[%c96_88, %c0_89] : memref<400x2xf32, #tpu.memory_space<vmem>>, vector<16x2xf32>
    tpu.vector_store %arg15[%c96_88, %c0_89], %145 {strides = array<i32>} : memref<400x2xf32, #tpu.memory_space<vmem>>, vector<16x2xf32>,
    %147 = vector.extract_strided_slice %132 {offsets = [0, 272], sizes = [16, 2], strides = [1, 1]} : vector<16x1058xf32> to vector<16x2xf32>
    %c112 = arith.constant 112 : index
    %c0_90 = arith.constant 0 : index
    %148 = vector.load %arg15[%c112, %c0_90] : memref<400x2xf32, #tpu.memory_space<vmem>>, vector<16x2xf32>
    tpu.vector_store %arg15[%c112, %c0_90], %147 {strides = array<i32>} : memref<400x2xf32, #tpu.memory_space<vmem>>, vector<16x2xf32>,
    %149 = vector.extract_strided_slice %132 {offsets = [0, 280], sizes = [16, 2], strides = [1, 1]} : vector<16x1058xf32> to vector<16x2xf32>
    %c128 = arith.constant 128 : index
    %c0_91 = arith.constant 0 : index
    %150 = vector.load %arg15[%c128, %c0_91] : memref<400x2xf32, #tpu.memory_space<vmem>>, vector<16x2xf32>
    tpu.vector_store %arg15[%c128, %c0_91], %149 {strides = array<i32>} : memref<400x2xf32, #tpu.memory_space<vmem>>, vector<16x2xf32>,
    %151 = vector.extract_strided_slice %132 {offsets = [0, 288], sizes = [16, 2], strides = [1, 1]} : vector<16x1058xf32> to vector<16x2xf32>
    %c144_92 = arith.constant 144 : index
    %c0_93 = arith.constant 0 : index
    %152 = vector.load %arg15[%c144_92, %c0_93] : memref<400x2xf32, #tpu.memory_space<vmem>>, vector<16x2xf32>
    tpu.vector_store %arg15[%c144_92, %c0_93], %151 {strides = array<i32>} : memref<400x2xf32, #tpu.memory_space<vmem>>, vector<16x2xf32>,
    %153 = vector.extract_strided_slice %132 {offsets = [0, 512], sizes = [16, 2], strides = [1, 1]} : vector<16x1058xf32> to vector<16x2xf32>
    %c160 = arith.constant 160 : index
    %c0_94 = arith.constant 0 : index
    %154 = vector.load %arg15[%c160, %c0_94] : memref<400x2xf32, #tpu.memory_space<vmem>>, vector<16x2xf32>
    tpu.vector_store %arg15[%c160, %c0_94], %153 {strides = array<i32>} : memref<400x2xf32, #tpu.memory_space<vmem>>, vector<16x2xf32>,
    %155 = vector.extract_strided_slice %132 {offsets = [0, 520], sizes = [16, 2], strides = [1, 1]} : vector<16x1058xf32> to vector<16x2xf32>
    %c176 = arith.constant 176 : index
    %c0_95 = arith.constant 0 : index
    %156 = vector.load %arg15[%c176, %c0_95] : memref<400x2xf32, #tpu.memory_space<vmem>>, vector<16x2xf32>
    tpu.vector_store %arg15[%c176, %c0_95], %155 {strides = array<i32>} : memref<400x2xf32, #tpu.memory_space<vmem>>, vector<16x2xf32>,
    %157 = vector.extract_strided_slice %132 {offsets = [0, 528], sizes = [16, 2], strides = [1, 1]} : vector<16x1058xf32> to vector<16x2xf32>
    %c192 = arith.constant 192 : index
    %c0_96 = arith.constant 0 : index
    %158 = vector.load %arg15[%c192, %c0_96] : memref<400x2xf32, #tpu.memory_space<vmem>>, vector<16x2xf32>
    tpu.vector_store %arg15[%c192, %c0_96], %157 {strides = array<i32>} : memref<400x2xf32, #tpu.memory_space<vmem>>, vector<16x2xf32>,
    %159 = vector.extract_strided_slice %132 {offsets = [0, 536], sizes = [16, 2], strides = [1, 1]} : vector<16x1058xf32> to vector<16x2xf32>
    %c208 = arith.constant 208 : index
    %c0_97 = arith.constant 0 : index
    %160 = vector.load %arg15[%c208, %c0_97] : memref<400x2xf32, #tpu.memory_space<vmem>>, vector<16x2xf32>
    tpu.vector_store %arg15[%c208, %c0_97], %159 {strides = array<i32>} : memref<400x2xf32, #tpu.memory_space<vmem>>, vector<16x2xf32>,
    %161 = vector.extract_strided_slice %132 {offsets = [0, 544], sizes = [16, 2], strides = [1, 1]} : vector<16x1058xf32> to vector<16x2xf32>
    %c224 = arith.constant 224 : index
    %c0_98 = arith.constant 0 : index
    %162 = vector.load %arg15[%c224, %c0_98] : memref<400x2xf32, #tpu.memory_space<vmem>>, vector<16x2xf32>
    tpu.vector_store %arg15[%c224, %c0_98], %161 {strides = array<i32>} : memref<400x2xf32, #tpu.memory_space<vmem>>, vector<16x2xf32>,
    %163 = vector.extract_strided_slice %132 {offsets = [0, 768], sizes = [16, 2], strides = [1, 1]} : vector<16x1058xf32> to vector<16x2xf32>
    %c240 = arith.constant 240 : index
    %c0_99 = arith.constant 0 : index
    %164 = vector.load %arg15[%c240, %c0_99] : memref<400x2xf32, #tpu.memory_space<vmem>>, vector<16x2xf32>
    tpu.vector_store %arg15[%c240, %c0_99], %163 {strides = array<i32>} : memref<400x2xf32, #tpu.memory_space<vmem>>, vector<16x2xf32>,
    %165 = vector.extract_strided_slice %132 {offsets = [0, 776], sizes = [16, 2], strides = [1, 1]} : vector<16x1058xf32> to vector<16x2xf32>
    %c256 = arith.constant 256 : index
    %c0_100 = arith.constant 0 : index
    %166 = vector.load %arg15[%c256, %c0_100] : memref<400x2xf32, #tpu.memory_space<vmem>>, vector<16x2xf32>
    tpu.vector_store %arg15[%c256, %c0_100], %165 {strides = array<i32>} : memref<400x2xf32, #tpu.memory_space<vmem>>, vector<16x2xf32>,
    %167 = vector.extract_strided_slice %132 {offsets = [0, 784], sizes = [16, 2], strides = [1, 1]} : vector<16x1058xf32> to vector<16x2xf32>
    %c272 = arith.constant 272 : index
    %c0_101 = arith.constant 0 : index
    %168 = vector.load %arg15[%c272, %c0_101] : memref<400x2xf32, #tpu.memory_space<vmem>>, vector<16x2xf32>
    tpu.vector_store %arg15[%c272, %c0_101], %167 {strides = array<i32>} : memref<400x2xf32, #tpu.memory_space<vmem>>, vector<16x2xf32>,
    %169 = vector.extract_strided_slice %132 {offsets = [0, 792], sizes = [16, 2], strides = [1, 1]} : vector<16x1058xf32> to vector<16x2xf32>
    %c288 = arith.constant 288 : index
    %c0_102 = arith.constant 0 : index
    %170 = vector.load %arg15[%c288, %c0_102] : memref<400x2xf32, #tpu.memory_space<vmem>>, vector<16x2xf32>
    tpu.vector_store %arg15[%c288, %c0_102], %169 {strides = array<i32>} : memref<400x2xf32, #tpu.memory_space<vmem>>, vector<16x2xf32>,
    %171 = vector.extract_strided_slice %132 {offsets = [0, 800], sizes = [16, 2], strides = [1, 1]} : vector<16x1058xf32> to vector<16x2xf32>
    %c304 = arith.constant 304 : index
    %c0_103 = arith.constant 0 : index
    %172 = vector.load %arg15[%c304, %c0_103] : memref<400x2xf32, #tpu.memory_space<vmem>>, vector<16x2xf32>
    tpu.vector_store %arg15[%c304, %c0_103], %171 {strides = array<i32>} : memref<400x2xf32, #tpu.memory_space<vmem>>, vector<16x2xf32>,
    %173 = vector.extract_strided_slice %132 {offsets = [0, 1024], sizes = [16, 2], strides = [1, 1]} : vector<16x1058xf32> to vector<16x2xf32>
    %c320 = arith.constant 320 : index
    %c0_104 = arith.constant 0 : index
    %174 = vector.load %arg15[%c320, %c0_104] : memref<400x2xf32, #tpu.memory_space<vmem>>, vector<16x2xf32>
    tpu.vector_store %arg15[%c320, %c0_104], %173 {strides = array<i32>} : memref<400x2xf32, #tpu.memory_space<vmem>>, vector<16x2xf32>,
    %175 = vector.extract_strided_slice %132 {offsets = [0, 1032], sizes = [16, 2], strides = [1, 1]} : vector<16x1058xf32> to vector<16x2xf32>
    %c336 = arith.constant 336 : index
    %c0_105 = arith.constant 0 : index
    %176 = vector.load %arg15[%c336, %c0_105] : memref<400x2xf32, #tpu.memory_space<vmem>>, vector<16x2xf32>
    tpu.vector_store %arg15[%c336, %c0_105], %175 {strides = array<i32>} : memref<400x2xf32, #tpu.memory_space<vmem>>, vector<16x2xf32>,
    %177 = vector.extract_strided_slice %132 {offsets = [0, 1040], sizes = [16, 2], strides = [1, 1]} : vector<16x1058xf32> to vector<16x2xf32>
    %c352 = arith.constant 352 : index
    %c0_106 = arith.constant 0 : index
    %178 = vector.load %arg15[%c352, %c0_106] : memref<400x2xf32, #tpu.memory_space<vmem>>, vector<16x2xf32>
    tpu.vector_store %arg15[%c352, %c0_106], %177 {strides = array<i32>} : memref<400x2xf32, #tpu.memory_space<vmem>>, vector<16x2xf32>,
    %179 = vector.extract_strided_slice %132 {offsets = [0, 1048], sizes = [16, 2], strides = [1, 1]} : vector<16x1058xf32> to vector<16x2xf32>
    %c368 = arith.constant 368 : index
    %c0_107 = arith.constant 0 : index
    %180 = vector.load %arg15[%c368, %c0_107] : memref<400x2xf32, #tpu.memory_space<vmem>>, vector<16x2xf32>
    tpu.vector_store %arg15[%c368, %c0_107], %179 {strides = array<i32>} : memref<400x2xf32, #tpu.memory_space<vmem>>, vector<16x2xf32>,
    %181 = vector.extract_strided_slice %132 {offsets = [0, 1056], sizes = [16, 2], strides = [1, 1]} : vector<16x1058xf32> to vector<16x2xf32>
    %c384 = arith.constant 384 : index
    %c0_108 = arith.constant 0 : index
    %182 = vector.load %arg15[%c384, %c0_108] : memref<400x2xf32, #tpu.memory_space<vmem>>, vector<16x2xf32>
    tpu.vector_store %arg15[%c384, %c0_108], %181 {strides = array<i32>} : memref<400x2xf32, #tpu.memory_space<vmem>>, vector<16x2xf32>,
    %c0_109 = arith.constant 0 : index
    %c0_110 = arith.constant 0 : index
    %183 = vector.load %arg15[%c0_109, %c0_110] : memref<400x2xf32, #tpu.memory_space<vmem>>, vector<400x2xf32>
    %184 = arith.truncf %183 : vector<400x2xf32> to vector<400x2xbf16>
    %c0_111 = arith.constant 0 : index
    %c0_112 = arith.constant 0 : index
    %185 = vector.load %arg6[%c0_111, %c0_112] : memref<120x400xbf16, #tpu.memory_space<vmem>>, vector<120x400xbf16>
    %cst_113 = arith.constant dense<0.000000e+00> : vector<120x2xf32>
    %186 = tpu.matmul %185, %184, %cst_113 {dimension_numbers = #tpu.dot_dimension_numbers<[1], [0], [0], [1], [0, 0, 1, 1], [], []>} : vector<120x400xbf16>, vector<400x2xbf16>, vector<120x2xf32> -> vector<120x2xf32>
    %c0_114 = arith.constant 0 : index
    %c0_115 = arith.constant 0 : index
    %187 = vector.load %arg7[%c0_114, %c0_115] : memref<120x1xf32, #tpu.memory_space<vmem>>, vector<120x1xf32>
    %188 = vector.broadcast %187 : vector<120x1xf32> to vector<120x2xf32>
    %189 = arith.addf %186, %188 : vector<120x2xf32>
    %cst_116 = arith.constant 0.000000e+00 : f32
    %190 = vector.broadcast %cst_116 : f32 to vector<120x2xf32>
    %191 = arith.maximumf %189, %190 : vector<120x2xf32>
    %c0_117 = arith.constant 0 : index
    %c0_118 = arith.constant 0 : index
    %192 = vector.load %arg8[%c0_117, %c0_118] : memref<84x120xbf16, #tpu.memory_space<vmem>>, vector<84x120xbf16>
    %193 = arith.truncf %191 : vector<120x2xf32> to vector<120x2xbf16>
    %cst_119 = arith.constant dense<0.000000e+00> : vector<84x2xf32>
    %194 = tpu.matmul %192, %193, %cst_119 {dimension_numbers = #tpu.dot_dimension_numbers<[1], [0], [0], [1], [0, 0, 1, 1], [], []>} : vector<84x120xbf16>, vector<120x2xbf16>, vector<84x2xf32> -> vector<84x2xf32>
    %c0_120 = arith.constant 0 : index
    %c0_121 = arith.constant 0 : index
    %195 = vector.load %arg9[%c0_120, %c0_121] : memref<84x1xf32, #tpu.memory_space<vmem>>, vector<84x1xf32>
    %196 = vector.broadcast %195 : vector<84x1xf32> to vector<84x2xf32>
    %197 = arith.addf %194, %196 : vector<84x2xf32>
    %cst_122 = arith.constant 0.000000e+00 : f32
    %198 = vector.broadcast %cst_122 : f32 to vector<84x2xf32>
    %199 = arith.maximumf %197, %198 : vector<84x2xf32>
    %c0_123 = arith.constant 0 : index
    %c0_124 = arith.constant 0 : index
    %200 = vector.load %arg10[%c0_123, %c0_124] : memref<10x84xbf16, #tpu.memory_space<vmem>>, vector<10x84xbf16>
    %201 = arith.truncf %199 : vector<84x2xf32> to vector<84x2xbf16>
    %cst_125 = arith.constant dense<0.000000e+00> : vector<10x2xf32>
    %202 = tpu.matmul %200, %201, %cst_125 {dimension_numbers = #tpu.dot_dimension_numbers<[1], [0], [0], [1], [0, 0, 1, 1], [], []>} : vector<10x84xbf16>, vector<84x2xbf16>, vector<10x2xf32> -> vector<10x2xf32>
    %c0_126 = arith.constant 0 : index
    %c0_127 = arith.constant 0 : index
    %203 = vector.load %arg11[%c0_126, %c0_127] : memref<10x1xf32, #tpu.memory_space<vmem>>, vector<10x1xf32>
    %204 = vector.broadcast %203 : vector<10x1xf32> to vector<10x2xf32>
    %205 = arith.addf %202, %204 : vector<10x2xf32>
    %c0_128 = arith.constant 0 : index
    %c0_129 = arith.constant 0 : index
    %c0_130 = arith.constant 0 : index
    %206 = vector.load %arg12[%c0_128, %c0_129, %c0_130] : memref<1x10x2xf32, #tpu.memory_space<vmem>>, vector<1x10x2xf32>
    %207 = vector.shape_cast %206 : vector<1x10x2xf32> to vector<10x2xf32>
    %208 = vector.shape_cast %205 : vector<10x2xf32> to vector<1x10x2xf32>
    tpu.vector_store %arg12[%c0_128, %c0_129, %c0_130], %208 {strides = array<i32>} : memref<1x10x2xf32, #tpu.memory_space<vmem>>, vector<1x10x2xf32>,
    return
  }
  func.func @transform_0(%arg0: i32) -> (i32, i32) {
    %c0_i32 = arith.constant 0 : i32
    %c0_i32_0 = arith.constant 0 : i32
    return %c0_i32, %arg0 : i32, i32
  }
  func.func @transform_1(%arg0: i32) -> (i32, i32) {
    %c0_i32 = arith.constant 0 : i32
    %c0_i32_0 = arith.constant 0 : i32
    %c0_i32_1 = arith.constant 0 : i32
    return %c0_i32, %c0_i32_0 : i32, i32
  }
  func.func @transform_2(%arg0: i32) -> (i32, i32) {
    %c0_i32 = arith.constant 0 : i32
    %c0_i32_0 = arith.constant 0 : i32
    %c0_i32_1 = arith.constant 0 : i32
    return %c0_i32, %c0_i32_0 : i32, i32
  }
  func.func @transform_3(%arg0: i32) -> (i32, i32) {
    %c0_i32 = arith.constant 0 : i32
    %c0_i32_0 = arith.constant 0 : i32
    %c0_i32_1 = arith.constant 0 : i32
    return %c0_i32, %c0_i32_0 : i32, i32
  }
  func.func @transform_4(%arg0: i32) -> (i32, i32) {
    %c0_i32 = arith.constant 0 : i32
    %c0_i32_0 = arith.constant 0 : i32
    %c0_i32_1 = arith.constant 0 : i32
    return %c0_i32, %c0_i32_0 : i32, i32
  }
  func.func @transform_5(%arg0: i32) -> (i32, i32) {
    %c0_i32 = arith.constant 0 : i32
    %c0_i32_0 = arith.constant 0 : i32
    %c0_i32_1 = arith.constant 0 : i32
    return %c0_i32, %c0_i32_0 : i32, i32
  }
  func.func @transform_6(%arg0: i32) -> (i32, i32) {
    %c0_i32 = arith.constant 0 : i32
    %c0_i32_0 = arith.constant 0 : i32
    %c0_i32_1 = arith.constant 0 : i32
    return %c0_i32, %c0_i32_0 : i32, i32
  }
  func.func @transform_7(%arg0: i32) -> (i32, i32) {
    %c0_i32 = arith.constant 0 : i32
    %c0_i32_0 = arith.constant 0 : i32
    %c0_i32_1 = arith.constant 0 : i32
    return %c0_i32, %c0_i32_0 : i32, i32
  }
  func.func @transform_8(%arg0: i32) -> (i32, i32) {
    %c0_i32 = arith.constant 0 : i32
    %c0_i32_0 = arith.constant 0 : i32
    %c0_i32_1 = arith.constant 0 : i32
    return %c0_i32, %c0_i32_0 : i32, i32
  }
  func.func @transform_9(%arg0: i32) -> (i32, i32) {
    %c0_i32 = arith.constant 0 : i32
    %c0_i32_0 = arith.constant 0 : i32
    %c0_i32_1 = arith.constant 0 : i32
    return %c0_i32, %c0_i32_0 : i32, i32
  }
  func.func @transform_10(%arg0: i32) -> (i32, i32) {
    %c0_i32 = arith.constant 0 : i32
    %c0_i32_0 = arith.constant 0 : i32
    %c0_i32_1 = arith.constant 0 : i32
    return %c0_i32, %c0_i32_0 : i32, i32
  }
  func.func @transform_11(%arg0: i32) -> (i32, i32, i32) {
    %c0_i32 = arith.constant 0 : i32
    %c0_i32_0 = arith.constant 0 : i32
    %c0_i32_1 = arith.constant 0 : i32
    return %arg0, %c0_i32, %c0_i32_0 : i32, i32, i32
  }
}

</mosaic_0001>

<llo_original>
// kernel: lenet_tail_forward.1
$region0: #{lenet_tail_forward.1}
  #allocation0 [shape = 'u32[]', space=smem, size = 0x4, offset = 0x4, fixed_abs, tag = 'smem constant byte address 0x4 - core index']
  #allocation1 [shape = 'u32[144,128]{1,0:T(1,128)}', space=vmem, size = 0x12000, scoped, tag = 'internal scratch']
  #allocation2 [shape = 'f32[75,1784]{1,0:T(8,128)}', space=vmem, size = 0x8c000, scoped, tag = 'scratch operand']
  #allocation3 [shape = 'f32[150,1190]{1,0:T(8,128)}', space=vmem, size = 0xbe000, scoped, tag = 'scratch operand']
  #allocation4 [shape = 'f32[400,2]{1,0:T(8,128)}', space=vmem, size = 0x32000, scoped, tag = 'scratch operand']
  %s0 = inlined_call_operand.vmem [shape: f32[3,2048], index: 0, kind: input, shape index: {}]
  %s1 = inlined_call_operand.vmem [shape: bf16[6,75], index: 1, kind: input, shape index: {}]
  %s2 = inlined_call_operand.vmem [shape: f32[6,1], index: 2, kind: input, shape index: {}]
  %s3 = inlined_call_operand.vmem [shape: bf16[16,150], index: 3, kind: input, shape index: {}]
  %s4 = inlined_call_operand.vmem [shape: f32[16,1], index: 4, kind: input, shape index: {}]
  %s5 = inlined_call_operand.vmem [shape: bf16[120,400], index: 5, kind: input, shape index: {}]
  %s6 = inlined_call_operand.vmem [shape: f32[120,1], index: 6, kind: input, shape index: {}]
  %s7 = inlined_call_operand.vmem [shape: bf16[84,120], index: 7, kind: input, shape index: {}]
  %s8 = inlined_call_operand.vmem [shape: f32[84,1], index: 8, kind: input, shape index: {}]
  %s9 = inlined_call_operand.vmem [shape: bf16[10,84], index: 9, kind: input, shape index: {}]
  %s10 = inlined_call_operand.vmem [shape: f32[10,1], index: 10, kind: input, shape index: {}]
  %s11 = inlined_call_operand.vmem [shape: f32[1,10,2], index: 11, kind: output, shape index: {}]
  %s12 = sld [smem:[#allocation0]]
  $region54: #{lenet_tail_forward.1} parent=0
    _
  %s14 = ssub.s32 1, %s12
  %s15 = scalar_select 0, %s14, %s12
  // Predicated region
  $region2: #{lenet_tail_forward.1} parent=0 // pred_check
    _
  $region3: #{lenet_tail_forward.1} parent=0 // pred_check_branch
    %17 = sbr.rel (0) target = $region5
  $region4: #{lenet_tail_forward.1} parent=0 // pred_region
    _
  $region5: #{lenet_tail_forward.1} parent=0 // pred_fallthru
    _
  // Predicated region
  $region6: #{lenet_tail_forward.1} parent=0 // pred_check
    _
  $region7: #{lenet_tail_forward.1} parent=0 // pred_check_branch
    %19 = sbr.rel (0) target = $region9
  $region8: #{lenet_tail_forward.1} parent=0 // pred_region
    _
  $region9: #{lenet_tail_forward.1} parent=0 // pred_fallthru
    _
  // Predicated region
  $region10: #{lenet_tail_forward.1} parent=0 // pred_check
    _
  $region11: #{lenet_tail_forward.1} parent=0 // pred_check_branch
    %21 = sbr.rel (0) target = $region13
  $region12: #{lenet_tail_forward.1} parent=0 // pred_region
    _
  $region13: #{lenet_tail_forward.1} parent=0 // pred_fallthru
    _
  // Predicated region
  $region14: #{lenet_tail_forward.1} parent=0 // pred_check
    _
  $region15: #{lenet_tail_forward.1} parent=0 // pred_check_branch
    %23 = sbr.rel (0) target = $region17
  $region16: #{lenet_tail_forward.1} parent=0 // pred_region
    _
  $region17: #{lenet_tail_forward.1} parent=0 // pred_fallthru
    _
  // Predicated region
  $region18: #{lenet_tail_forward.1} parent=0 // pred_check
    _
  $region19: #{lenet_tail_forward.1} parent=0 // pred_check_branch
    %25 = sbr.rel (0) target = $region21
  $region20: #{lenet_tail_forward.1} parent=0 // pred_region
    _
  $region21: #{lenet_tail_forward.1} parent=0 // pred_fallthru
    _
  // Predicated region
  $region22: #{lenet_tail_forward.1} parent=0 // pred_check
    _
  $region23: #{lenet_tail_forward.1} parent=0 // pred_check_branch
    %27 = sbr.rel (0) target = $region25
  $region24: #{lenet_tail_forward.1} parent=0 // pred_region
    _
  $region25: #{lenet_tail_forward.1} parent=0 // pred_fallthru
    _
  // Predicated region
  $region26: #{lenet_tail_forward.1} parent=0 // pred_check
    _
  $region27: #{lenet_tail_forward.1} parent=0 // pred_check_branch
    %29 = sbr.rel (0) target = $region29
  $region28: #{lenet_tail_forward.1} parent=0 // pred_region
    _
  $region29: #{lenet_tail_forward.1} parent=0 // pred_fallthru
    _
  // Predicated region
  $region30: #{lenet_tail_forward.1} parent=0 // pred_check
    _
  $region31: #{lenet_tail_forward.1} parent=0 // pred_check_branch
    %31 = sbr.rel (0) target = $region33
  $region32: #{lenet_tail_forward.1} parent=0 // pred_region
    _
  $region33: #{lenet_tail_forward.1} parent=0 // pred_fallthru
    _
  // Predicated region
  $region34: #{lenet_tail_forward.1} parent=0 // pred_check
    _
  $region35: #{lenet_tail_forward.1} parent=0 // pred_check_branch
    %33 = sbr.rel (0) target = $region37
  $region36: #{lenet_tail_forward.1} parent=0 // pred_region
    _
  $region37: #{lenet_tail_forward.1} parent=0 // pred_fallthru
    _
  // Predicated region
  $region38: #{lenet_tail_forward.1} parent=0 // pred_check
    _
  $region39: #{lenet_tail_forward.1} parent=0 // pred_check_branch
    %35 = sbr.rel (0) target = $region41
  $region40: #{lenet_tail_forward.1} parent=0 // pred_region
    _
  $region41: #{lenet_tail_forward.1} parent=0 // pred_fallthru
    _
  // Predicated region
  $region42: #{lenet_tail_forward.1} parent=0 // pred_check
    _
  $region43: #{lenet_tail_forward.1} parent=0 // pred_check_branch
    %37 = sbr.rel (0) target = $region45
  $region44: #{lenet_tail_forward.1} parent=0 // pred_region
    _
  $region45: #{lenet_tail_forward.1} parent=0 // pred_fallthru
    _
  %v39 = vld [vmem:[%s0] sm:$0x77]
  %v40 = vld [vmem:[%s0 + $0x8] sm:$0x77]
  %v41 = vld [vmem:[%s0 + $0x10] sm:$0x77]
  %v42 = vld [vmem:[%s0 + $0x18] sm:$0x77]
  %v43 = vld [vmem:[%s0 + $0x20] sm:$0x77]
  %v44 = vld [vmem:[%s0 + $0x28] sm:$0x77]
  %v45 = vld [vmem:[%s0 + $0x30] sm:$0x77]
  %v46 = vld [vmem:[%s0 + $0x38] sm:$0x77]
  %v54 = vcombine.high %v39, %v39
  %v55 = vcombine.high %v40, %v40
  %v56 = vcombine.high %v41, %v41
  %v57 = vcombine.high %v42, %v42
  %v58 = vcombine.high %v43, %v43
  %v59 = vcombine.high %v44, %v44
  %v60 = vcombine.high %v45, %v45
  %68 = vst [vmem:[#allocation2] sm:$0x7] %v39
  %69 = vst [vmem:[#allocation2 + $0x8] sm:$0x7] %v54
  %70 = vst [vmem:[#allocation2 + $0x10] sm:$0x7] %v40
  %71 = vst [vmem:[#allocation2 + $0x18] sm:$0x7] %v55
  %72 = vst [vmem:[#allocation2 + $0x20] sm:$0x7] %v41
  %73 = vst [vmem:[#allocation2 + $0x28] sm:$0x7] %v56
  %74 = vst [vmem:[#allocation2 + $0x30] sm:$0x7] %v42
  %75 = vst [vmem:[#allocation2 + $0x38] sm:$0x7] %v57
  %76 = vst [vmem:[#allocation2 + $0x40] sm:$0x7] %v43
  %77 = vst [vmem:[#allocation2 + $0x48] sm:$0x7] %v58
  %78 = vst [vmem:[#allocation2 + $0x50] sm:$0x7] %v44
  %79 = vst [vmem:[#allocation2 + $0x58] sm:$0x7] %v59
  %80 = vst [vmem:[#allocation2 + $0x60] sm:$0x7] %v45
  %vm81 = vcmask 976896
  %82 = vst.msk [vmem:[#allocation2 + $0x68] sm:$0x7] %vm81, %v60
  %v83 = vrot.slane %v39, 5
  %v84 = vrot.slane %v54, 5
  %v85 = vrot.slane %v40, 5
  %v86 = vrot.slane %v55, 5
  %v87 = vrot.slane %v41, 5
  %v88 = vrot.slane %v56, 5
  %v89 = vrot.slane %v42, 5
  %v90 = vrot.slane %v57, 5
  %v91 = vrot.slane %v43, 5
  %v92 = vrot.slane %v58, 5
  %v93 = vrot.slane %v44, 5
  %v94 = vrot.slane %v59, 5
  %v95 = vrot.slane %v45, 5
  %v96 = vrot.slane %v60, 5
  %97 = vrot.lane.b32.xlu0 %v83, 126
  %v98 = vpop.permute.xlu0 %97
  %99 = vrot.lane.b32.xlu0 %v84, 126
  %v100 = vpop.permute.xlu0 %99
  %101 = vrot.lane.b32.xlu0 %v85, 126
  %v102 = vpop.permute.xlu0 %101
  %103 = vrot.lane.b32.xlu0 %v86, 126
  %v104 = vpop.permute.xlu0 %103
  %105 = vrot.lane.b32.xlu0 %v87, 126
  %v106 = vpop.permute.xlu0 %105
  %107 = vrot.lane.b32.xlu0 %v88, 126
  %v108 = vpop.permute.xlu0 %107
  %109 = vrot.lane.b32.xlu0 %v89, 126
  %v110 = vpop.permute.xlu0 %109
  %111 = vrot.lane.b32.xlu0 %v90, 126
  %v112 = vpop.permute.xlu0 %111
  %113 = vrot.lane.b32.xlu0 %v91, 126
  %v114 = vpop.permute.xlu0 %113
  %115 = vrot.lane.b32.xlu0 %v92, 126
  %v116 = vpop.permute.xlu0 %115
  %117 = vrot.lane.b32.xlu0 %v93, 126
  %v118 = vpop.permute.xlu0 %117
  %119 = vrot.lane.b32.xlu0 %v94, 126
  %v120 = vpop.permute.xlu0 %119
  %121 = vrot.lane.b32.xlu0 %v95, 126
  %v122 = vpop.permute.xlu0 %121
  %123 = vrot.lane.b32.xlu0 %v96, 126
  %v124 = vpop.permute.xlu0 %123
  %vm125 = vcmask 1031168
  %v126 = vsel %vm125, %v98, %v100
  %v127 = vsel %vm125, %v100, %v102
  %v128 = vsel %vm125, %v102, %v104
  %v129 = vsel %vm125, %v104, %v106
  %v130 = vsel %vm125, %v106, %v108
  %v131 = vsel %vm125, %v108, %v110
  %v132 = vsel %vm125, %v110, %v112
  %v133 = vsel %vm125, %v112, %v114
  %v134 = vsel %vm125, %v114, %v116
  %v135 = vsel %vm125, %v116, %v118
  %v136 = vsel %vm125, %v118, %v120
  %v137 = vsel %vm125, %v120, %v122
  %v138 = vsel %vm125, %v122, %v124
  %153 = vst [vmem:[#allocation2] sm:$0x38] %v126
  %154 = vst [vmem:[#allocation2 + $0x8] sm:$0x38] %v127
  %155 = vst [vmem:[#allocation2 + $0x10] sm:$0x38] %v128
  %156 = vst [vmem:[#allocation2 + $0x18] sm:$0x38] %v129
  %157 = vst [vmem:[#allocation2 + $0x20] sm:$0x38] %v130
  %158 = vst [vmem:[#allocation2 + $0x28] sm:$0x38] %v131
  %159 = vst [vmem:[#allocation2 + $0x30] sm:$0x38] %v132
  %160 = vst [vmem:[#allocation2 + $0x38] sm:$0x38] %v133
  %161 = vst [vmem:[#allocation2 + $0x40] sm:$0x38] %v134
  %162 = vst [vmem:[#allocation2 + $0x48] sm:$0x38] %v135
  %163 = vst [vmem:[#allocation2 + $0x50] sm:$0x38] %v136
  %164 = vst [vmem:[#allocation2 + $0x58] sm:$0x38] %v137
  %165 = vst [vmem:[#allocation2 + $0x60] sm:$0x38] %v138
  %vm166 = vcmask 979971
  %167 = vst.msk [vmem:[#allocation2 + $0x68] sm:$0x38] %vm166, %v124
  %v168 = vrot.slane %v39, 2
  %v169 = vrot.slane %v54, 2
  %v170 = vrot.slane %v40, 2
  %v171 = vrot.slane %v55, 2
  %v172 = vrot.slane %v41, 2
  %v173 = vrot.slane %v56, 2
  %v174 = vrot.slane %v42, 2
  %v175 = vrot.slane %v57, 2
  %v176 = vrot.slane %v43, 2
  %v177 = vrot.slane %v58, 2
  %v178 = vrot.slane %v44, 2
  %v179 = vrot.slane %v59, 2
  %v180 = vrot.slane %v45, 2
  %v181 = vrot.slane %v60, 2
  %182 = vrot.lane.b32.xlu0 %v168, 124
  %v183 = vpop.permute.xlu0 %182
  %184 = vrot.lane.b32.xlu0 %v169, 124
  %v185 = vpop.permute.xlu0 %184
  %186 = vrot.lane.b32.xlu0 %v170, 124
  %v187 = vpop.permute.xlu0 %186
  %188 = vrot.lane.b32.xlu0 %v171, 124
  %v189 = vpop.permute.xlu0 %188
  %190 = vrot.lane.b32.xlu0 %v172, 124
  %v191 = vpop.permute.xlu0 %190
  %192 = vrot.lane.b32.xlu0 %v173, 124
  %v193 = vpop.permute.xlu0 %192
  %194 = vrot.lane.b32.xlu0 %v174, 124
  %v195 = vpop.permute.xlu0 %194
  %196 = vrot.lane.b32.xlu0 %v175, 124
  %v197 = vpop.permute.xlu0 %196
  %198 = vrot.lane.b32.xlu0 %v176, 124
  %v199 = vpop.permute.xlu0 %198
  %200 = vrot.lane.b32.xlu0 %v177, 124
  %v201 = vpop.permute.xlu0 %200
  %202 = vrot.lane.b32.xlu0 %v178, 124
  %v203 = vpop.permute.xlu0 %202
  %204 = vrot.lane.b32.xlu0 %v179, 124
  %v205 = vpop.permute.xlu0 %204
  %206 = vrot.lane.b32.xlu0 %v180, 124
  %v207 = vpop.permute.xlu0 %206
  %208 = vrot.lane.b32.xlu0 %v181, 124
  %v209 = vpop.permute.xlu0 %208
  %vm210 = vcmask 1014784
  %v211 = vsel %vm210, %v183, %v185
  %v212 = vsel %vm210, %v185, %v187
  %v213 = vsel %vm210, %v187, %v189
  %v214 = vsel %vm210, %v189, %v191
  %v215 = vsel %vm210, %v191, %v193
  %v216 = vsel %vm210, %v193, %v195
  %v217 = vsel %vm210, %v195, %v197
  %v218 = vsel %vm210, %v197, %v199
  %v219 = vsel %vm210, %v199, %v201
  %v220 = vsel %vm210, %v201, %v203
  %v221 = vsel %vm210, %v203, %v205
  %v222 = vsel %vm210, %v205, %v207
  %v223 = vsel %vm210, %v207, %v209
  %238 = vst [vmem:[#allocation2] sm:$0xc0] %v211
  %239 = vst [vmem:[#allocation2 + $0x8] sm:$0xc0] %v212
  %240 = vst [vmem:[#allocation2 + $0x10] sm:$0xc0] %v213
  %241 = vst [vmem:[#allocation2 + $0x18] sm:$0xc0] %v214
  %242 = vst [vmem:[#allocation2 + $0x20] sm:$0xc0] %v215
  %243 = vst [vmem:[#allocation2 + $0x28] sm:$0xc0] %v216
  %244 = vst [vmem:[#allocation2 + $0x30] sm:$0xc0] %v217
  %245 = vst [vmem:[#allocation2 + $0x38] sm:$0xc0] %v218
  %246 = vst [vmem:[#allocation2 + $0x40] sm:$0xc0] %v219
  %247 = vst [vmem:[#allocation2 + $0x48] sm:$0xc0] %v220
  %248 = vst [vmem:[#allocation2 + $0x50] sm:$0xc0] %v221
  %249 = vst [vmem:[#allocation2 + $0x58] sm:$0xc0] %v222
  %250 = vst [vmem:[#allocation2 + $0x60] sm:$0xc0] %v223
  %vm251 = vcmask 982022
  %252 = vst.msk [vmem:[#allocation2 + $0x68] sm:$0xc0] %vm251, %v209
  %253 = vst [vmem:[#allocation2 + $0x70] sm:$0x1] %v211
  %254 = vst [vmem:[#allocation2 + $0x78] sm:$0x1] %v212
  %255 = vst [vmem:[#allocation2 + $0x80] sm:$0x1] %v213
  %256 = vst [vmem:[#allocation2 + $0x88] sm:$0x1] %v214
  %257 = vst [vmem:[#allocation2 + $0x90] sm:$0x1] %v215
  %258 = vst [vmem:[#allocation2 + $0x98] sm:$0x1] %v216
  %259 = vst [vmem:[#allocation2 + $0xa0] sm:$0x1] %v217
  %260 = vst [vmem:[#allocation2 + $0xa8] sm:$0x1] %v218
  %261 = vst [vmem:[#allocation2 + $0xb0] sm:$0x1] %v219
  %262 = vst [vmem:[#allocation2 + $0xb8] sm:$0x1] %v220
  %263 = vst [vmem:[#allocation2 + $0xc0] sm:$0x1] %v221
  %264 = vst [vmem:[#allocation2 + $0xc8] sm:$0x1] %v222
  %265 = vst [vmem:[#allocation2 + $0xd0] sm:$0x1] %v223
  %vm266 = vcmask 974848
  %267 = vst.msk [vmem:[#allocation2 + $0xd8] sm:$0x1] %vm266, %v209
  %v268 = vrot.slane %v39, 7
  %v269 = vrot.slane %v54, 7
  %v270 = vrot.slane %v40, 7
  %v271 = vrot.slane %v55, 7
  %v272 = vrot.slane %v41, 7
  %v273 = vrot.slane %v56, 7
  %v274 = vrot.slane %v42, 7
  %v275 = vrot.slane %v57, 7
  %v276 = vrot.slane %v43, 7
  %v277 = vrot.slane %v58, 7
  %v278 = vrot.slane %v44, 7
  %v279 = vrot.slane %v59, 7
  %v280 = vrot.slane %v45, 7
  %v281 = vrot.slane %v60, 7
  %282 = vrot.lane.b32.xlu0 %v268, 122
  %v283 = vpop.permute.xlu0 %282
  %284 = vrot.lane.b32.xlu0 %v269, 122
  %v285 = vpop.permute.xlu0 %284
  %286 = vrot.lane.b32.xlu0 %v270, 122
  %v287 = vpop.permute.xlu0 %286
  %288 = vrot.lane.b32.xlu0 %v271, 122
  %v289 = vpop.permute.xlu0 %288
  %290 = vrot.lane.b32.xlu0 %v272, 122
  %v291 = vpop.permute.xlu0 %290
  %292 = vrot.lane.b32.xlu0 %v273, 122
  %v293 = vpop.permute.xlu0 %292
  %294 = vrot.lane.b32.xlu0 %v274, 122
  %v295 = vpop.permute.xlu0 %294
  %296 = vrot.lane.b32.xlu0 %v275, 122
  %v297 = vpop.permute.xlu0 %296
  %298 = vrot.lane.b32.xlu0 %v276, 122
  %v299 = vpop.permute.xlu0 %298
  %300 = vrot.lane.b32.xlu0 %v277, 122
  %v301 = vpop.permute.xlu0 %300
  %302 = vrot.lane.b32.xlu0 %v278, 122
  %v303 = vpop.permute.xlu0 %302
  %304 = vrot.lane.b32.xlu0 %v279, 122
  %v305 = vpop.permute.xlu0 %304
  %306 = vrot.lane.b32.xlu0 %v280, 122
  %v307 = vpop.permute.xlu0 %306
  %308 = vrot.lane.b32.xlu0 %v281, 122
  %v309 = vpop.permute.xlu0 %308
  %vm310 = vcmask 998400
  %v311 = vsel %vm310, %v283, %v285
  %v312 = vsel %vm310, %v285, %v287
  %v313 = vsel %vm310, %v287, %v289
  %v314 = vsel %vm310, %v289, %v291
  %v315 = vsel %vm310, %v291, %v293
  %v316 = vsel %vm310, %v293, %v295
  %v317 = vsel %vm310, %v295, %v297
  %v318 = vsel %vm310, %v297, %v299
  %v319 = vsel %vm310, %v299, %v301
  %v320 = vsel %vm310, %v301, %v303
  %v321 = vsel %vm310, %v303, %v305
  %v322 = vsel %vm310, %v305, %v307
  %v323 = vsel %vm310, %v307, %v309
  %338 = vst [vmem:[#allocation2 + $0x70] sm:$0xe] %v311
  %339 = vst [vmem:[#allocation2 + $0x78] sm:$0xe] %v312
  %340 = vst [vmem:[#allocation2 + $0x80] sm:$0xe] %v313
  %341 = vst [vmem:[#allocation2 + $0x88] sm:$0xe] %v314
  %342 = vst [vmem:[#allocation2 + $0x90] sm:$0xe] %v315
  %343 = vst [vmem:[#allocation2 + $0x98] sm:$0xe] %v316
  %344 = vst [vmem:[#allocation2 + $0xa0] sm:$0xe] %v317
  %345 = vst [vmem:[#allocation2 + $0xa8] sm:$0xe] %v318
  %346 = vst [vmem:[#allocation2 + $0xb0] sm:$0xe] %v319
  %347 = vst [vmem:[#allocation2 + $0xb8] sm:$0xe] %v320
  %348 = vst [vmem:[#allocation2 + $0xc0] sm:$0xe] %v321
  %349 = vst [vmem:[#allocation2 + $0xc8] sm:$0xe] %v322
  %350 = vst [vmem:[#allocation2 + $0xd0] sm:$0xe] %v323
  %vm351 = vcmask 977921
  %352 = vst.msk [vmem:[#allocation2 + $0xd8] sm:$0xe] %vm351, %v309
  %v353 = vcombine.low %v39, %v39
  %v354 = vcombine.low %v40, %v40
  %v355 = vcombine.low %v41, %v41
  %v356 = vcombine.low %v42, %v42
  %v357 = vcombine.low %v43, %v43
  %v358 = vcombine.low %v44, %v44
  %v359 = vcombine.low %v45, %v45
  %360 = vrot.lane.b32.xlu0 %v353, 120
  %v361 = vpop.permute.xlu0 %360
  %362 = vrot.lane.b32.xlu0 %v39, 120
  %v363 = vpop.permute.xlu0 %362
  %364 = vrot.lane.b32.xlu0 %v354, 120
  %v365 = vpop.permute.xlu0 %364
  %366 = vrot.lane.b32.xlu0 %v40, 120
  %v367 = vpop.permute.xlu0 %366
  %368 = vrot.lane.b32.xlu0 %v355, 120
  %v369 = vpop.permute.xlu0 %368
  %370 = vrot.lane.b32.xlu0 %v41, 120
  %v371 = vpop.permute.xlu0 %370
  %372 = vrot.lane.b32.xlu0 %v356, 120
  %v373 = vpop.permute.xlu0 %372
  %374 = vrot.lane.b32.xlu0 %v42, 120
  %v375 = vpop.permute.xlu0 %374
  %376 = vrot.lane.b32.xlu0 %v357, 120
  %v377 = vpop.permute.xlu0 %376
  %378 = vrot.lane.b32.xlu0 %v43, 120
  %v379 = vpop.permute.xlu0 %378
  %380 = vrot.lane.b32.xlu0 %v358, 120
  %v381 = vpop.permute.xlu0 %380
  %382 = vrot.lane.b32.xlu0 %v44, 120
  %v383 = vpop.permute.xlu0 %382
  %384 = vrot.lane.b32.xlu0 %v359, 120
  %v385 = vpop.permute.xlu0 %384
  %386 = vrot.lane.b32.xlu0 %v45, 120
  %v387 = vpop.permute.xlu0 %386
  %vm388 = vcmask 982016
  %v389 = vsel %vm388, %v361, %v363
  %v390 = vsel %vm388, %v363, %v365
  %v391 = vsel %vm388, %v365, %v367
  %v392 = vsel %vm388, %v367, %v369
  %v393 = vsel %vm388, %v369, %v371
  %v394 = vsel %vm388, %v371, %v373
  %v395 = vsel %vm388, %v373, %v375
  %v396 = vsel %vm388, %v375, %v377
  %v397 = vsel %vm388, %v377, %v379
  %v398 = vsel %vm388, %v379, %v381
  %v399 = vsel %vm388, %v381, %v383
  %v400 = vsel %vm388, %v383, %v385
  %v401 = vsel %vm388, %v385, %v387
  %416 = vst [vmem:[#allocation2 + $0x70] sm:$0x70] %v389
  %417 = vst [vmem:[#allocation2 + $0x78] sm:$0x70] %v390
  %418 = vst [vmem:[#allocation2 + $0x80] sm:$0x70] %v391
  %419 = vst [vmem:[#allocation2 + $0x88] sm:$0x70] %v392
  %420 = vst [vmem:[#allocation2 + $0x90] sm:$0x70] %v393
  %421 = vst [vmem:[#allocation2 + $0x98] sm:$0x70] %v394
  %422 = vst [vmem:[#allocation2 + $0xa0] sm:$0x70] %v395
  %423 = vst [vmem:[#allocation2 + $0xa8] sm:$0x70] %v396
  %424 = vst [vmem:[#allocation2 + $0xb0] sm:$0x70] %v397
  %425 = vst [vmem:[#allocation2 + $0xb8] sm:$0x70] %v398
  %426 = vst [vmem:[#allocation2 + $0xc0] sm:$0x70] %v399
  %427 = vst [vmem:[#allocation2 + $0xc8] sm:$0x70] %v400
  %428 = vst [vmem:[#allocation2 + $0xd0] sm:$0x70] %v401
  %vm429 = vcmask 980996
  %430 = vst.msk [vmem:[#allocation2 + $0xd8] sm:$0x70] %vm429, %v387
  %v432 = vrot.slane %v39, 1
  %v433 = vrot.slane %v54, 1
  %v434 = vrot.slane %v40, 1
  %v435 = vrot.slane %v55, 1
  %v436 = vrot.slane %v41, 1
  %v437 = vrot.slane %v56, 1
  %v438 = vrot.slane %v42, 1
  %v439 = vrot.slane %v57, 1
  %v440 = vrot.slane %v43, 1
  %v441 = vrot.slane %v58, 1
  %v442 = vrot.slane %v44, 1
  %v443 = vrot.slane %v59, 1
  %v444 = vrot.slane %v45, 1
  %v445 = vrot.slane %v60, 1
  %v446 = vrot.slane %v46, 1
  %447 = vrot.lane.b32.xlu0 %v432, 64
  %v448 = vpop.permute.xlu0 %447
  %449 = vrot.lane.b32.xlu0 %v433, 64
  %v450 = vpop.permute.xlu0 %449
  %451 = vrot.lane.b32.xlu0 %v434, 64
  %v452 = vpop.permute.xlu0 %451
  %453 = vrot.lane.b32.xlu0 %v435, 64
  %v454 = vpop.permute.xlu0 %453
  %455 = vrot.lane.b32.xlu0 %v436, 64
  %v456 = vpop.permute.xlu0 %455
  %457 = vrot.lane.b32.xlu0 %v437, 64
  %v458 = vpop.permute.xlu0 %457
  %459 = vrot.lane.b32.xlu0 %v438, 64
  %v460 = vpop.permute.xlu0 %459
  %461 = vrot.lane.b32.xlu0 %v439, 64
  %v462 = vpop.permute.xlu0 %461
  %463 = vrot.lane.b32.xlu0 %v440, 64
  %v464 = vpop.permute.xlu0 %463
  %465 = vrot.lane.b32.xlu0 %v441, 64
  %v466 = vpop.permute.xlu0 %465
  %467 = vrot.lane.b32.xlu0 %v442, 64
  %v468 = vpop.permute.xlu0 %467
  %469 = vrot.lane.b32.xlu0 %v443, 64
  %v470 = vpop.permute.xlu0 %469
  %471 = vrot.lane.b32.xlu0 %v444, 64
  %v472 = vpop.permute.xlu0 %471
  %473 = vrot.lane.b32.xlu0 %v445, 64
  %v474 = vpop.permute.xlu0 %473
  %475 = vrot.lane.b32.xlu0 %v446, 64
  %v476 = vpop.permute.xlu0 %475
  %vm477 = vcmask 523264
  %v478 = vsel %vm477, %v448, %v450
  %v479 = vsel %vm477, %v450, %v452
  %v480 = vsel %vm477, %v452, %v454
  %v481 = vsel %vm477, %v454, %v456
  %v482 = vsel %vm477, %v456, %v458
  %v483 = vsel %vm477, %v458, %v460
  %v484 = vsel %vm477, %v460, %v462
  %v485 = vsel %vm477, %v462, %v464
  %v486 = vsel %vm477, %v464, %v466
  %v487 = vsel %vm477, %v466, %v468
  %v488 = vsel %vm477, %v468, %v470
  %v489 = vsel %vm477, %v470, %v472
  %v490 = vsel %vm477, %v472, %v474
  %v491 = vsel %vm477, %v474, %v476
  %506 = vst [vmem:[#allocation2 + $0x70] sm:$0x80] %v478
  %507 = vst [vmem:[#allocation2 + $0x78] sm:$0x80] %v479
  %508 = vst [vmem:[#allocation2 + $0x80] sm:$0x80] %v480
  %509 = vst [vmem:[#allocation2 + $0x88] sm:$0x80] %v481
  %510 = vst [vmem:[#allocation2 + $0x90] sm:$0x80] %v482
  %511 = vst [vmem:[#allocation2 + $0x98] sm:$0x80] %v483
  %512 = vst [vmem:[#allocation2 + $0xa0] sm:$0x80] %v484
  %513 = vst [vmem:[#allocation2 + $0xa8] sm:$0x80] %v485
  %514 = vst [vmem:[#allocation2 + $0xb0] sm:$0x80] %v486
  %515 = vst [vmem:[#allocation2 + $0xb8] sm:$0x80] %v487
  %516 = vst [vmem:[#allocation2 + $0xc0] sm:$0x80] %v488
  %517 = vst [vmem:[#allocation2 + $0xc8] sm:$0x80] %v489
  %518 = vst [vmem:[#allocation2 + $0xd0] sm:$0x80] %v490
  %vm519 = vcmask 982023
  %520 = vst.msk [vmem:[#allocation2 + $0xd8] sm:$0x80] %vm519, %v491
  %521 = vst [vmem:[#allocation2 + $0xe0] sm:$0x3] %v478
  %522 = vst [vmem:[#allocation2 + $0xe8] sm:$0x3] %v479
  %523 = vst [vmem:[#allocation2 + $0xf0] sm:$0x3] %v480
  %524 = vst [vmem:[#allocation2 + $0xf8] sm:$0x3] %v481
  %525 = vst [vmem:[#allocation2 + $0x100] sm:$0x3] %v482
  %526 = vst [vmem:[#allocation2 + $0x108] sm:$0x3] %v483
  %527 = vst [vmem:[#allocation2 + $0x110] sm:$0x3] %v484
  %528 = vst [vmem:[#allocation2 + $0x118] sm:$0x3] %v485
  %529 = vst [vmem:[#allocation2 + $0x120] sm:$0x3] %v486
  %530 = vst [vmem:[#allocation2 + $0x128] sm:$0x3] %v487
  %531 = vst [vmem:[#allocation2 + $0x130] sm:$0x3] %v488
  %532 = vst [vmem:[#allocation2 + $0x138] sm:$0x3] %v489
  %533 = vst [vmem:[#allocation2 + $0x140] sm:$0x3] %v490
  %vm534 = vcmask 975872
  %535 = vst.msk [vmem:[#allocation2 + $0x148] sm:$0x3] %vm534, %v491
  %v536 = vrot.slane %v39, 6
  %v537 = vrot.slane %v54, 6
  %v538 = vrot.slane %v40, 6
  %v539 = vrot.slane %v55, 6
  %v540 = vrot.slane %v41, 6
  %v541 = vrot.slane %v56, 6
  %v542 = vrot.slane %v42, 6
  %v543 = vrot.slane %v57, 6
  %v544 = vrot.slane %v43, 6
  %v545 = vrot.slane %v58, 6
  %v546 = vrot.slane %v44, 6
  %v547 = vrot.slane %v59, 6
  %v548 = vrot.slane %v45, 6
  %v549 = vrot.slane %v60, 6
  %v550 = vrot.slane %v46, 6
  %551 = vrot.lane.b32.xlu0 %v536, 62
  %v552 = vpop.permute.xlu0 %551
  %553 = vrot.lane.b32.xlu0 %v537, 62
  %v554 = vpop.permute.xlu0 %553
  %555 = vrot.lane.b32.xlu0 %v538, 62
  %v556 = vpop.permute.xlu0 %555
  %557 = vrot.lane.b32.xlu0 %v539, 62
  %v558 = vpop.permute.xlu0 %557
  %559 = vrot.lane.b32.xlu0 %v540, 62
  %v560 = vpop.permute.xlu0 %559
  %561 = vrot.lane.b32.xlu0 %v541, 62
  %v562 = vpop.permute.xlu0 %561
  %563 = vrot.lane.b32.xlu0 %v542, 62
  %v564 = vpop.permute.xlu0 %563
  %565 = vrot.lane.b32.xlu0 %v543, 62
  %v566 = vpop.permute.xlu0 %565
  %567 = vrot.lane.b32.xlu0 %v544, 62
  %v568 = vpop.permute.xlu0 %567
  %569 = vrot.lane.b32.xlu0 %v545, 62
  %v570 = vpop.permute.xlu0 %569
  %571 = vrot.lane.b32.xlu0 %v546, 62
  %v572 = vpop.permute.xlu0 %571
  %573 = vrot.lane.b32.xlu0 %v547, 62
  %v574 = vpop.permute.xlu0 %573
  %575 = vrot.lane.b32.xlu0 %v548, 62
  %v576 = vpop.permute.xlu0 %575
  %577 = vrot.lane.b32.xlu0 %v549, 62
  %v578 = vpop.permute.xlu0 %577
  %579 = vrot.lane.b32.xlu0 %v550, 62
  %v580 = vpop.permute.xlu0 %579
  %vm581 = vcmask 506880
  %v582 = vsel %vm581, %v552, %v554
  %v583 = vsel %vm581, %v554, %v556
  %v584 = vsel %vm581, %v556, %v558
  %v585 = vsel %vm581, %v558, %v560
  %v586 = vsel %vm581, %v560, %v562
  %v587 = vsel %vm581, %v562, %v564
  %v588 = vsel %vm581, %v564, %v566
  %v589 = vsel %vm581, %v566, %v568
  %v590 = vsel %vm581, %v568, %v570
  %v591 = vsel %vm581, %v570, %v572
  %v592 = vsel %vm581, %v572, %v574
  %v593 = vsel %vm581, %v574, %v576
  %v594 = vsel %vm581, %v576, %v578
  %v595 = vsel %vm581, %v578, %v580
  %610 = vst [vmem:[#allocation2 + $0xe0] sm:$0x1c] %v582
  %611 = vst [vmem:[#allocation2 + $0xe8] sm:$0x1c] %v583
  %612 = vst [vmem:[#allocation2 + $0xf0] sm:$0x1c] %v584
  %613 = vst [vmem:[#allocation2 + $0xf8] sm:$0x1c] %v585
  %614 = vst [vmem:[#allocation2 + $0x100] sm:$0x1c] %v586
  %615 = vst [vmem:[#allocation2 + $0x108] sm:$0x1c] %v587
  %616 = vst [vmem:[#allocation2 + $0x110] sm:$0x1c] %v588
  %617 = vst [vmem:[#allocation2 + $0x118] sm:$0x1c] %v589
  %618 = vst [vmem:[#allocation2 + $0x120] sm:$0x1c] %v590
  %619 = vst [vmem:[#allocation2 + $0x128] sm:$0x1c] %v591
  %620 = vst [vmem:[#allocation2 + $0x130] sm:$0x1c] %v592
  %621 = vst [vmem:[#allocation2 + $0x138] sm:$0x1c] %v593
  %622 = vst [vmem:[#allocation2 + $0x140] sm:$0x1c] %v594
  %vm623 = vcmask 978946
  %624 = vst.msk [vmem:[#allocation2 + $0x148] sm:$0x1c] %vm623, %v595
  %v625 = vrot.slane %v39, 3
  %v626 = vrot.slane %v54, 3
  %v627 = vrot.slane %v40, 3
  %v628 = vrot.slane %v55, 3
  %v629 = vrot.slane %v41, 3
  %v630 = vrot.slane %v56, 3
  %v631 = vrot.slane %v42, 3
  %v632 = vrot.slane %v57, 3
  %v633 = vrot.slane %v43, 3
  %v634 = vrot.slane %v58, 3
  %v635 = vrot.slane %v44, 3
  %v636 = vrot.slane %v59, 3
  %v637 = vrot.slane %v45, 3
  %v638 = vrot.slane %v60, 3
  %v639 = vrot.slane %v46, 3
  %640 = vrot.lane.b32.xlu0 %v625, 60
  %v641 = vpop.permute.xlu0 %640
  %642 = vrot.lane.b32.xlu0 %v626, 60
  %v643 = vpop.permute.xlu0 %642
  %644 = vrot.lane.b32.xlu0 %v627, 60
  %v645 = vpop.permute.xlu0 %644
  %646 = vrot.lane.b32.xlu0 %v628, 60
  %v647 = vpop.permute.xlu0 %646
  %648 = vrot.lane.b32.xlu0 %v629, 60
  %v649 = vpop.permute.xlu0 %648
  %650 = vrot.lane.b32.xlu0 %v630, 60
  %v651 = vpop.permute.xlu0 %650
  %652 = vrot.lane.b32.xlu0 %v631, 60
  %v653 = vpop.permute.xlu0 %652
  %654 = vrot.lane.b32.xlu0 %v632, 60
  %v655 = vpop.permute.xlu0 %654
  %656 = vrot.lane.b32.xlu0 %v633, 60
  %v657 = vpop.permute.xlu0 %656
  %658 = vrot.lane.b32.xlu0 %v634, 60
  %v659 = vpop.permute.xlu0 %658
  %660 = vrot.lane.b32.xlu0 %v635, 60
  %v661 = vpop.permute.xlu0 %660
  %662 = vrot.lane.b32.xlu0 %v636, 60
  %v663 = vpop.permute.xlu0 %662
  %664 = vrot.lane.b32.xlu0 %v637, 60
  %v665 = vpop.permute.xlu0 %664
  %666 = vrot.lane.b32.xlu0 %v638, 60
  %v667 = vpop.permute.xlu0 %666
  %668 = vrot.lane.b32.xlu0 %v639, 60
  %v669 = vpop.permute.xlu0 %668
  %vm670 = vcmask 490496
  %v671 = vsel %vm670, %v641, %v643
  %v672 = vsel %vm670, %v643, %v645
  %v673 = vsel %vm670, %v645, %v647
  %v674 = vsel %vm670, %v647, %v649
  %v675 = vsel %vm670, %v649, %v651
  %v676 = vsel %vm670, %v651, %v653
  %v677 = vsel %vm670, %v653, %v655
  %v678 = vsel %vm670, %v655, %v657
  %v679 = vsel %vm670, %v657, %v659
  %v680 = vsel %vm670, %v659, %v661
  %v681 = vsel %vm670, %v661, %v663
  %v682 = vsel %vm670, %v663, %v665
  %v683 = vsel %vm670, %v665, %v667
  %v684 = vsel %vm670, %v667, %v669
  %699 = vst [vmem:[#allocation2 + $0xe0] sm:$0xe0] %v671
  %700 = vst [vmem:[#allocation2 + $0xe8] sm:$0xe0] %v672
  %701 = vst [vmem:[#allocation2 + $0xf0] sm:$0xe0] %v673
  %702 = vst [vmem:[#allocation2 + $0xf8] sm:$0xe0] %v674
  %703 = vst [vmem:[#allocation2 + $0x100] sm:$0xe0] %v675
  %704 = vst [vmem:[#allocation2 + $0x108] sm:$0xe0] %v676
  %705 = vst [vmem:[#allocation2 + $0x110] sm:$0xe0] %v677
  %706 = vst [vmem:[#allocation2 + $0x118] sm:$0xe0] %v678
  %707 = vst [vmem:[#allocation2 + $0x120] sm:$0xe0] %v679
  %708 = vst [vmem:[#allocation2 + $0x128] sm:$0xe0] %v680
  %709 = vst [vmem:[#allocation2 + $0x130] sm:$0xe0] %v681
  %710 = vst [vmem:[#allocation2 + $0x138] sm:$0xe0] %v682
  %711 = vst [vmem:[#allocation2 + $0x140] sm:$0xe0] %v683
  %vm712 = vcmask 982021
  %713 = vst.msk [vmem:[#allocation2 + $0x148] sm:$0xe0] %vm712, %v684
  %714 = vrot.lane.b32.xlu0 %v39, 58
  %v715 = vpop.permute.xlu0 %714
  %716 = vrot.lane.b32.xlu0 %v54, 58
  %v717 = vpop.permute.xlu0 %716
  %718 = vrot.lane.b32.xlu0 %v40, 58
  %v719 = vpop.permute.xlu0 %718
  %720 = vrot.lane.b32.xlu0 %v55, 58
  %v721 = vpop.permute.xlu0 %720
  %722 = vrot.lane.b32.xlu0 %v41, 58
  %v723 = vpop.permute.xlu0 %722
  %724 = vrot.lane.b32.xlu0 %v56, 58
  %v725 = vpop.permute.xlu0 %724
  %726 = vrot.lane.b32.xlu0 %v42, 58
  %v727 = vpop.permute.xlu0 %726
  %728 = vrot.lane.b32.xlu0 %v57, 58
  %v729 = vpop.permute.xlu0 %728
  %730 = vrot.lane.b32.xlu0 %v43, 58
  %v731 = vpop.permute.xlu0 %730
  %732 = vrot.lane.b32.xlu0 %v58, 58
  %v733 = vpop.permute.xlu0 %732
  %734 = vrot.lane.b32.xlu0 %v44, 58
  %v735 = vpop.permute.xlu0 %734
  %736 = vrot.lane.b32.xlu0 %v59, 58
  %v737 = vpop.permute.xlu0 %736
  %738 = vrot.lane.b32.xlu0 %v45, 58
  %v739 = vpop.permute.xlu0 %738
  %740 = vrot.lane.b32.xlu0 %v60, 58
  %v741 = vpop.permute.xlu0 %740
  %742 = vrot.lane.b32.xlu0 %v46, 58
  %v743 = vpop.permute.xlu0 %742
  %vm744 = vcmask 474112
  %v745 = vsel %vm744, %v715, %v717
  %v746 = vsel %vm744, %v717, %v719
  %v747 = vsel %vm744, %v719, %v721
  %v748 = vsel %vm744, %v721, %v723
  %v749 = vsel %vm744, %v723, %v725
  %v750 = vsel %vm744, %v725, %v727
  %v751 = vsel %vm744, %v727, %v729
  %v752 = vsel %vm744, %v729, %v731
  %v753 = vsel %vm744, %v731, %v733
  %v754 = vsel %vm744, %v733, %v735
  %v755 = vsel %vm744, %v735, %v737
  %v756 = vsel %vm744, %v737, %v739
  %v757 = vsel %vm744, %v739, %v741
  %v758 = vsel %vm744, %v741, %v743
  %773 = vst [vmem:[#allocation2 + $0x150] sm:$0x7] %v745
  %774 = vst [vmem:[#allocation2 + $0x158] sm:$0x7] %v746
  %775 = vst [vmem:[#allocation2 + $0x160] sm:$0x7] %v747
  %776 = vst [vmem:[#allocation2 + $0x168] sm:$0x7] %v748
  %777 = vst [vmem:[#allocation2 + $0x170] sm:$0x7] %v749
  %778 = vst [vmem:[#allocation2 + $0x178] sm:$0x7] %v750
  %779 = vst [vmem:[#allocation2 + $0x180] sm:$0x7] %v751
  %780 = vst [vmem:[#allocation2 + $0x188] sm:$0x7] %v752
  %781 = vst [vmem:[#allocation2 + $0x190] sm:$0x7] %v753
  %782 = vst [vmem:[#allocation2 + $0x198] sm:$0x7] %v754
  %783 = vst [vmem:[#allocation2 + $0x1a0] sm:$0x7] %v755
  %784 = vst [vmem:[#allocation2 + $0x1a8] sm:$0x7] %v756
  %785 = vst [vmem:[#allocation2 + $0x1b0] sm:$0x7] %v757
  %786 = vst.msk [vmem:[#allocation2 + $0x1b8] sm:$0x7] %vm81, %v758
  %v787 = vrot.slane %v46, 5
  %788 = vrot.lane.b32.xlu0 %v83, 56
  %v789 = vpop.permute.xlu0 %788
  %790 = vrot.lane.b32.xlu0 %v84, 56
  %v791 = vpop.permute.xlu0 %790
  %792 = vrot.lane.b32.xlu0 %v85, 56
  %v793 = vpop.permute.xlu0 %792
  %794 = vrot.lane.b32.xlu0 %v86, 56
  %v795 = vpop.permute.xlu0 %794
  %796 = vrot.lane.b32.xlu0 %v87, 56
  %v797 = vpop.permute.xlu0 %796
  %798 = vrot.lane.b32.xlu0 %v88, 56
  %v799 = vpop.permute.xlu0 %798
  %800 = vrot.lane.b32.xlu0 %v89, 56
  %v801 = vpop.permute.xlu0 %800
  %802 = vrot.lane.b32.xlu0 %v90, 56
  %v803 = vpop.permute.xlu0 %802
  %804 = vrot.lane.b32.xlu0 %v91, 56
  %v805 = vpop.permute.xlu0 %804
  %806 = vrot.lane.b32.xlu0 %v92, 56
  %v807 = vpop.permute.xlu0 %806
  %808 = vrot.lane.b32.xlu0 %v93, 56
  %v809 = vpop.permute.xlu0 %808
  %810 = vrot.lane.b32.xlu0 %v94, 56
  %v811 = vpop.permute.xlu0 %810
  %812 = vrot.lane.b32.xlu0 %v95, 56
  %v813 = vpop.permute.xlu0 %812
  %814 = vrot.lane.b32.xlu0 %v96, 56
  %v815 = vpop.permute.xlu0 %814
  %816 = vrot.lane.b32.xlu0 %v787, 56
  %v817 = vpop.permute.xlu0 %816
  %vm818 = vcmask 457728
  %v819 = vsel %vm818, %v789, %v791
  %v820 = vsel %vm818, %v791, %v793
  %v821 = vsel %vm818, %v793, %v795
  %v822 = vsel %vm818, %v795, %v797
  %v823 = vsel %vm818, %v797, %v799
  %v824 = vsel %vm818, %v799, %v801
  %v825 = vsel %vm818, %v801, %v803
  %v826 = vsel %vm818, %v803, %v805
  %v827 = vsel %vm818, %v805, %v807
  %v828 = vsel %vm818, %v807, %v809
  %v829 = vsel %vm818, %v809, %v811
  %v830 = vsel %vm818, %v811, %v813
  %v831 = vsel %vm818, %v813, %v815
  %v832 = vsel %vm818, %v815, %v817
  %847 = vst [vmem:[#allocation2 + $0x150] sm:$0x38] %v819
  %848 = vst [vmem:[#allocation2 + $0x158] sm:$0x38] %v820
  %849 = vst [vmem:[#allocation2 + $0x160] sm:$0x38] %v821
  %850 = vst [vmem:[#allocation2 + $0x168] sm:$0x38] %v822
  %851 = vst [vmem:[#allocation2 + $0x170] sm:$0x38] %v823
  %852 = vst [vmem:[#allocation2 + $0x178] sm:$0x38] %v824
  %853 = vst [vmem:[#allocation2 + $0x180] sm:$0x38] %v825
  %854 = vst [vmem:[#allocation2 + $0x188] sm:$0x38] %v826
  %855 = vst [vmem:[#allocation2 + $0x190] sm:$0x38] %v827
  %856 = vst [vmem:[#allocation2 + $0x198] sm:$0x38] %v828
  %857 = vst [vmem:[#allocation2 + $0x1a0] sm:$0x38] %v829
  %858 = vst [vmem:[#allocation2 + $0x1a8] sm:$0x38] %v830
  %859 = vst [vmem:[#allocation2 + $0x1b0] sm:$0x38] %v831
  %860 = vst.msk [vmem:[#allocation2 + $0x1b8] sm:$0x38] %vm166, %v832
  %v861 = vrot.slane %v46, 2
  %876 = vst [vmem:[#allocation2 + $0x150] sm:$0xc0] %v169
  %877 = vst [vmem:[#allocation2 + $0x158] sm:$0xc0] %v170
  %878 = vst [vmem:[#allocation2 + $0x160] sm:$0xc0] %v171
  %879 = vst [vmem:[#allocation2 + $0x168] sm:$0xc0] %v172
  %880 = vst [vmem:[#allocation2 + $0x170] sm:$0xc0] %v173
  %881 = vst [vmem:[#allocation2 + $0x178] sm:$0xc0] %v174
  %882 = vst [vmem:[#allocation2 + $0x180] sm:$0xc0] %v175
  %883 = vst [vmem:[#allocation2 + $0x188] sm:$0xc0] %v176
  %884 = vst [vmem:[#allocation2 + $0x190] sm:$0xc0] %v177
  %885 = vst [vmem:[#allocation2 + $0x198] sm:$0xc0] %v178
  %886 = vst [vmem:[#allocation2 + $0x1a0] sm:$0xc0] %v179
  %887 = vst [vmem:[#allocation2 + $0x1a8] sm:$0xc0] %v180
  %888 = vst [vmem:[#allocation2 + $0x1b0] sm:$0xc0] %v181
  %889 = vst.msk [vmem:[#allocation2 + $0x1b8] sm:$0xc0] %vm251, %v861
  %890 = vst [vmem:[#allocation2 + $0x1c0] sm:$0x1] %v169
  %891 = vst [vmem:[#allocation2 + $0x1c8] sm:$0x1] %v170
  %892 = vst [vmem:[#allocation2 + $0x1d0] sm:$0x1] %v171
  %893 = vst [vmem:[#allocation2 + $0x1d8] sm:$0x1] %v172
  %894 = vst [vmem:[#allocation2 + $0x1e0] sm:$0x1] %v173
  %895 = vst [vmem:[#allocation2 + $0x1e8] sm:$0x1] %v174
  %896 = vst [vmem:[#allocation2 + $0x1f0] sm:$0x1] %v175
  %897 = vst [vmem:[#allocation2 + $0x1f8] sm:$0x1] %v176
  %898 = vst [vmem:[#allocation2 + $0x200] sm:$0x1] %v177
  %899 = vst [vmem:[#allocation2 + $0x208] sm:$0x1] %v178
  %900 = vst [vmem:[#allocation2 + $0x210] sm:$0x1] %v179
  %901 = vst [vmem:[#allocation2 + $0x218] sm:$0x1] %v180
  %902 = vst [vmem:[#allocation2 + $0x220] sm:$0x1] %v181
  %903 = vst.msk [vmem:[#allocation2 + $0x228] sm:$0x1] %vm266, %v861
  %v904 = vrot.slane %v46, 7
  %905 = vrot.lane.b32.xlu0 %v269, 126
  %v906 = vpop.permute.xlu0 %905
  %907 = vrot.lane.b32.xlu0 %v270, 126
  %v908 = vpop.permute.xlu0 %907
  %909 = vrot.lane.b32.xlu0 %v271, 126
  %v910 = vpop.permute.xlu0 %909
  %911 = vrot.lane.b32.xlu0 %v272, 126
  %v912 = vpop.permute.xlu0 %911
  %913 = vrot.lane.b32.xlu0 %v273, 126
  %v914 = vpop.permute.xlu0 %913
  %915 = vrot.lane.b32.xlu0 %v274, 126
  %v916 = vpop.permute.xlu0 %915
  %917 = vrot.lane.b32.xlu0 %v275, 126
  %v918 = vpop.permute.xlu0 %917
  %919 = vrot.lane.b32.xlu0 %v276, 126
  %v920 = vpop.permute.xlu0 %919
  %921 = vrot.lane.b32.xlu0 %v277, 126
  %v922 = vpop.permute.xlu0 %921
  %923 = vrot.lane.b32.xlu0 %v278, 126
  %v924 = vpop.permute.xlu0 %923
  %925 = vrot.lane.b32.xlu0 %v279, 126
  %v926 = vpop.permute.xlu0 %925
  %927 = vrot.lane.b32.xlu0 %v280, 126
  %v928 = vpop.permute.xlu0 %927
  %929 = vrot.lane.b32.xlu0 %v281, 126
  %v930 = vpop.permute.xlu0 %929
  %931 = vrot.lane.b32.xlu0 %v904, 126
  %v932 = vpop.permute.xlu0 %931
  %v933 = vsel %vm125, %v906, %v908
  %v934 = vsel %vm125, %v908, %v910
  %v935 = vsel %vm125, %v910, %v912
  %v936 = vsel %vm125, %v912, %v914
  %v937 = vsel %vm125, %v914, %v916
  %v938 = vsel %vm125, %v916, %v918
  %v939 = vsel %vm125, %v918, %v920
  %v940 = vsel %vm125, %v920, %v922
  %v941 = vsel %vm125, %v922, %v924
  %v942 = vsel %vm125, %v924, %v926
  %v943 = vsel %vm125, %v926, %v928
  %v944 = vsel %vm125, %v928, %v930
  %v945 = vsel %vm125, %v930, %v932
  %960 = vst [vmem:[#allocation2 + $0x1c0] sm:$0xe] %v933
  %961 = vst [vmem:[#allocation2 + $0x1c8] sm:$0xe] %v934
  %962 = vst [vmem:[#allocation2 + $0x1d0] sm:$0xe] %v935
  %963 = vst [vmem:[#allocation2 + $0x1d8] sm:$0xe] %v936
  %964 = vst [vmem:[#allocation2 + $0x1e0] sm:$0xe] %v937
  %965 = vst [vmem:[#allocation2 + $0x1e8] sm:$0xe] %v938
  %966 = vst [vmem:[#allocation2 + $0x1f0] sm:$0xe] %v939
  %967 = vst [vmem:[#allocation2 + $0x1f8] sm:$0xe] %v940
  %968 = vst [vmem:[#allocation2 + $0x200] sm:$0xe] %v941
  %969 = vst [vmem:[#allocation2 + $0x208] sm:$0xe] %v942
  %970 = vst [vmem:[#allocation2 + $0x210] sm:$0xe] %v943
  %971 = vst [vmem:[#allocation2 + $0x218] sm:$0xe] %v944
  %972 = vst [vmem:[#allocation2 + $0x220] sm:$0xe] %v945
  %973 = vst.msk [vmem:[#allocation2 + $0x228] sm:$0xe] %vm351, %v932
  %v974 = vcombine.low %v46, %v46
  %975 = vrot.lane.b32.xlu0 %v39, 124
  %v976 = vpop.permute.xlu0 %975
  %977 = vrot.lane.b32.xlu0 %v354, 124
  %v978 = vpop.permute.xlu0 %977
  %979 = vrot.lane.b32.xlu0 %v40, 124
  %v980 = vpop.permute.xlu0 %979
  %981 = vrot.lane.b32.xlu0 %v355, 124
  %v982 = vpop.permute.xlu0 %981
  %983 = vrot.lane.b32.xlu0 %v41, 124
  %v984 = vpop.permute.xlu0 %983
  %985 = vrot.lane.b32.xlu0 %v356, 124
  %v986 = vpop.permute.xlu0 %985
  %987 = vrot.lane.b32.xlu0 %v42, 124
  %v988 = vpop.permute.xlu0 %987
  %989 = vrot.lane.b32.xlu0 %v357, 124
  %v990 = vpop.permute.xlu0 %989
  %991 = vrot.lane.b32.xlu0 %v43, 124
  %v992 = vpop.permute.xlu0 %991
  %993 = vrot.lane.b32.xlu0 %v358, 124
  %v994 = vpop.permute.xlu0 %993
  %995 = vrot.lane.b32.xlu0 %v44, 124
  %v996 = vpop.permute.xlu0 %995
  %997 = vrot.lane.b32.xlu0 %v359, 124
  %v998 = vpop.permute.xlu0 %997
  %999 = vrot.lane.b32.xlu0 %v45, 124
  %v1000 = vpop.permute.xlu0 %999
  %1001 = vrot.lane.b32.xlu0 %v974, 124
  %v1002 = vpop.permute.xlu0 %1001
  %v1003 = vsel %vm210, %v976, %v978
  %v1004 = vsel %vm210, %v978, %v980
  %v1005 = vsel %vm210, %v980, %v982
  %v1006 = vsel %vm210, %v982, %v984
  %v1007 = vsel %vm210, %v984, %v986
  %v1008 = vsel %vm210, %v986, %v988
  %v1009 = vsel %vm210, %v988, %v990
  %v1010 = vsel %vm210, %v990, %v992
  %v1011 = vsel %vm210, %v992, %v994
  %v1012 = vsel %vm210, %v994, %v996
  %v1013 = vsel %vm210, %v996, %v998
  %v1014 = vsel %vm210, %v998, %v1000
  %v1015 = vsel %vm210, %v1000, %v1002
  %1030 = vst [vmem:[#allocation2 + $0x1c0] sm:$0x70] %v1003
  %1031 = vst [vmem:[#allocation2 + $0x1c8] sm:$0x70] %v1004
  %1032 = vst [vmem:[#allocation2 + $0x1d0] sm:$0x70] %v1005
  %1033 = vst [vmem:[#allocation2 + $0x1d8] sm:$0x70] %v1006
  %1034 = vst [vmem:[#allocation2 + $0x1e0] sm:$0x70] %v1007
  %1035 = vst [vmem:[#allocation2 + $0x1e8] sm:$0x70] %v1008
  %1036 = vst [vmem:[#allocation2 + $0x1f0] sm:$0x70] %v1009
  %1037 = vst [vmem:[#allocation2 + $0x1f8] sm:$0x70] %v1010
  %1038 = vst [vmem:[#allocation2 + $0x200] sm:$0x70] %v1011
  %1039 = vst [vmem:[#allocation2 + $0x208] sm:$0x70] %v1012
  %1040 = vst [vmem:[#allocation2 + $0x210] sm:$0x70] %v1013
  %1041 = vst [vmem:[#allocation2 + $0x218] sm:$0x70] %v1014
  %1042 = vst [vmem:[#allocation2 + $0x220] sm:$0x70] %v1015
  %1043 = vst.msk [vmem:[#allocation2 + $0x228] sm:$0x70] %vm429, %v1002
  %1044 = vrot.lane.b32.xlu0 %v433, 122
  %v1045 = vpop.permute.xlu0 %1044
  %1046 = vrot.lane.b32.xlu0 %v434, 122
  %v1047 = vpop.permute.xlu0 %1046
  %1048 = vrot.lane.b32.xlu0 %v435, 122
  %v1049 = vpop.permute.xlu0 %1048
  %1050 = vrot.lane.b32.xlu0 %v436, 122
  %v1051 = vpop.permute.xlu0 %1050
  %1052 = vrot.lane.b32.xlu0 %v437, 122
  %v1053 = vpop.permute.xlu0 %1052
  %1054 = vrot.lane.b32.xlu0 %v438, 122
  %v1055 = vpop.permute.xlu0 %1054
  %1056 = vrot.lane.b32.xlu0 %v439, 122
  %v1057 = vpop.permute.xlu0 %1056
  %1058 = vrot.lane.b32.xlu0 %v440, 122
  %v1059 = vpop.permute.xlu0 %1058
  %1060 = vrot.lane.b32.xlu0 %v441, 122
  %v1061 = vpop.permute.xlu0 %1060
  %1062 = vrot.lane.b32.xlu0 %v442, 122
  %v1063 = vpop.permute.xlu0 %1062
  %1064 = vrot.lane.b32.xlu0 %v443, 122
  %v1065 = vpop.permute.xlu0 %1064
  %1066 = vrot.lane.b32.xlu0 %v444, 122
  %v1067 = vpop.permute.xlu0 %1066
  %1068 = vrot.lane.b32.xlu0 %v445, 122
  %v1069 = vpop.permute.xlu0 %1068
  %1070 = vrot.lane.b32.xlu0 %v446, 122
  %v1071 = vpop.permute.xlu0 %1070
  %v1072 = vsel %vm310, %v1045, %v1047
  %v1073 = vsel %vm310, %v1047, %v1049
  %v1074 = vsel %vm310, %v1049, %v1051
  %v1075 = vsel %vm310, %v1051, %v1053
  %v1076 = vsel %vm310, %v1053, %v1055
  %v1077 = vsel %vm310, %v1055, %v1057
  %v1078 = vsel %vm310, %v1057, %v1059
  %v1079 = vsel %vm310, %v1059, %v1061
  %v1080 = vsel %vm310, %v1061, %v1063
  %v1081 = vsel %vm310, %v1063, %v1065
  %v1082 = vsel %vm310, %v1065, %v1067
  %v1083 = vsel %vm310, %v1067, %v1069
  %v1084 = vsel %vm310, %v1069, %v1071
  %1099 = vst [vmem:[#allocation2 + $0x1c0] sm:$0x80] %v1072
  %1100 = vst [vmem:[#allocation2 + $0x1c8] sm:$0x80] %v1073
  %1101 = vst [vmem:[#allocation2 + $0x1d0] sm:$0x80] %v1074
  %1102 = vst [vmem:[#allocation2 + $0x1d8] sm:$0x80] %v1075
  %1103 = vst [vmem:[#allocation2 + $0x1e0] sm:$0x80] %v1076
  %1104 = vst [vmem:[#allocation2 + $0x1e8] sm:$0x80] %v1077
  %1105 = vst [vmem:[#allocation2 + $0x1f0] sm:$0x80] %v1078
  %1106 = vst [vmem:[#allocation2 + $0x1f8] sm:$0x80] %v1079
  %1107 = vst [vmem:[#allocation2 + $0x200] sm:$0x80] %v1080
  %1108 = vst [vmem:[#allocation2 + $0x208] sm:$0x80] %v1081
  %1109 = vst [vmem:[#allocation2 + $0x210] sm:$0x80] %v1082
  %1110 = vst [vmem:[#allocation2 + $0x218] sm:$0x80] %v1083
  %1111 = vst [vmem:[#allocation2 + $0x220] sm:$0x80] %v1084
  %1112 = vst.msk [vmem:[#allocation2 + $0x228] sm:$0x80] %vm519, %v1071
  %1113 = vst [vmem:[#allocation2 + $0x230] sm:$0x3] %v1072
  %1114 = vst [vmem:[#allocation2 + $0x238] sm:$0x3] %v1073
  %1115 = vst [vmem:[#allocation2 + $0x240] sm:$0x3] %v1074
  %1116 = vst [vmem:[#allocation2 + $0x248] sm:$0x3] %v1075
  %1117 = vst [vmem:[#allocation2 + $0x250] sm:$0x3] %v1076
  %1118 = vst [vmem:[#allocation2 + $0x258] sm:$0x3] %v1077
  %1119 = vst [vmem:[#allocation2 + $0x260] sm:$0x3] %v1078
  %1120 = vst [vmem:[#allocation2 + $0x268] sm:$0x3] %v1079
  %1121 = vst [vmem:[#allocation2 + $0x270] sm:$0x3] %v1080
  %1122 = vst [vmem:[#allocation2 + $0x278] sm:$0x3] %v1081
  %1123 = vst [vmem:[#allocation2 + $0x280] sm:$0x3] %v1082
  %1124 = vst [vmem:[#allocation2 + $0x288] sm:$0x3] %v1083
  %1125 = vst [vmem:[#allocation2 + $0x290] sm:$0x3] %v1084
  %1126 = vst.msk [vmem:[#allocation2 + $0x298] sm:$0x3] %vm534, %v1071
  %1127 = vrot.lane.b32.xlu0 %v537, 120
  %v1128 = vpop.permute.xlu0 %1127
  %1129 = vrot.lane.b32.xlu0 %v538, 120
  %v1130 = vpop.permute.xlu0 %1129
  %1131 = vrot.lane.b32.xlu0 %v539, 120
  %v1132 = vpop.permute.xlu0 %1131
  %1133 = vrot.lane.b32.xlu0 %v540, 120
  %v1134 = vpop.permute.xlu0 %1133
  %1135 = vrot.lane.b32.xlu0 %v541, 120
  %v1136 = vpop.permute.xlu0 %1135
  %1137 = vrot.lane.b32.xlu0 %v542, 120
  %v1138 = vpop.permute.xlu0 %1137
  %1139 = vrot.lane.b32.xlu0 %v543, 120
  %v1140 = vpop.permute.xlu0 %1139
  %1141 = vrot.lane.b32.xlu0 %v544, 120
  %v1142 = vpop.permute.xlu0 %1141
  %1143 = vrot.lane.b32.xlu0 %v545, 120
  %v1144 = vpop.permute.xlu0 %1143
  %1145 = vrot.lane.b32.xlu0 %v546, 120
  %v1146 = vpop.permute.xlu0 %1145
  %1147 = vrot.lane.b32.xlu0 %v547, 120
  %v1148 = vpop.permute.xlu0 %1147
  %1149 = vrot.lane.b32.xlu0 %v548, 120
  %v1150 = vpop.permute.xlu0 %1149
  %1151 = vrot.lane.b32.xlu0 %v549, 120
  %v1152 = vpop.permute.xlu0 %1151
  %1153 = vrot.lane.b32.xlu0 %v550, 120
  %v1154 = vpop.permute.xlu0 %1153
  %v1155 = vsel %vm388, %v1128, %v1130
  %v1156 = vsel %vm388, %v1130, %v1132
  %v1157 = vsel %vm388, %v1132, %v1134
  %v1158 = vsel %vm388, %v1134, %v1136
  %v1159 = vsel %vm388, %v1136, %v1138
  %v1160 = vsel %vm388, %v1138, %v1140
  %v1161 = vsel %vm388, %v1140, %v1142
  %v1162 = vsel %vm388, %v1142, %v1144
  %v1163 = vsel %vm388, %v1144, %v1146
  %v1164 = vsel %vm388, %v1146, %v1148
  %v1165 = vsel %vm388, %v1148, %v1150
  %v1166 = vsel %vm388, %v1150, %v1152
  %v1167 = vsel %vm388, %v1152, %v1154
  %1182 = vst [vmem:[#allocation2 + $0x230] sm:$0x1c] %v1155
  %1183 = vst [vmem:[#allocation2 + $0x238] sm:$0x1c] %v1156
  %1184 = vst [vmem:[#allocation2 + $0x240] sm:$0x1c] %v1157
  %1185 = vst [vmem:[#allocation2 + $0x248] sm:$0x1c] %v1158
  %1186 = vst [vmem:[#allocation2 + $0x250] sm:$0x1c] %v1159
  %1187 = vst [vmem:[#allocation2 + $0x258] sm:$0x1c] %v1160
  %1188 = vst [vmem:[#allocation2 + $0x260] sm:$0x1c] %v1161
  %1189 = vst [vmem:[#allocation2 + $0x268] sm:$0x1c] %v1162
  %1190 = vst [vmem:[#allocation2 + $0x270] sm:$0x1c] %v1163
  %1191 = vst [vmem:[#allocation2 + $0x278] sm:$0x1c] %v1164
  %1192 = vst [vmem:[#allocation2 + $0x280] sm:$0x1c] %v1165
  %1193 = vst [vmem:[#allocation2 + $0x288] sm:$0x1c] %v1166
  %1194 = vst [vmem:[#allocation2 + $0x290] sm:$0x1c] %v1167
  %1195 = vst.msk [vmem:[#allocation2 + $0x298] sm:$0x1c] %vm623, %v1154
  %v1196 = vcombine.high %v46, %v46
  %v1197 = vrot.slane %v1196, 3
  %1198 = vrot.lane.b32.xlu0 %v626, 64
  %v1199 = vpop.permute.xlu0 %1198
  %1200 = vrot.lane.b32.xlu0 %v627, 64
  %v1201 = vpop.permute.xlu0 %1200
  %1202 = vrot.lane.b32.xlu0 %v628, 64
  %v1203 = vpop.permute.xlu0 %1202
  %1204 = vrot.lane.b32.xlu0 %v629, 64
  %v1205 = vpop.permute.xlu0 %1204
  %1206 = vrot.lane.b32.xlu0 %v630, 64
  %v1207 = vpop.permute.xlu0 %1206
  %1208 = vrot.lane.b32.xlu0 %v631, 64
  %v1209 = vpop.permute.xlu0 %1208
  %1210 = vrot.lane.b32.xlu0 %v632, 64
  %v1211 = vpop.permute.xlu0 %1210
  %1212 = vrot.lane.b32.xlu0 %v633, 64
  %v1213 = vpop.permute.xlu0 %1212
  %1214 = vrot.lane.b32.xlu0 %v634, 64
  %v1215 = vpop.permute.xlu0 %1214
  %1216 = vrot.lane.b32.xlu0 %v635, 64
  %v1217 = vpop.permute.xlu0 %1216
  %1218 = vrot.lane.b32.xlu0 %v636, 64
  %v1219 = vpop.permute.xlu0 %1218
  %1220 = vrot.lane.b32.xlu0 %v637, 64
  %v1221 = vpop.permute.xlu0 %1220
  %1222 = vrot.lane.b32.xlu0 %v638, 64
  %v1223 = vpop.permute.xlu0 %1222
  %1224 = vrot.lane.b32.xlu0 %v639, 64
  %v1225 = vpop.permute.xlu0 %1224
  %1226 = vrot.lane.b32.xlu0 %v1197, 64
  %v1227 = vpop.permute.xlu0 %1226
  %v1228 = vsel %vm477, %v1199, %v1201
  %v1229 = vsel %vm477, %v1201, %v1203
  %v1230 = vsel %vm477, %v1203, %v1205
  %v1231 = vsel %vm477, %v1205, %v1207
  %v1232 = vsel %vm477, %v1207, %v1209
  %v1233 = vsel %vm477, %v1209, %v1211
  %v1234 = vsel %vm477, %v1211, %v1213
  %v1235 = vsel %vm477, %v1213, %v1215
  %v1236 = vsel %vm477, %v1215, %v1217
  %v1237 = vsel %vm477, %v1217, %v1219
  %v1238 = vsel %vm477, %v1219, %v1221
  %v1239 = vsel %vm477, %v1221, %v1223
  %v1240 = vsel %vm477, %v1223, %v1225
  %v1241 = vsel %vm477, %v1225, %v1227
  %1256 = vst [vmem:[#allocation2 + $0x230] sm:$0xe0] %v1228
  %1257 = vst [vmem:[#allocation2 + $0x238] sm:$0xe0] %v1229
  %1258 = vst [vmem:[#allocation2 + $0x240] sm:$0xe0] %v1230
  %1259 = vst [vmem:[#allocation2 + $0x248] sm:$0xe0] %v1231
  %1260 = vst [vmem:[#allocation2 + $0x250] sm:$0xe0] %v1232
  %1261 = vst [vmem:[#allocation2 + $0x258] sm:$0xe0] %v1233
  %1262 = vst [vmem:[#allocation2 + $0x260] sm:$0xe0] %v1234
  %1263 = vst [vmem:[#allocation2 + $0x268] sm:$0xe0] %v1235
  %1264 = vst [vmem:[#allocation2 + $0x270] sm:$0xe0] %v1236
  %1265 = vst [vmem:[#allocation2 + $0x278] sm:$0xe0] %v1237
  %1266 = vst [vmem:[#allocation2 + $0x280] sm:$0xe0] %v1238
  %1267 = vst [vmem:[#allocation2 + $0x288] sm:$0xe0] %v1239
  %1268 = vst [vmem:[#allocation2 + $0x290] sm:$0xe0] %v1240
  %1269 = vst.msk [vmem:[#allocation2 + $0x298] sm:$0xe0] %vm712, %v1241
  %1270 = vrot.lane.b32.xlu0 %v54, 62
  %v1271 = vpop.permute.xlu0 %1270
  %1272 = vrot.lane.b32.xlu0 %v40, 62
  %v1273 = vpop.permute.xlu0 %1272
  %1274 = vrot.lane.b32.xlu0 %v55, 62
  %v1275 = vpop.permute.xlu0 %1274
  %1276 = vrot.lane.b32.xlu0 %v41, 62
  %v1277 = vpop.permute.xlu0 %1276
  %1278 = vrot.lane.b32.xlu0 %v56, 62
  %v1279 = vpop.permute.xlu0 %1278
  %1280 = vrot.lane.b32.xlu0 %v42, 62
  %v1281 = vpop.permute.xlu0 %1280
  %1282 = vrot.lane.b32.xlu0 %v57, 62
  %v1283 = vpop.permute.xlu0 %1282
  %1284 = vrot.lane.b32.xlu0 %v43, 62
  %v1285 = vpop.permute.xlu0 %1284
  %1286 = vrot.lane.b32.xlu0 %v58, 62
  %v1287 = vpop.permute.xlu0 %1286
  %1288 = vrot.lane.b32.xlu0 %v44, 62
  %v1289 = vpop.permute.xlu0 %1288
  %1290 = vrot.lane.b32.xlu0 %v59, 62
  %v1291 = vpop.permute.xlu0 %1290
  %1292 = vrot.lane.b32.xlu0 %v45, 62
  %v1293 = vpop.permute.xlu0 %1292
  %1294 = vrot.lane.b32.xlu0 %v60, 62
  %v1295 = vpop.permute.xlu0 %1294
  %1296 = vrot.lane.b32.xlu0 %v46, 62
  %v1297 = vpop.permute.xlu0 %1296
  %1298 = vrot.lane.b32.xlu0 %v1196, 62
  %v1299 = vpop.permute.xlu0 %1298
  %v1300 = vsel %vm581, %v1271, %v1273
  %v1301 = vsel %vm581, %v1273, %v1275
  %v1302 = vsel %vm581, %v1275, %v1277
  %v1303 = vsel %vm581, %v1277, %v1279
  %v1304 = vsel %vm581, %v1279, %v1281
  %v1305 = vsel %vm581, %v1281, %v1283
  %v1306 = vsel %vm581, %v1283, %v1285
  %v1307 = vsel %vm581, %v1285, %v1287
  %v1308 = vsel %vm581, %v1287, %v1289
  %v1309 = vsel %vm581, %v1289, %v1291
  %v1310 = vsel %vm581, %v1291, %v1293
  %v1311 = vsel %vm581, %v1293, %v1295
  %v1312 = vsel %vm581, %v1295, %v1297
  %v1313 = vsel %vm581, %v1297, %v1299
  %1328 = vst [vmem:[#allocation2 + $0x2a0] sm:$0x7] %v1300
  %1329 = vst [vmem:[#allocation2 + $0x2a8] sm:$0x7] %v1301
  %1330 = vst [vmem:[#allocation2 + $0x2b0] sm:$0x7] %v1302
  %1331 = vst [vmem:[#allocation2 + $0x2b8] sm:$0x7] %v1303
  %1332 = vst [vmem:[#allocation2 + $0x2c0] sm:$0x7] %v1304
  %1333 = vst [vmem:[#allocation2 + $0x2c8] sm:$0x7] %v1305
  %1334 = vst [vmem:[#allocation2 + $0x2d0] sm:$0x7] %v1306
  %1335 = vst [vmem:[#allocation2 + $0x2d8] sm:$0x7] %v1307
  %1336 = vst [vmem:[#allocation2 + $0x2e0] sm:$0x7] %v1308
  %1337 = vst [vmem:[#allocation2 + $0x2e8] sm:$0x7] %v1309
  %1338 = vst [vmem:[#allocation2 + $0x2f0] sm:$0x7] %v1310
  %1339 = vst [vmem:[#allocation2 + $0x2f8] sm:$0x7] %v1311
  %1340 = vst [vmem:[#allocation2 + $0x300] sm:$0x7] %v1312
  %1341 = vst.msk [vmem:[#allocation2 + $0x308] sm:$0x7] %vm81, %v1313
  %v1342 = vrot.slane %v1196, 5
  %1343 = vrot.lane.b32.xlu0 %v84, 60
  %v1344 = vpop.permute.xlu0 %1343
  %1345 = vrot.lane.b32.xlu0 %v85, 60
  %v1346 = vpop.permute.xlu0 %1345
  %1347 = vrot.lane.b32.xlu0 %v86, 60
  %v1348 = vpop.permute.xlu0 %1347
  %1349 = vrot.lane.b32.xlu0 %v87, 60
  %v1350 = vpop.permute.xlu0 %1349
  %1351 = vrot.lane.b32.xlu0 %v88, 60
  %v1352 = vpop.permute.xlu0 %1351
  %1353 = vrot.lane.b32.xlu0 %v89, 60
  %v1354 = vpop.permute.xlu0 %1353
  %1355 = vrot.lane.b32.xlu0 %v90, 60
  %v1356 = vpop.permute.xlu0 %1355
  %1357 = vrot.lane.b32.xlu0 %v91, 60
  %v1358 = vpop.permute.xlu0 %1357
  %1359 = vrot.lane.b32.xlu0 %v92, 60
  %v1360 = vpop.permute.xlu0 %1359
  %1361 = vrot.lane.b32.xlu0 %v93, 60
  %v1362 = vpop.permute.xlu0 %1361
  %1363 = vrot.lane.b32.xlu0 %v94, 60
  %v1364 = vpop.permute.xlu0 %1363
  %1365 = vrot.lane.b32.xlu0 %v95, 60
  %v1366 = vpop.permute.xlu0 %1365
  %1367 = vrot.lane.b32.xlu0 %v96, 60
  %v1368 = vpop.permute.xlu0 %1367
  %1369 = vrot.lane.b32.xlu0 %v787, 60
  %v1370 = vpop.permute.xlu0 %1369
  %1371 = vrot.lane.b32.xlu0 %v1342, 60
  %v1372 = vpop.permute.xlu0 %1371
  %v1373 = vsel %vm670, %v1344, %v1346
  %v1374 = vsel %vm670, %v1346, %v1348
  %v1375 = vsel %vm670, %v1348, %v1350
  %v1376 = vsel %vm670, %v1350, %v1352
  %v1377 = vsel %vm670, %v1352, %v1354
  %v1378 = vsel %vm670, %v1354, %v1356
  %v1379 = vsel %vm670, %v1356, %v1358
  %v1380 = vsel %vm670, %v1358, %v1360
  %v1381 = vsel %vm670, %v1360, %v1362
  %v1382 = vsel %vm670, %v1362, %v1364
  %v1383 = vsel %vm670, %v1364, %v1366
  %v1384 = vsel %vm670, %v1366, %v1368
  %v1385 = vsel %vm670, %v1368, %v1370
  %v1386 = vsel %vm670, %v1370, %v1372
  %1401 = vst [vmem:[#allocation2 + $0x2a0] sm:$0x38] %v1373
  %1402 = vst [vmem:[#allocation2 + $0x2a8] sm:$0x38] %v1374
  %1403 = vst [vmem:[#allocation2 + $0x2b0] sm:$0x38] %v1375
  %1404 = vst [vmem:[#allocation2 + $0x2b8] sm:$0x38] %v1376
  %1405 = vst [vmem:[#allocation2 + $0x2c0] sm:$0x38] %v1377
  %1406 = vst [vmem:[#allocation2 + $0x2c8] sm:$0x38] %v1378
  %1407 = vst [vmem:[#allocation2 + $0x2d0] sm:$0x38] %v1379
  %1408 = vst [vmem:[#allocation2 + $0x2d8] sm:$0x38] %v1380
  %1409 = vst [vmem:[#allocation2 + $0x2e0] sm:$0x38] %v1381
  %1410 = vst [vmem:[#allocation2 + $0x2e8] sm:$0x38] %v1382
  %1411 = vst [vmem:[#allocation2 + $0x2f0] sm:$0x38] %v1383
  %1412 = vst [vmem:[#allocation2 + $0x2f8] sm:$0x38] %v1384
  %1413 = vst [vmem:[#allocation2 + $0x300] sm:$0x38] %v1385
  %1414 = vst.msk [vmem:[#allocation2 + $0x308] sm:$0x38] %vm166, %v1386
  %v1415 = vrot.slane %v1196, 2
  %1416 = vrot.lane.b32.xlu0 %v169, 58
  %v1417 = vpop.permute.xlu0 %1416
  %1418 = vrot.lane.b32.xlu0 %v170, 58
  %v1419 = vpop.permute.xlu0 %1418
  %1420 = vrot.lane.b32.xlu0 %v171, 58
  %v1421 = vpop.permute.xlu0 %1420
  %1422 = vrot.lane.b32.xlu0 %v172, 58
  %v1423 = vpop.permute.xlu0 %1422
  %1424 = vrot.lane.b32.xlu0 %v173, 58
  %v1425 = vpop.permute.xlu0 %1424
  %1426 = vrot.lane.b32.xlu0 %v174, 58
  %v1427 = vpop.permute.xlu0 %1426
  %1428 = vrot.lane.b32.xlu0 %v175, 58
  %v1429 = vpop.permute.xlu0 %1428
  %1430 = vrot.lane.b32.xlu0 %v176, 58
  %v1431 = vpop.permute.xlu0 %1430
  %1432 = vrot.lane.b32.xlu0 %v177, 58
  %v1433 = vpop.permute.xlu0 %1432
  %1434 = vrot.lane.b32.xlu0 %v178, 58
  %v1435 = vpop.permute.xlu0 %1434
  %1436 = vrot.lane.b32.xlu0 %v179, 58
  %v1437 = vpop.permute.xlu0 %1436
  %1438 = vrot.lane.b32.xlu0 %v180, 58
  %v1439 = vpop.permute.xlu0 %1438
  %1440 = vrot.lane.b32.xlu0 %v181, 58
  %v1441 = vpop.permute.xlu0 %1440
  %1442 = vrot.lane.b32.xlu0 %v861, 58
  %v1443 = vpop.permute.xlu0 %1442
  %1444 = vrot.lane.b32.xlu0 %v1415, 58
  %v1445 = vpop.permute.xlu0 %1444
  %v1446 = vsel %vm744, %v1417, %v1419
  %v1447 = vsel %vm744, %v1419, %v1421
  %v1448 = vsel %vm744, %v1421, %v1423
  %v1449 = vsel %vm744, %v1423, %v1425
  %v1450 = vsel %vm744, %v1425, %v1427
  %v1451 = vsel %vm744, %v1427, %v1429
  %v1452 = vsel %vm744, %v1429, %v1431
  %v1453 = vsel %vm744, %v1431, %v1433
  %v1454 = vsel %vm744, %v1433, %v1435
  %v1455 = vsel %vm744, %v1435, %v1437
  %v1456 = vsel %vm744, %v1437, %v1439
  %v1457 = vsel %vm744, %v1439, %v1441
  %v1458 = vsel %vm744, %v1441, %v1443
  %v1459 = vsel %vm744, %v1443, %v1445
  %1474 = vst [vmem:[#allocation2 + $0x2a0] sm:$0xc0] %v1446
  %1475 = vst [vmem:[#allocation2 + $0x2a8] sm:$0xc0] %v1447
  %1476 = vst [vmem:[#allocation2 + $0x2b0] sm:$0xc0] %v1448
  %1477 = vst [vmem:[#allocation2 + $0x2b8] sm:$0xc0] %v1449
  %1478 = vst [vmem:[#allocation2 + $0x2c0] sm:$0xc0] %v1450
  %1479 = vst [vmem:[#allocation2 + $0x2c8] sm:$0xc0] %v1451
  %1480 = vst [vmem:[#allocation2 + $0x2d0] sm:$0xc0] %v1452
  %1481 = vst [vmem:[#allocation2 + $0x2d8] sm:$0xc0] %v1453
  %1482 = vst [vmem:[#allocation2 + $0x2e0] sm:$0xc0] %v1454
  %1483 = vst [vmem:[#allocation2 + $0x2e8] sm:$0xc0] %v1455
  %1484 = vst [vmem:[#allocation2 + $0x2f0] sm:$0xc0] %v1456
  %1485 = vst [vmem:[#allocation2 + $0x2f8] sm:$0xc0] %v1457
  %1486 = vst [vmem:[#allocation2 + $0x300] sm:$0xc0] %v1458
  %1487 = vst.msk [vmem:[#allocation2 + $0x308] sm:$0xc0] %vm251, %v1459
  %1488 = vst [vmem:[#allocation2 + $0x310] sm:$0x1] %v1446
  %1489 = vst [vmem:[#allocation2 + $0x318] sm:$0x1] %v1447
  %1490 = vst [vmem:[#allocation2 + $0x320] sm:$0x1] %v1448
  %1491 = vst [vmem:[#allocation2 + $0x328] sm:$0x1] %v1449
  %1492 = vst [vmem:[#allocation2 + $0x330] sm:$0x1] %v1450
  %1493 = vst [vmem:[#allocation2 + $0x338] sm:$0x1] %v1451
  %1494 = vst [vmem:[#allocation2 + $0x340] sm:$0x1] %v1452
  %1495 = vst [vmem:[#allocation2 + $0x348] sm:$0x1] %v1453
  %1496 = vst [vmem:[#allocation2 + $0x350] sm:$0x1] %v1454
  %1497 = vst [vmem:[#allocation2 + $0x358] sm:$0x1] %v1455
  %1498 = vst [vmem:[#allocation2 + $0x360] sm:$0x1] %v1456
  %1499 = vst [vmem:[#allocation2 + $0x368] sm:$0x1] %v1457
  %1500 = vst [vmem:[#allocation2 + $0x370] sm:$0x1] %v1458
  %1501 = vst.msk [vmem:[#allocation2 + $0x378] sm:$0x1] %vm266, %v1459
  %v1502 = vrot.slane %v1196, 7
  %1503 = vrot.lane.b32.xlu0 %v269, 56
  %v1504 = vpop.permute.xlu0 %1503
  %1505 = vrot.lane.b32.xlu0 %v270, 56
  %v1506 = vpop.permute.xlu0 %1505
  %1507 = vrot.lane.b32.xlu0 %v271, 56
  %v1508 = vpop.permute.xlu0 %1507
  %1509 = vrot.lane.b32.xlu0 %v272, 56
  %v1510 = vpop.permute.xlu0 %1509
  %1511 = vrot.lane.b32.xlu0 %v273, 56
  %v1512 = vpop.permute.xlu0 %1511
  %1513 = vrot.lane.b32.xlu0 %v274, 56
  %v1514 = vpop.permute.xlu0 %1513
  %1515 = vrot.lane.b32.xlu0 %v275, 56
  %v1516 = vpop.permute.xlu0 %1515
  %1517 = vrot.lane.b32.xlu0 %v276, 56
  %v1518 = vpop.permute.xlu0 %1517
  %1519 = vrot.lane.b32.xlu0 %v277, 56
  %v1520 = vpop.permute.xlu0 %1519
  %1521 = vrot.lane.b32.xlu0 %v278, 56
  %v1522 = vpop.permute.xlu0 %1521
  %1523 = vrot.lane.b32.xlu0 %v279, 56
  %v1524 = vpop.permute.xlu0 %1523
  %1525 = vrot.lane.b32.xlu0 %v280, 56
  %v1526 = vpop.permute.xlu0 %1525
  %1527 = vrot.lane.b32.xlu0 %v281, 56
  %v1528 = vpop.permute.xlu0 %1527
  %1529 = vrot.lane.b32.xlu0 %v904, 56
  %v1530 = vpop.permute.xlu0 %1529
  %1531 = vrot.lane.b32.xlu0 %v1502, 56
  %v1532 = vpop.permute.xlu0 %1531
  %v1533 = vsel %vm818, %v1504, %v1506
  %v1534 = vsel %vm818, %v1506, %v1508
  %v1535 = vsel %vm818, %v1508, %v1510
  %v1536 = vsel %vm818, %v1510, %v1512
  %v1537 = vsel %vm818, %v1512, %v1514
  %v1538 = vsel %vm818, %v1514, %v1516
  %v1539 = vsel %vm818, %v1516, %v1518
  %v1540 = vsel %vm818, %v1518, %v1520
  %v1541 = vsel %vm818, %v1520, %v1522
  %v1542 = vsel %vm818, %v1522, %v1524
  %v1543 = vsel %vm818, %v1524, %v1526
  %v1544 = vsel %vm818, %v1526, %v1528
  %v1545 = vsel %vm818, %v1528, %v1530
  %v1546 = vsel %vm818, %v1530, %v1532
  %1561 = vst [vmem:[#allocation2 + $0x310] sm:$0xe] %v1533
  %1562 = vst [vmem:[#allocation2 + $0x318] sm:$0xe] %v1534
  %1563 = vst [vmem:[#allocation2 + $0x320] sm:$0xe] %v1535
  %1564 = vst [vmem:[#allocation2 + $0x328] sm:$0xe] %v1536
  %1565 = vst [vmem:[#allocation2 + $0x330] sm:$0xe] %v1537
  %1566 = vst [vmem:[#allocation2 + $0x338] sm:$0xe] %v1538
  %1567 = vst [vmem:[#allocation2 + $0x340] sm:$0xe] %v1539
  %1568 = vst [vmem:[#allocation2 + $0x348] sm:$0xe] %v1540
  %1569 = vst [vmem:[#allocation2 + $0x350] sm:$0xe] %v1541
  %1570 = vst [vmem:[#allocation2 + $0x358] sm:$0xe] %v1542
  %1571 = vst [vmem:[#allocation2 + $0x360] sm:$0xe] %v1543
  %1572 = vst [vmem:[#allocation2 + $0x368] sm:$0xe] %v1544
  %1573 = vst [vmem:[#allocation2 + $0x370] sm:$0xe] %v1545
  %1574 = vst.msk [vmem:[#allocation2 + $0x378] sm:$0xe] %vm351, %v1546
  %1582 = vst [vmem:[#allocation2 + $0x310] sm:$0x70] %v354
  %1583 = vst [vmem:[#allocation2 + $0x318] sm:$0x70] %v40
  %1584 = vst [vmem:[#allocation2 + $0x320] sm:$0x70] %v355
  %1585 = vst [vmem:[#allocation2 + $0x328] sm:$0x70] %v41
  %1586 = vst [vmem:[#allocation2 + $0x330] sm:$0x70] %v356
  %1587 = vst [vmem:[#allocation2 + $0x338] sm:$0x70] %v42
  %1588 = vst [vmem:[#allocation2 + $0x340] sm:$0x70] %v357
  %1589 = vst [vmem:[#allocation2 + $0x348] sm:$0x70] %v43
  %1590 = vst [vmem:[#allocation2 + $0x350] sm:$0x70] %v358
  %1591 = vst [vmem:[#allocation2 + $0x358] sm:$0x70] %v44
  %1592 = vst [vmem:[#allocation2 + $0x360] sm:$0x70] %v359
  %1593 = vst [vmem:[#allocation2 + $0x368] sm:$0x70] %v45
  %1594 = vst [vmem:[#allocation2 + $0x370] sm:$0x70] %v974
  %1595 = vst.msk [vmem:[#allocation2 + $0x378] sm:$0x70] %vm429, %v46
  %v1596 = vrot.slane %v1196, 1
  %1597 = vrot.lane.b32.xlu0 %v434, 126
  %v1598 = vpop.permute.xlu0 %1597
  %1599 = vrot.lane.b32.xlu0 %v435, 126
  %v1600 = vpop.permute.xlu0 %1599
  %1601 = vrot.lane.b32.xlu0 %v436, 126
  %v1602 = vpop.permute.xlu0 %1601
  %1603 = vrot.lane.b32.xlu0 %v437, 126
  %v1604 = vpop.permute.xlu0 %1603
  %1605 = vrot.lane.b32.xlu0 %v438, 126
  %v1606 = vpop.permute.xlu0 %1605
  %1607 = vrot.lane.b32.xlu0 %v439, 126
  %v1608 = vpop.permute.xlu0 %1607
  %1609 = vrot.lane.b32.xlu0 %v440, 126
  %v1610 = vpop.permute.xlu0 %1609
  %1611 = vrot.lane.b32.xlu0 %v441, 126
  %v1612 = vpop.permute.xlu0 %1611
  %1613 = vrot.lane.b32.xlu0 %v442, 126
  %v1614 = vpop.permute.xlu0 %1613
  %1615 = vrot.lane.b32.xlu0 %v443, 126
  %v1616 = vpop.permute.xlu0 %1615
  %1617 = vrot.lane.b32.xlu0 %v444, 126
  %v1618 = vpop.permute.xlu0 %1617
  %1619 = vrot.lane.b32.xlu0 %v445, 126
  %v1620 = vpop.permute.xlu0 %1619
  %1621 = vrot.lane.b32.xlu0 %v446, 126
  %v1622 = vpop.permute.xlu0 %1621
  %1623 = vrot.lane.b32.xlu0 %v1596, 126
  %v1624 = vpop.permute.xlu0 %1623
  %v1625 = vsel %vm125, %v1598, %v1600
  %v1626 = vsel %vm125, %v1600, %v1602
  %v1627 = vsel %vm125, %v1602, %v1604
  %v1628 = vsel %vm125, %v1604, %v1606
  %v1629 = vsel %vm125, %v1606, %v1608
  %v1630 = vsel %vm125, %v1608, %v1610
  %v1631 = vsel %vm125, %v1610, %v1612
  %v1632 = vsel %vm125, %v1612, %v1614
  %v1633 = vsel %vm125, %v1614, %v1616
  %v1634 = vsel %vm125, %v1616, %v1618
  %v1635 = vsel %vm125, %v1618, %v1620
  %v1636 = vsel %vm125, %v1620, %v1622
  %v1637 = vsel %vm125, %v1622, %v1624
  %1652 = vst [vmem:[#allocation2 + $0x310] sm:$0x80] %v1625
  %1653 = vst [vmem:[#allocation2 + $0x318] sm:$0x80] %v1626
  %1654 = vst [vmem:[#allocation2 + $0x320] sm:$0x80] %v1627
  %1655 = vst [vmem:[#allocation2 + $0x328] sm:$0x80] %v1628
  %1656 = vst [vmem:[#allocation2 + $0x330] sm:$0x80] %v1629
  %1657 = vst [vmem:[#allocation2 + $0x338] sm:$0x80] %v1630
  %1658 = vst [vmem:[#allocation2 + $0x340] sm:$0x80] %v1631
  %1659 = vst [vmem:[#allocation2 + $0x348] sm:$0x80] %v1632
  %1660 = vst [vmem:[#allocation2 + $0x350] sm:$0x80] %v1633
  %1661 = vst [vmem:[#allocation2 + $0x358] sm:$0x80] %v1634
  %1662 = vst [vmem:[#allocation2 + $0x360] sm:$0x80] %v1635
  %1663 = vst [vmem:[#allocation2 + $0x368] sm:$0x80] %v1636
  %1664 = vst [vmem:[#allocation2 + $0x370] sm:$0x80] %v1637
  %1665 = vst.msk [vmem:[#allocation2 + $0x378] sm:$0x80] %vm519, %v1624
  %1666 = vst [vmem:[#allocation2 + $0x380] sm:$0x3] %v1625
  %1667 = vst [vmem:[#allocation2 + $0x388] sm:$0x3] %v1626
  %1668 = vst [vmem:[#allocation2 + $0x390] sm:$0x3] %v1627
  %1669 = vst [vmem:[#allocation2 + $0x398] sm:$0x3] %v1628
  %1670 = vst [vmem:[#allocation2 + $0x3a0] sm:$0x3] %v1629
  %1671 = vst [vmem:[#allocation2 + $0x3a8] sm:$0x3] %v1630
  %1672 = vst [vmem:[#allocation2 + $0x3b0] sm:$0x3] %v1631
  %1673 = vst [vmem:[#allocation2 + $0x3b8] sm:$0x3] %v1632
  %1674 = vst [vmem:[#allocation2 + $0x3c0] sm:$0x3] %v1633
  %1675 = vst [vmem:[#allocation2 + $0x3c8] sm:$0x3] %v1634
  %1676 = vst [vmem:[#allocation2 + $0x3d0] sm:$0x3] %v1635
  %1677 = vst [vmem:[#allocation2 + $0x3d8] sm:$0x3] %v1636
  %1678 = vst [vmem:[#allocation2 + $0x3e0] sm:$0x3] %v1637
  %1679 = vst.msk [vmem:[#allocation2 + $0x3e8] sm:$0x3] %vm534, %v1624
  %v1680 = vrot.slane %v1196, 6
  %1681 = vrot.lane.b32.xlu0 %v538, 124
  %v1682 = vpop.permute.xlu0 %1681
  %1683 = vrot.lane.b32.xlu0 %v539, 124
  %v1684 = vpop.permute.xlu0 %1683
  %1685 = vrot.lane.b32.xlu0 %v540, 124
  %v1686 = vpop.permute.xlu0 %1685
  %1687 = vrot.lane.b32.xlu0 %v541, 124
  %v1688 = vpop.permute.xlu0 %1687
  %1689 = vrot.lane.b32.xlu0 %v542, 124
  %v1690 = vpop.permute.xlu0 %1689
  %1691 = vrot.lane.b32.xlu0 %v543, 124
  %v1692 = vpop.permute.xlu0 %1691
  %1693 = vrot.lane.b32.xlu0 %v544, 124
  %v1694 = vpop.permute.xlu0 %1693
  %1695 = vrot.lane.b32.xlu0 %v545, 124
  %v1696 = vpop.permute.xlu0 %1695
  %1697 = vrot.lane.b32.xlu0 %v546, 124
  %v1698 = vpop.permute.xlu0 %1697
  %1699 = vrot.lane.b32.xlu0 %v547, 124
  %v1700 = vpop.permute.xlu0 %1699
  %1701 = vrot.lane.b32.xlu0 %v548, 124
  %v1702 = vpop.permute.xlu0 %1701
  %1703 = vrot.lane.b32.xlu0 %v549, 124
  %v1704 = vpop.permute.xlu0 %1703
  %1705 = vrot.lane.b32.xlu0 %v550, 124
  %v1706 = vpop.permute.xlu0 %1705
  %1707 = vrot.lane.b32.xlu0 %v1680, 124
  %v1708 = vpop.permute.xlu0 %1707
  %v1709 = vsel %vm210, %v1682, %v1684
  %v1710 = vsel %vm210, %v1684, %v1686
  %v1711 = vsel %vm210, %v1686, %v1688
  %v1712 = vsel %vm210, %v1688, %v1690
  %v1713 = vsel %vm210, %v1690, %v1692
  %v1714 = vsel %vm210, %v1692, %v1694
  %v1715 = vsel %vm210, %v1694, %v1696
  %v1716 = vsel %vm210, %v1696, %v1698
  %v1717 = vsel %vm210, %v1698, %v1700
  %v1718 = vsel %vm210, %v1700, %v1702
  %v1719 = vsel %vm210, %v1702, %v1704
  %v1720 = vsel %vm210, %v1704, %v1706
  %v1721 = vsel %vm210, %v1706, %v1708
  %1736 = vst [vmem:[#allocation2 + $0x380] sm:$0x1c] %v1709
  %1737 = vst [vmem:[#allocation2 + $0x388] sm:$0x1c] %v1710
  %1738 = vst [vmem:[#allocation2 + $0x390] sm:$0x1c] %v1711
  %1739 = vst [vmem:[#allocation2 + $0x398] sm:$0x1c] %v1712
  %1740 = vst [vmem:[#allocation2 + $0x3a0] sm:$0x1c] %v1713
  %1741 = vst [vmem:[#allocation2 + $0x3a8] sm:$0x1c] %v1714
  %1742 = vst [vmem:[#allocation2 + $0x3b0] sm:$0x1c] %v1715
  %1743 = vst [vmem:[#allocation2 + $0x3b8] sm:$0x1c] %v1716
  %1744 = vst [vmem:[#allocation2 + $0x3c0] sm:$0x1c] %v1717
  %1745 = vst [vmem:[#allocation2 + $0x3c8] sm:$0x1c] %v1718
  %1746 = vst [vmem:[#allocation2 + $0x3d0] sm:$0x1c] %v1719
  %1747 = vst [vmem:[#allocation2 + $0x3d8] sm:$0x1c] %v1720
  %1748 = vst [vmem:[#allocation2 + $0x3e0] sm:$0x1c] %v1721
  %1749 = vst.msk [vmem:[#allocation2 + $0x3e8] sm:$0x1c] %vm623, %v1708
  %1750 = vrot.lane.b32.xlu0 %v627, 122
  %v1751 = vpop.permute.xlu0 %1750
  %1752 = vrot.lane.b32.xlu0 %v628, 122
  %v1753 = vpop.permute.xlu0 %1752
  %1754 = vrot.lane.b32.xlu0 %v629, 122
  %v1755 = vpop.permute.xlu0 %1754
  %1756 = vrot.lane.b32.xlu0 %v630, 122
  %v1757 = vpop.permute.xlu0 %1756
  %1758 = vrot.lane.b32.xlu0 %v631, 122
  %v1759 = vpop.permute.xlu0 %1758
  %1760 = vrot.lane.b32.xlu0 %v632, 122
  %v1761 = vpop.permute.xlu0 %1760
  %1762 = vrot.lane.b32.xlu0 %v633, 122
  %v1763 = vpop.permute.xlu0 %1762
  %1764 = vrot.lane.b32.xlu0 %v634, 122
  %v1765 = vpop.permute.xlu0 %1764
  %1766 = vrot.lane.b32.xlu0 %v635, 122
  %v1767 = vpop.permute.xlu0 %1766
  %1768 = vrot.lane.b32.xlu0 %v636, 122
  %v1769 = vpop.permute.xlu0 %1768
  %1770 = vrot.lane.b32.xlu0 %v637, 122
  %v1771 = vpop.permute.xlu0 %1770
  %1772 = vrot.lane.b32.xlu0 %v638, 122
  %v1773 = vpop.permute.xlu0 %1772
  %1774 = vrot.lane.b32.xlu0 %v639, 122
  %v1775 = vpop.permute.xlu0 %1774
  %1776 = vrot.lane.b32.xlu0 %v1197, 122
  %v1777 = vpop.permute.xlu0 %1776
  %v1778 = vsel %vm310, %v1751, %v1753
  %v1779 = vsel %vm310, %v1753, %v1755
  %v1780 = vsel %vm310, %v1755, %v1757
  %v1781 = vsel %vm310, %v1757, %v1759
  %v1782 = vsel %vm310, %v1759, %v1761
  %v1783 = vsel %vm310, %v1761, %v1763
  %v1784 = vsel %vm310, %v1763, %v1765
  %v1785 = vsel %vm310, %v1765, %v1767
  %v1786 = vsel %vm310, %v1767, %v1769
  %v1787 = vsel %vm310, %v1769, %v1771
  %v1788 = vsel %vm310, %v1771, %v1773
  %v1789 = vsel %vm310, %v1773, %v1775
  %v1790 = vsel %vm310, %v1775, %v1777
  %1805 = vst [vmem:[#allocation2 + $0x380] sm:$0xe0] %v1778
  %1806 = vst [vmem:[#allocation2 + $0x388] sm:$0xe0] %v1779
  %1807 = vst [vmem:[#allocation2 + $0x390] sm:$0xe0] %v1780
  %1808 = vst [vmem:[#allocation2 + $0x398] sm:$0xe0] %v1781
  %1809 = vst [vmem:[#allocation2 + $0x3a0] sm:$0xe0] %v1782
  %1810 = vst [vmem:[#allocation2 + $0x3a8] sm:$0xe0] %v1783
  %1811 = vst [vmem:[#allocation2 + $0x3b0] sm:$0xe0] %v1784
  %1812 = vst [vmem:[#allocation2 + $0x3b8] sm:$0xe0] %v1785
  %1813 = vst [vmem:[#allocation2 + $0x3c0] sm:$0xe0] %v1786
  %1814 = vst [vmem:[#allocation2 + $0x3c8] sm:$0xe0] %v1787
  %1815 = vst [vmem:[#allocation2 + $0x3d0] sm:$0xe0] %v1788
  %1816 = vst [vmem:[#allocation2 + $0x3d8] sm:$0xe0] %v1789
  %1817 = vst [vmem:[#allocation2 + $0x3e0] sm:$0xe0] %v1790
  %1818 = vst.msk [vmem:[#allocation2 + $0x3e8] sm:$0xe0] %vm712, %v1777
  %1819 = vrot.lane.b32.xlu0 %v55, 120
  %v1820 = vpop.permute.xlu0 %1819
  %1821 = vrot.lane.b32.xlu0 %v56, 120
  %v1822 = vpop.permute.xlu0 %1821
  %1823 = vrot.lane.b32.xlu0 %v57, 120
  %v1824 = vpop.permute.xlu0 %1823
  %1825 = vrot.lane.b32.xlu0 %v58, 120
  %v1826 = vpop.permute.xlu0 %1825
  %1827 = vrot.lane.b32.xlu0 %v59, 120
  %v1828 = vpop.permute.xlu0 %1827
  %1829 = vrot.lane.b32.xlu0 %v60, 120
  %v1830 = vpop.permute.xlu0 %1829
  %1831 = vrot.lane.b32.xlu0 %v46, 120
  %v1832 = vpop.permute.xlu0 %1831
  %1833 = vrot.lane.b32.xlu0 %v1196, 120
  %v1834 = vpop.permute.xlu0 %1833
  %v1835 = vsel %vm388, %v367, %v1820
  %v1836 = vsel %vm388, %v1820, %v371
  %v1837 = vsel %vm388, %v371, %v1822
  %v1838 = vsel %vm388, %v1822, %v375
  %v1839 = vsel %vm388, %v375, %v1824
  %v1840 = vsel %vm388, %v1824, %v379
  %v1841 = vsel %vm388, %v379, %v1826
  %v1842 = vsel %vm388, %v1826, %v383
  %v1843 = vsel %vm388, %v383, %v1828
  %v1844 = vsel %vm388, %v1828, %v387
  %v1845 = vsel %vm388, %v387, %v1830
  %v1846 = vsel %vm388, %v1830, %v1832
  %v1847 = vsel %vm388, %v1832, %v1834
  %1862 = vst [vmem:[#allocation2 + $0x3f0] sm:$0x7] %v1835
  %1863 = vst [vmem:[#allocation2 + $0x3f8] sm:$0x7] %v1836
  %1864 = vst [vmem:[#allocation2 + $0x400] sm:$0x7] %v1837
  %1865 = vst [vmem:[#allocation2 + $0x408] sm:$0x7] %v1838
  %1866 = vst [vmem:[#allocation2 + $0x410] sm:$0x7] %v1839
  %1867 = vst [vmem:[#allocation2 + $0x418] sm:$0x7] %v1840
  %1868 = vst [vmem:[#allocation2 + $0x420] sm:$0x7] %v1841
  %1869 = vst [vmem:[#allocation2 + $0x428] sm:$0x7] %v1842
  %1870 = vst [vmem:[#allocation2 + $0x430] sm:$0x7] %v1843
  %1871 = vst [vmem:[#allocation2 + $0x438] sm:$0x7] %v1844
  %1872 = vst [vmem:[#allocation2 + $0x440] sm:$0x7] %v1845
  %1873 = vst [vmem:[#allocation2 + $0x448] sm:$0x7] %v1846
  %1874 = vst [vmem:[#allocation2 + $0x450] sm:$0x7] %v1847
  %1875 = vst.msk [vmem:[#allocation2 + $0x458] sm:$0x7] %vm81, %v1834
  %v1876 = vld [vmem:[#allocation2] sm:$0xff]
  %v1877 = vld [vmem:[#allocation2 + $0x8] sm:$0xff]
  %v1878 = vld [vmem:[#allocation2 + $0x10] sm:$0xff]
  %v1879 = vld [vmem:[#allocation2 + $0x18] sm:$0xff]
  %v1880 = vld [vmem:[#allocation2 + $0x20] sm:$0xff]
  %v1881 = vld [vmem:[#allocation2 + $0x28] sm:$0xff]
  %v1882 = vld [vmem:[#allocation2 + $0x30] sm:$0xff]
  %v1883 = vld [vmem:[#allocation2 + $0x38] sm:$0xff]
  %v1884 = vld [vmem:[#allocation2 + $0x40] sm:$0xff]
  %v1885 = vld [vmem:[#allocation2 + $0x48] sm:$0xff]
  %v1886 = vld [vmem:[#allocation2 + $0x50] sm:$0xff]
  %v1887 = vld [vmem:[#allocation2 + $0x58] sm:$0xff]
  %v1888 = vld [vmem:[#allocation2 + $0x60] sm:$0xff]
  %v1889 = vld [vmem:[#allocation2 + $0x68] sm:$0xff]
  %v1890 = vld [vmem:[#allocation2 + $0x70] sm:$0xff]
  %v1891 = vld [vmem:[#allocation2 + $0x78] sm:$0xff]
  %v1892 = vld [vmem:[#allocation2 + $0x80] sm:$0xff]
  %v1893 = vld [vmem:[#allocation2 + $0x88] sm:$0xff]
  %v1894 = vld [vmem:[#allocation2 + $0x90] sm:$0xff]
  %v1895 = vld [vmem:[#allocation2 + $0x98] sm:$0xff]
  %v1896 = vld [vmem:[#allocation2 + $0xa0] sm:$0xff]
  %v1897 = vld [vmem:[#allocation2 + $0xa8] sm:$0xff]
  %v1898 = vld [vmem:[#allocation2 + $0xb0] sm:$0xff]
  %v1899 = vld [vmem:[#allocation2 + $0xb8] sm:$0xff]
  %v1900 = vld [vmem:[#allocation2 + $0xc0] sm:$0xff]
  %v1901 = vld [vmem:[#allocation2 + $0xc8] sm:$0xff]
  %v1902 = vld [vmem:[#allocation2 + $0xd0] sm:$0xff]
  %v1903 = vld [vmem:[#allocation2 + $0xd8] sm:$0xff]
  %v1904 = vld [vmem:[#allocation2 + $0xe0] sm:$0xff]
  %v1905 = vld [vmem:[#allocation2 + $0xe8] sm:$0xff]
  %v1906 = vld [vmem:[#allocation2 + $0xf0] sm:$0xff]
  %v1907 = vld [vmem:[#allocation2 + $0xf8] sm:$0xff]
  %v1908 = vld [vmem:[#allocation2 + $0x100] sm:$0xff]
  %v1909 = vld [vmem:[#allocation2 + $0x108] sm:$0xff]
  %v1910 = vld [vmem:[#allocation2 + $0x110] sm:$0xff]
  %v1911 = vld [vmem:[#allocation2 + $0x118] sm:$0xff]
  %v1912 = vld [vmem:[#allocation2 + $0x120] sm:$0xff]
  %v1913 = vld [vmem:[#allocation2 + $0x128] sm:$0xff]
  %v1914 = vld [vmem:[#allocation2 + $0x130] sm:$0xff]
  %v1915 = vld [vmem:[#allocation2 + $0x138] sm:$0xff]
  %v1916 = vld [vmem:[#allocation2 + $0x140] sm:$0xff]
  %v1917 = vld [vmem:[#allocation2 + $0x148] sm:$0xff]
  %v1918 = vld [vmem:[#allocation2 + $0x150] sm:$0xff]
  %v1919 = vld [vmem:[#allocation2 + $0x158] sm:$0xff]
  %v1920 = vld [vmem:[#allocation2 + $0x160] sm:$0xff]
  %v1921 = vld [vmem:[#allocation2 + $0x168] sm:$0xff]
  %v1922 = vld [vmem:[#allocation2 + $0x170] sm:$0xff]
  %v1923 = vld [vmem:[#allocation2 + $0x178] sm:$0xff]
  %v1924 = vld [vmem:[#allocation2 + $0x180] sm:$0xff]
  %v1925 = vld [vmem:[#allocation2 + $0x188] sm:$0xff]
  %v1926 = vld [vmem:[#allocation2 + $0x190] sm:$0xff]
  %v1927 = vld [vmem:[#allocation2 + $0x198] sm:$0xff]
  %v1928 = vld [vmem:[#allocation2 + $0x1a0] sm:$0xff]
  %v1929 = vld [vmem:[#allocation2 + $0x1a8] sm:$0xff]
  %v1930 = vld [vmem:[#allocation2 + $0x1b0] sm:$0xff]
  %v1931 = vld [vmem:[#allocation2 + $0x1b8] sm:$0xff]
  %v1932 = vld [vmem:[#allocation2 + $0x1c0] sm:$0xff]
  %v1933 = vld [vmem:[#allocation2 + $0x1c8] sm:$0xff]
  %v1934 = vld [vmem:[#allocation2 + $0x1d0] sm:$0xff]
  %v1935 = vld [vmem:[#allocation2 + $0x1d8] sm:$0xff]
  %v1936 = vld [vmem:[#allocation2 + $0x1e0] sm:$0xff]
  %v1937 = vld [vmem:[#allocation2 + $0x1e8] sm:$0xff]
  %v1938 = vld [vmem:[#allocation2 + $0x1f0] sm:$0xff]
  %v1939 = vld [vmem:[#allocation2 + $0x1f8] sm:$0xff]
  %v1940 = vld [vmem:[#allocation2 + $0x200] sm:$0xff]
  %v1941 = vld [vmem:[#allocation2 + $0x208] sm:$0xff]
  %v1942 = vld [vmem:[#allocation2 + $0x210] sm:$0xff]
  %v1943 = vld [vmem:[#allocation2 + $0x218] sm:$0xff]
  %v1944 = vld [vmem:[#allocation2 + $0x220] sm:$0xff]
  %v1945 = vld [vmem:[#allocation2 + $0x228] sm:$0xff]
  %v1946 = vld [vmem:[#allocation2 + $0x230] sm:$0xff]
  %v1947 = vld [vmem:[#allocation2 + $0x238] sm:$0xff]
  %v1948 = vld [vmem:[#allocation2 + $0x240] sm:$0xff]
  %v1949 = vld [vmem:[#allocation2 + $0x248] sm:$0xff]
  %v1950 = vld [vmem:[#allocation2 + $0x250] sm:$0xff]
  %v1951 = vld [vmem:[#allocation2 + $0x258] sm:$0xff]
  %v1952 = vld [vmem:[#allocation2 + $0x260] sm:$0xff]
  %v1953 = vld [vmem:[#allocation2 + $0x268] sm:$0xff]
  %v1954 = vld [vmem:[#allocation2 + $0x270] sm:$0xff]
  %v1955 = vld [vmem:[#allocation2 + $0x278] sm:$0xff]
  %v1956 = vld [vmem:[#allocation2 + $0x280] sm:$0xff]
  %v1957 = vld [vmem:[#allocation2 + $0x288] sm:$0xff]
  %v1958 = vld [vmem:[#allocation2 + $0x290] sm:$0xff]
  %v1959 = vld [vmem:[#allocation2 + $0x298] sm:$0xff]
  %v1960 = vld [vmem:[#allocation2 + $0x2a0] sm:$0xff]
  %v1961 = vld [vmem:[#allocation2 + $0x2a8] sm:$0xff]
  %v1962 = vld [vmem:[#allocation2 + $0x2b0] sm:$0xff]
  %v1963 = vld [vmem:[#allocation2 + $0x2b8] sm:$0xff]
  %v1964 = vld [vmem:[#allocation2 + $0x2c0] sm:$0xff]
  %v1965 = vld [vmem:[#allocation2 + $0x2c8] sm:$0xff]
  %v1966 = vld [vmem:[#allocation2 + $0x2d0] sm:$0xff]
  %v1967 = vld [vmem:[#allocation2 + $0x2d8] sm:$0xff]
  %v1968 = vld [vmem:[#allocation2 + $0x2e0] sm:$0xff]
  %v1969 = vld [vmem:[#allocation2 + $0x2e8] sm:$0xff]
  %v1970 = vld [vmem:[#allocation2 + $0x2f0] sm:$0xff]
  %v1971 = vld [vmem:[#allocation2 + $0x2f8] sm:$0xff]
  %v1972 = vld [vmem:[#allocation2 + $0x300] sm:$0xff]
  %v1973 = vld [vmem:[#allocation2 + $0x308] sm:$0xff]
  %v1974 = vld [vmem:[#allocation2 + $0x310] sm:$0xff]
  %v1975 = vld [vmem:[#allocation2 + $0x318] sm:$0xff]
  %v1976 = vld [vmem:[#allocation2 + $0x320] sm:$0xff]
  %v1977 = vld [vmem:[#allocation2 + $0x328] sm:$0xff]
  %v1978 = vld [vmem:[#allocation2 + $0x330] sm:$0xff]
  %v1979 = vld [vmem:[#allocation2 + $0x338] sm:$0xff]
  %v1980 = vld [vmem:[#allocation2 + $0x340] sm:$0xff]
  %v1981 = vld [vmem:[#allocation2 + $0x348] sm:$0xff]
  %v1982 = vld [vmem:[#allocation2 + $0x350] sm:$0xff]
  %v1983 = vld [vmem:[#allocation2 + $0x358] sm:$0xff]
  %v1984 = vld [vmem:[#allocation2 + $0x360] sm:$0xff]
  %v1985 = vld [vmem:[#allocation2 + $0x368] sm:$0xff]
  %v1986 = vld [vmem:[#allocation2 + $0x370] sm:$0xff]
  %v1987 = vld [vmem:[#allocation2 + $0x378] sm:$0xff]
  %v1988 = vld [vmem:[#allocation2 + $0x380] sm:$0xff]
  %v1989 = vld [vmem:[#allocation2 + $0x388] sm:$0xff]
  %v1990 = vld [vmem:[#allocation2 + $0x390] sm:$0xff]
  %v1991 = vld [vmem:[#allocation2 + $0x398] sm:$0xff]
  %v1992 = vld [vmem:[#allocation2 + $0x3a0] sm:$0xff]
  %v1993 = vld [vmem:[#allocation2 + $0x3a8] sm:$0xff]
  %v1994 = vld [vmem:[#allocation2 + $0x3b0] sm:$0xff]
  %v1995 = vld [vmem:[#allocation2 + $0x3b8] sm:$0xff]
  %v1996 = vld [vmem:[#allocation2 + $0x3c0] sm:$0xff]
  %v1997 = vld [vmem:[#allocation2 + $0x3c8] sm:$0xff]
  %v1998 = vld [vmem:[#allocation2 + $0x3d0] sm:$0xff]
  %v1999 = vld [vmem:[#allocation2 + $0x3d8] sm:$0xff]
  %v2000 = vld [vmem:[#allocation2 + $0x3e0] sm:$0xff]
  %v2001 = vld [vmem:[#allocation2 + $0x3e8] sm:$0xff]
  %v2002 = vld [vmem:[#allocation2 + $0x3f0] sm:$0x7]
  %v2003 = vld [vmem:[#allocation2 + $0x3f8] sm:$0x7]
  %v2004 = vld [vmem:[#allocation2 + $0x400] sm:$0x7]
  %v2005 = vld [vmem:[#allocation2 + $0x408] sm:$0x7]
  %v2006 = vld [vmem:[#allocation2 + $0x410] sm:$0x7]
  %v2007 = vld [vmem:[#allocation2 + $0x418] sm:$0x7]
  %v2008 = vld [vmem:[#allocation2 + $0x420] sm:$0x7]
  %v2009 = vld [vmem:[#allocation2 + $0x428] sm:$0x7]
  %v2010 = vld [vmem:[#allocation2 + $0x430] sm:$0x7]
  %v2011 = vld [vmem:[#allocation2 + $0x438] sm:$0x7]
  %v2012 = vld [vmem:[#allocation2 + $0x440] sm:$0x7]
  %v2013 = vld [vmem:[#allocation2 + $0x448] sm:$0x7]
  %v2014 = vld [vmem:[#allocation2 + $0x450] sm:$0x7]
  %v2015 = vld [vmem:[#allocation2 + $0x458] sm:$0x7]
  %v2016 = vpack.c.bf16 %v1890, %v1876
  %v2017 = vpack.c.bf16 %v1891, %v1877
  %v2018 = vpack.c.bf16 %v1892, %v1878
  %v2019 = vpack.c.bf16 %v1893, %v1879
  %v2020 = vpack.c.bf16 %v1894, %v1880
  %v2021 = vpack.c.bf16 %v1895, %v1881
  %v2022 = vpack.c.bf16 %v1896, %v1882
  %v2023 = vpack.c.bf16 %v1897, %v1883
  %v2024 = vpack.c.bf16 %v1898, %v1884
  %v2025 = vpack.c.bf16 %v1899, %v1885
  %v2026 = vpack.c.bf16 %v1900, %v1886
  %v2027 = vpack.c.bf16 %v1901, %v1887
  %v2028 = vpack.c.bf16 %v1902, %v1888
  %v2029 = vpack.c.bf16 %v1903, %v1889
  %v2030 = vpack.c.bf16 %v1918, %v1904
  %v2031 = vpack.c.bf16 %v1919, %v1905
  %v2032 = vpack.c.bf16 %v1920, %v1906
  %v2033 = vpack.c.bf16 %v1921, %v1907
  %v2034 = vpack.c.bf16 %v1922, %v1908
  %v2035 = vpack.c.bf16 %v1923, %v1909
  %v2036 = vpack.c.bf16 %v1924, %v1910
  %v2037 = vpack.c.bf16 %v1925, %v1911
  %v2038 = vpack.c.bf16 %v1926, %v1912
  %v2039 = vpack.c.bf16 %v1927, %v1913
  %v2040 = vpack.c.bf16 %v1928, %v1914
  %v2041 = vpack.c.bf16 %v1929, %v1915
  %v2042 = vpack.c.bf16 %v1930, %v1916
  %v2043 = vpack.c.bf16 %v1931, %v1917
  %v2044 = vpack.c.bf16 %v1946, %v1932
  %v2045 = vpack.c.bf16 %v1947, %v1933
  %v2046 = vpack.c.bf16 %v1948, %v1934
  %v2047 = vpack.c.bf16 %v1949, %v1935
  %v2048 = vpack.c.bf16 %v1950, %v1936
  %v2049 = vpack.c.bf16 %v1951, %v1937
  %v2050 = vpack.c.bf16 %v1952, %v1938
  %v2051 = vpack.c.bf16 %v1953, %v1939
  %v2052 = vpack.c.bf16 %v1954, %v1940
  %v2053 = vpack.c.bf16 %v1955, %v1941
  %v2054 = vpack.c.bf16 %v1956, %v1942
  %v2055 = vpack.c.bf16 %v1957, %v1943
  %v2056 = vpack.c.bf16 %v1958, %v1944
  %v2057 = vpack.c.bf16 %v1959, %v1945
  %v2058 = vpack.c.bf16 %v1974, %v1960
  %v2059 = vpack.c.bf16 %v1975, %v1961
  %v2060 = vpack.c.bf16 %v1976, %v1962
  %v2061 = vpack.c.bf16 %v1977, %v1963
  %v2062 = vpack.c.bf16 %v1978, %v1964
  %v2063 = vpack.c.bf16 %v1979, %v1965
  %v2064 = vpack.c.bf16 %v1980, %v1966
  %v2065 = vpack.c.bf16 %v1981, %v1967
  %v2066 = vpack.c.bf16 %v1982, %v1968
  %v2067 = vpack.c.bf16 %v1983, %v1969
  %v2068 = vpack.c.bf16 %v1984, %v1970
  %v2069 = vpack.c.bf16 %v1985, %v1971
  %v2070 = vpack.c.bf16 %v1986, %v1972
  %v2071 = vpack.c.bf16 %v1987, %v1973
  %v2072 = vpack.c.bf16 %v2002, %v1988
  %v2073 = vpack.c.bf16 %v2003, %v1989
  %v2074 = vpack.c.bf16 %v2004, %v1990
  %v2075 = vpack.c.bf16 %v2005, %v1991
  %v2076 = vpack.c.bf16 %v2006, %v1992
  %v2077 = vpack.c.bf16 %v2007, %v1993
  %v2078 = vpack.c.bf16 %v2008, %v1994
  %v2079 = vpack.c.bf16 %v2009, %v1995
  %v2080 = vpack.c.bf16 %v2010, %v1996
  %v2081 = vpack.c.bf16 %v2011, %v1997
  %v2082 = vpack.c.bf16 %v2012, %v1998
  %v2083 = vpack.c.bf16 %v2013, %v1999
  %v2084 = vpack.c.bf16 %v2014, %v2000
  %v2085 = vpack.c.bf16 %v2015, %v2001
  %v2086 = vld [vmem:[%s1] sm:$0x7]
  %v2087 = vld [vmem:[%s2] sm:$0x3f]
  %2089 = vset.pattern.permute.xlu0 0
  %2090 = vperm.xlu0 %2089, %v2087
  %v2091 = vpop.permute.xlu0 %2090
  %vm2093 = vcmask 613376
  %v2095 = vsel %vm2093, %v2086, 0
  %vm2097 = vcmask 1044480
  %vm2098 = vcmask 1045504
  %v2099 = vsel %vm2097, 4294967295, 65535
  %v2100 = vsel %vm2098, %v2099, 0
  %v2102 = vand.u32 %v2072, %v2100
  %v2105 = vand.u32 %v2073, %v2100
  %v2108 = vand.u32 %v2074, %v2100
  %v2111 = vand.u32 %v2075, %v2100
  %v2114 = vand.u32 %v2076, %v2100
  %v2117 = vand.u32 %v2077, %v2100
  %v2120 = vand.u32 %v2078, %v2100
  %v2123 = vand.u32 %v2079, %v2100
  %v2126 = vand.u32 %v2080, %v2100
  %v2129 = vand.u32 %v2081, %v2100
  %v2132 = vand.u32 %v2082, %v2100
  %v2135 = vand.u32 %v2083, %v2100
  %v2138 = vand.u32 %v2084, %v2100
  %v2141 = vand.u32 %v2085, %v2100
  %2143 = vmatprep.subr.bf16.mxu0 %v2017
  %2144 = vmatpush1.bf16.msra.mxu0 %v2016
  %2145 = vmatprep.subr.bf16.mxu0 %v2031
  %2146 = vmatpush1.bf16.msra.mxu0 %v2030
  %2147 = vmatprep.subr.bf16.mxu0 %v2045
  %2148 = vmatpush1.bf16.msra.mxu0 %v2044
  %2149 = vmatprep.subr.bf16.mxu0 %v2059
  %2150 = vmatpush1.bf16.msra.mxu0 %v2058
  %2151 = vmatprep.subr.bf16.mxu0 %v2105
  %2152 = vmatpush1.bf16.msra.mxu0 %v2102
  %2153 = vmatprep.subr.bf16.mxu0 0
  %2154 = vmatpush1.bf16.msra.mxu0 0
  %2155 = vmatprep.subr.bf16.mxu0 0
  %2156 = vmatpush1.bf16.msra.mxu0 0
  %2157 = vmatprep.subr.bf16.mxu0 0
  %2158 = vmatpush1.bf16.msra.mxu0 0
  %2159 = vmatprep.subr.bf16.mxu0 0
  %2160 = vmatpush1.bf16.msra.mxu0 0
  %2161 = vmatprep.subr.bf16.mxu0 0
  %2162 = vmatpush1.bf16.msra.mxu0 0
  %2163 = vmatprep.subr.bf16.mxu0 0
  %2164 = vmatpush1.bf16.msra.mxu0 0
  %2165 = vmatprep.subr.bf16.mxu0 0
  %2166 = vmatpush1.bf16.msra.mxu0 0
  %2167 = vmatprep.subr.bf16.mxu0 0
  %2168 = vmatpush1.bf16.msra.mxu0 0
  %2169 = vmatprep.subr.bf16.mxu0 0
  %2170 = vmatpush1.bf16.msra.mxu0 0
  %2171 = vmatprep.subr.bf16.mxu0 0
  %2172 = vmatpush1.bf16.msra.mxu0 0
  %2173 = vmatprep.subr.bf16.mxu0 0
  %2174 = vmatpush1.bf16.msra.mxu0 0
  %2175 = vmatprep.mubr.bf16.mxu0 0
  %2176 = vmatmul.mubr.bf16.gmra.mrb[0].mxu0 %v2095
  %v2177 = vpop.f32.mrb[0].mxu0
  %v2178 = vadd.f32 %v2091, %v2177
  %v2179 = vpop.f32.mrb[0].mxu0
  %v2180 = vadd.f32 %v2091, %v2179
  %v2181 = vpop.f32.mrb[0].mxu0
  %v2182 = vpop.f32.mrb[0].mxu0
  %2183 = vdwg.mxu0
  %2184 = vmatprep.subr.bf16.mxu0 %v2019
  %2185 = vmatpush1.bf16.msra.mxu0 %v2018
  %2186 = vmatprep.subr.bf16.mxu0 %v2033
  %2187 = vmatpush1.bf16.msra.mxu0 %v2032
  %2188 = vmatprep.subr.bf16.mxu0 %v2047
  %2189 = vmatpush1.bf16.msra.mxu0 %v2046
  %2190 = vmatprep.subr.bf16.mxu0 %v2061
  %2191 = vmatpush1.bf16.msra.mxu0 %v2060
  %2192 = vmatprep.subr.bf16.mxu0 %v2111
  %2193 = vmatpush1.bf16.msra.mxu0 %v2108
  %2194 = vmatprep.subr.bf16.mxu0 0
  %2195 = vmatpush1.bf16.msra.mxu0 0
  %2196 = vmatprep.subr.bf16.mxu0 0
  %2197 = vmatpush1.bf16.msra.mxu0 0
  %2198 = vmatprep.subr.bf16.mxu0 0
  %2199 = vmatpush1.bf16.msra.mxu0 0
  %2200 = vmatprep.subr.bf16.mxu0 0
  %2201 = vmatpush1.bf16.msra.mxu0 0
  %2202 = vmatprep.subr.bf16.mxu0 0
  %2203 = vmatpush1.bf16.msra.mxu0 0
  %2204 = vmatprep.subr.bf16.mxu0 0
  %2205 = vmatpush1.bf16.msra.mxu0 0
  %2206 = vmatprep.subr.bf16.mxu0 0
  %2207 = vmatpush1.bf16.msra.mxu0 0
  %2208 = vmatprep.subr.bf16.mxu0 0
  %2209 = vmatpush1.bf16.msra.mxu0 0
  %2210 = vmatprep.subr.bf16.mxu0 0
  %2211 = vmatpush1.bf16.msra.mxu0 0
  %2212 = vmatprep.subr.bf16.mxu0 0
  %2213 = vmatpush1.bf16.msra.mxu0 0
  %2214 = vmatprep.subr.bf16.mxu0 0
  %2215 = vmatpush1.bf16.msra.mxu0 0
  %2216 = vmatprep.mubr.bf16.mxu0 0
  %2217 = vmatmul.mubr.bf16.gmra.mrb[0].mxu0 %v2095
  %v2218 = vpop.f32.mrb[0].mxu0
  %v2219 = vadd.f32 %v2091, %v2218
  %v2220 = vpop.f32.mrb[0].mxu0
  %v2221 = vadd.f32 %v2091, %v2220
  %v2222 = vpop.f32.mrb[0].mxu0
  %v2223 = vpop.f32.mrb[0].mxu0
  %2224 = vdwg.mxu0
  %2225 = vmatprep.subr.bf16.mxu0 %v2021
  %2226 = vmatpush1.bf16.msra.mxu0 %v2020
  %2227 = vmatprep.subr.bf16.mxu0 %v2035
  %2228 = vmatpush1.bf16.msra.mxu0 %v2034
  %2229 = vmatprep.subr.bf16.mxu0 %v2049
  %2230 = vmatpush1.bf16.msra.mxu0 %v2048
  %2231 = vmatprep.subr.bf16.mxu0 %v2063
  %2232 = vmatpush1.bf16.msra.mxu0 %v2062
  %2233 = vmatprep.subr.bf16.mxu0 %v2117
  %2234 = vmatpush1.bf16.msra.mxu0 %v2114
  %2235 = vmatprep.subr.bf16.mxu0 0
  %2236 = vmatpush1.bf16.msra.mxu0 0
  %2237 = vmatprep.subr.bf16.mxu0 0
  %2238 = vmatpush1.bf16.msra.mxu0 0
  %2239 = vmatprep.subr.bf16.mxu0 0
  %2240 = vmatpush1.bf16.msra.mxu0 0
  %2241 = vmatprep.subr.bf16.mxu0 0
  %2242 = vmatpush1.bf16.msra.mxu0 0
  %2243 = vmatprep.subr.bf16.mxu0 0
  %2244 = vmatpush1.bf16.msra.mxu0 0
  %2245 = vmatprep.subr.bf16.mxu0 0
  %2246 = vmatpush1.bf16.msra.mxu0 0
  %2247 = vmatprep.subr.bf16.mxu0 0
  %2248 = vmatpush1.bf16.msra.mxu0 0
  %2249 = vmatprep.subr.bf16.mxu0 0
  %2250 = vmatpush1.bf16.msra.mxu0 0
  %2251 = vmatprep.subr.bf16.mxu0 0
  %2252 = vmatpush1.bf16.msra.mxu0 0
  %2253 = vmatprep.subr.bf16.mxu0 0
  %2254 = vmatpush1.bf16.msra.mxu0 0
  %2255 = vmatprep.subr.bf16.mxu0 0
  %2256 = vmatpush1.bf16.msra.mxu0 0
  %2257 = vmatprep.mubr.bf16.mxu0 0
  %2258 = vmatmul.mubr.bf16.gmra.mrb[0].mxu0 %v2095
  %v2259 = vpop.f32.mrb[0].mxu0
  %v2260 = vadd.f32 %v2091, %v2259
  %v2261 = vpop.f32.mrb[0].mxu0
  %v2262 = vadd.f32 %v2091, %v2261
  %v2263 = vpop.f32.mrb[0].mxu0
  %v2264 = vpop.f32.mrb[0].mxu0
  %2265 = vdwg.mxu0
  %2266 = vmatprep.subr.bf16.mxu0 %v2023
  %2267 = vmatpush1.bf16.msra.mxu0 %v2022
  %2268 = vmatprep.subr.bf16.mxu0 %v2037
  %2269 = vmatpush1.bf16.msra.mxu0 %v2036
  %2270 = vmatprep.subr.bf16.mxu0 %v2051
  %2271 = vmatpush1.bf16.msra.mxu0 %v2050
  %2272 = vmatprep.subr.bf16.mxu0 %v2065
  %2273 = vmatpush1.bf16.msra.mxu0 %v2064
  %2274 = vmatprep.subr.bf16.mxu0 %v2123
  %2275 = vmatpush1.bf16.msra.mxu0 %v2120
  %2276 = vmatprep.subr.bf16.mxu0 0
  %2277 = vmatpush1.bf16.msra.mxu0 0
  %2278 = vmatprep.subr.bf16.mxu0 0
  %2279 = vmatpush1.bf16.msra.mxu0 0
  %2280 = vmatprep.subr.bf16.mxu0 0
  %2281 = vmatpush1.bf16.msra.mxu0 0
  %2282 = vmatprep.subr.bf16.mxu0 0
  %2283 = vmatpush1.bf16.msra.mxu0 0
  %2284 = vmatprep.subr.bf16.mxu0 0
  %2285 = vmatpush1.bf16.msra.mxu0 0
  %2286 = vmatprep.subr.bf16.mxu0 0
  %2287 = vmatpush1.bf16.msra.mxu0 0
  %2288 = vmatprep.subr.bf16.mxu0 0
  %2289 = vmatpush1.bf16.msra.mxu0 0
  %2290 = vmatprep.subr.bf16.mxu0 0
  %2291 = vmatpush1.bf16.msra.mxu0 0
  %2292 = vmatprep.subr.bf16.mxu0 0
  %2293 = vmatpush1.bf16.msra.mxu0 0
  %2294 = vmatprep.subr.bf16.mxu0 0
  %2295 = vmatpush1.bf16.msra.mxu0 0
  %2296 = vmatprep.subr.bf16.mxu0 0
  %2297 = vmatpush1.bf16.msra.mxu0 0
  %2298 = vmatprep.mubr.bf16.mxu0 0
  %2299 = vmatmul.mubr.bf16.gmra.mrb[0].mxu0 %v2095
  %v2300 = vpop.f32.mrb[0].mxu0
  %v2301 = vadd.f32 %v2091, %v2300
  %v2302 = vpop.f32.mrb[0].mxu0
  %v2303 = vadd.f32 %v2091, %v2302
  %v2304 = vpop.f32.mrb[0].mxu0
  %v2305 = vpop.f32.mrb[0].mxu0
  %2306 = vdwg.mxu0
  %2307 = vmatprep.subr.bf16.mxu0 %v2025
  %2308 = vmatpush1.bf16.msra.mxu0 %v2024
  %2309 = vmatprep.subr.bf16.mxu0 %v2039
  %2310 = vmatpush1.bf16.msra.mxu0 %v2038
  %2311 = vmatprep.subr.bf16.mxu0 %v2053
  %2312 = vmatpush1.bf16.msra.mxu0 %v2052
  %2313 = vmatprep.subr.bf16.mxu0 %v2067
  %2314 = vmatpush1.bf16.msra.mxu0 %v2066
  %2315 = vmatprep.subr.bf16.mxu0 %v2129
  %2316 = vmatpush1.bf16.msra.mxu0 %v2126
  %2317 = vmatprep.subr.bf16.mxu0 0
  %2318 = vmatpush1.bf16.msra.mxu0 0
  %2319 = vmatprep.subr.bf16.mxu0 0
  %2320 = vmatpush1.bf16.msra.mxu0 0
  %2321 = vmatprep.subr.bf16.mxu0 0
  %2322 = vmatpush1.bf16.msra.mxu0 0
  %2323 = vmatprep.subr.bf16.mxu0 0
  %2324 = vmatpush1.bf16.msra.mxu0 0
  %2325 = vmatprep.subr.bf16.mxu0 0
  %2326 = vmatpush1.bf16.msra.mxu0 0
  %2327 = vmatprep.subr.bf16.mxu0 0
  %2328 = vmatpush1.bf16.msra.mxu0 0
  %2329 = vmatprep.subr.bf16.mxu0 0
  %2330 = vmatpush1.bf16.msra.mxu0 0
  %2331 = vmatprep.subr.bf16.mxu0 0
  %2332 = vmatpush1.bf16.msra.mxu0 0
  %2333 = vmatprep.subr.bf16.mxu0 0
  %2334 = vmatpush1.bf16.msra.mxu0 0
  %2335 = vmatprep.subr.bf16.mxu0 0
  %2336 = vmatpush1.bf16.msra.mxu0 0
  %2337 = vmatprep.subr.bf16.mxu0 0
  %2338 = vmatpush1.bf16.msra.mxu0 0
  %2339 = vmatprep.mubr.bf16.mxu0 0
  %2340 = vmatmul.mubr.bf16.gmra.mrb[0].mxu0 %v2095
  %v2341 = vpop.f32.mrb[0].mxu0
  %v2342 = vadd.f32 %v2091, %v2341
  %v2343 = vpop.f32.mrb[0].mxu0
  %v2344 = vadd.f32 %v2091, %v2343
  %v2345 = vpop.f32.mrb[0].mxu0
  %v2346 = vpop.f32.mrb[0].mxu0
  %2347 = vdwg.mxu0
  %2348 = vmatprep.subr.bf16.mxu0 %v2027
  %2349 = vmatpush1.bf16.msra.mxu0 %v2026
  %2350 = vmatprep.subr.bf16.mxu0 %v2041
  %2351 = vmatpush1.bf16.msra.mxu0 %v2040
  %2352 = vmatprep.subr.bf16.mxu0 %v2055
  %2353 = vmatpush1.bf16.msra.mxu0 %v2054
  %2354 = vmatprep.subr.bf16.mxu0 %v2069
  %2355 = vmatpush1.bf16.msra.mxu0 %v2068
  %2356 = vmatprep.subr.bf16.mxu0 %v2135
  %2357 = vmatpush1.bf16.msra.mxu0 %v2132
  %2358 = vmatprep.subr.bf16.mxu0 0
  %2359 = vmatpush1.bf16.msra.mxu0 0
  %2360 = vmatprep.subr.bf16.mxu0 0
  %2361 = vmatpush1.bf16.msra.mxu0 0
  %2362 = vmatprep.subr.bf16.mxu0 0
  %2363 = vmatpush1.bf16.msra.mxu0 0
  %2364 = vmatprep.subr.bf16.mxu0 0
  %2365 = vmatpush1.bf16.msra.mxu0 0
  %2366 = vmatprep.subr.bf16.mxu0 0
  %2367 = vmatpush1.bf16.msra.mxu0 0
  %2368 = vmatprep.subr.bf16.mxu0 0
  %2369 = vmatpush1.bf16.msra.mxu0 0
  %2370 = vmatprep.subr.bf16.mxu0 0
  %2371 = vmatpush1.bf16.msra.mxu0 0
  %2372 = vmatprep.subr.bf16.mxu0 0
  %2373 = vmatpush1.bf16.msra.mxu0 0
  %2374 = vmatprep.subr.bf16.mxu0 0
  %2375 = vmatpush1.bf16.msra.mxu0 0
  %2376 = vmatprep.subr.bf16.mxu0 0
  %2377 = vmatpush1.bf16.msra.mxu0 0
  %2378 = vmatprep.subr.bf16.mxu0 0
  %2379 = vmatpush1.bf16.msra.mxu0 0
  %2380 = vmatprep.mubr.bf16.mxu0 0
  %2381 = vmatmul.mubr.bf16.gmra.mrb[0].mxu0 %v2095
  %v2382 = vpop.f32.mrb[0].mxu0
  %v2383 = vadd.f32 %v2091, %v2382
  %v2384 = vpop.f32.mrb[0].mxu0
  %v2385 = vadd.f32 %v2091, %v2384
  %v2386 = vpop.f32.mrb[0].mxu0
  %v2387 = vpop.f32.mrb[0].mxu0
  %2388 = vdwg.mxu0
  %2389 = vmatprep.subr.bf16.mxu0 %v2029
  %2390 = vmatpush1.bf16.msra.mxu0 %v2028
  %2391 = vmatprep.subr.bf16.mxu0 %v2043
  %2392 = vmatpush1.bf16.msra.mxu0 %v2042
  %2393 = vmatprep.subr.bf16.mxu0 %v2057
  %2394 = vmatpush1.bf16.msra.mxu0 %v2056
  %2395 = vmatprep.subr.bf16.mxu0 %v2071
  %2396 = vmatpush1.bf16.msra.mxu0 %v2070
  %2397 = vmatprep.subr.bf16.mxu0 %v2141
  %2398 = vmatpush1.bf16.msra.mxu0 %v2138
  %2399 = vmatprep.subr.bf16.mxu0 0
  %2400 = vmatpush1.bf16.msra.mxu0 0
  %2401 = vmatprep.subr.bf16.mxu0 0
  %2402 = vmatpush1.bf16.msra.mxu0 0
  %2403 = vmatprep.subr.bf16.mxu0 0
  %2404 = vmatpush1.bf16.msra.mxu0 0
  %2405 = vmatprep.subr.bf16.mxu0 0
  %2406 = vmatpush1.bf16.msra.mxu0 0
  %2407 = vmatprep.subr.bf16.mxu0 0
  %2408 = vmatpush1.bf16.msra.mxu0 0
  %2409 = vmatprep.subr.bf16.mxu0 0
  %2410 = vmatpush1.bf16.msra.mxu0 0
  %2411 = vmatprep.subr.bf16.mxu0 0
  %2412 = vmatpush1.bf16.msra.mxu0 0
  %2413 = vmatprep.subr.bf16.mxu0 0
  %2414 = vmatpush1.bf16.msra.mxu0 0
  %2415 = vmatprep.subr.bf16.mxu0 0
  %2416 = vmatpush1.bf16.msra.mxu0 0
  %2417 = vmatprep.subr.bf16.mxu0 0
  %2418 = vmatpush1.bf16.msra.mxu0 0
  %2419 = vmatprep.subr.bf16.mxu0 0
  %2420 = vmatpush1.bf16.msra.mxu0 0
  %2421 = vmatprep.mubr.bf16.mxu0 0
  %2422 = vmatmul.mubr.bf16.gmra.mrb[0].mxu0 %v2095
  %v2423 = vpop.f32.mrb[0].mxu0
  %v2424 = vadd.f32 %v2091, %v2423
  %v2425 = vpop.f32.mrb[0].mxu0
  %v2426 = vadd.f32 %v2091, %v2425
  %v2427 = vpop.f32.mrb[0].mxu0
  %v2428 = vpop.f32.mrb[0].mxu0
  %2429 = vdwg.mxu0
  %v2430 = vmax.f32 %v2178, 0.0
  %v2431 = vmax.f32 %v2180, 0.0
  %v2432 = vmax.f32 %v2219, 0.0
  %v2433 = vmax.f32 %v2221, 0.0
  %v2434 = vmax.f32 %v2260, 0.0
  %v2435 = vmax.f32 %v2262, 0.0
  %v2436 = vmax.f32 %v2301, 0.0
  %v2437 = vmax.f32 %v2303, 0.0
  %v2438 = vmax.f32 %v2342, 0.0
  %v2439 = vmax.f32 %v2344, 0.0
  %v2440 = vmax.f32 %v2383, 0.0
  %v2441 = vmax.f32 %v2385, 0.0
  %v2442 = vmax.f32 %v2424, 0.0
  %v2443 = vmax.f32 %v2426, 0.0
  %2458 = vrot.lane.b32.xlu0 %v2430, 126
  %v2459 = vpop.permute.xlu0 %2458
  %2460 = vrot.lane.b32.xlu0 %v2431, 126
  %v2461 = vpop.permute.xlu0 %2460
  %2462 = vrot.lane.b32.xlu0 %v2432, 126
  %v2463 = vpop.permute.xlu0 %2462
  %2464 = vrot.lane.b32.xlu0 %v2433, 126
  %v2465 = vpop.permute.xlu0 %2464
  %2466 = vrot.lane.b32.xlu0 %v2434, 126
  %v2467 = vpop.permute.xlu0 %2466
  %2468 = vrot.lane.b32.xlu0 %v2435, 126
  %v2469 = vpop.permute.xlu0 %2468
  %2470 = vrot.lane.b32.xlu0 %v2436, 126
  %v2471 = vpop.permute.xlu0 %2470
  %2472 = vrot.lane.b32.xlu0 %v2437, 126
  %v2473 = vpop.permute.xlu0 %2472
  %2474 = vrot.lane.b32.xlu0 %v2438, 126
  %v2475 = vpop.permute.xlu0 %2474
  %2476 = vrot.lane.b32.xlu0 %v2439, 126
  %v2477 = vpop.permute.xlu0 %2476
  %2478 = vrot.lane.b32.xlu0 %v2440, 126
  %v2479 = vpop.permute.xlu0 %2478
  %2480 = vrot.lane.b32.xlu0 %v2441, 126
  %v2481 = vpop.permute.xlu0 %2480
  %2482 = vrot.lane.b32.xlu0 %v2442, 126
  %v2483 = vpop.permute.xlu0 %2482
  %2484 = vrot.lane.b32.xlu0 %v2443, 126
  %v2485 = vpop.permute.xlu0 %2484
  %v2486 = vsel %vm125, %v2459, %v2461
  %v2487 = vsel %vm125, %v2461, %v2463
  %v2488 = vsel %vm125, %v2463, %v2465
  %v2489 = vsel %vm125, %v2465, %v2467
  %v2490 = vsel %vm125, %v2467, %v2469
  %v2491 = vsel %vm125, %v2469, %v2471
  %v2492 = vsel %vm125, %v2471, %v2473
  %v2493 = vsel %vm125, %v2473, %v2475
  %v2494 = vsel %vm125, %v2475, %v2477
  %v2495 = vsel %vm125, %v2477, %v2479
  %v2496 = vsel %vm125, %v2479, %v2481
  %v2497 = vsel %vm125, %v2481, %v2483
  %v2498 = vsel %vm125, %v2483, %v2485
  %v2513 = vmax.f32 %v2430, %v2486
  %v2514 = vmax.f32 %v2431, %v2487
  %v2515 = vmax.f32 %v2432, %v2488
  %v2516 = vmax.f32 %v2433, %v2489
  %v2517 = vmax.f32 %v2434, %v2490
  %v2518 = vmax.f32 %v2435, %v2491
  %v2519 = vmax.f32 %v2436, %v2492
  %v2520 = vmax.f32 %v2437, %v2493
  %v2521 = vmax.f32 %v2438, %v2494
  %v2522 = vmax.f32 %v2439, %v2495
  %v2523 = vmax.f32 %v2440, %v2496
  %v2524 = vmax.f32 %v2441, %v2497
  %v2525 = vmax.f32 %v2442, %v2498
  %v2526 = vmax.f32 %v2443, %v2485
  %2541 = vrot.lane.b32.xlu0 %v2513, 64
  %v2542 = vpop.permute.xlu0 %2541
  %2543 = vrot.lane.b32.xlu0 %v2514, 64
  %v2544 = vpop.permute.xlu0 %2543
  %2545 = vrot.lane.b32.xlu0 %v2515, 64
  %v2546 = vpop.permute.xlu0 %2545
  %2547 = vrot.lane.b32.xlu0 %v2516, 64
  %v2548 = vpop.permute.xlu0 %2547
  %2549 = vrot.lane.b32.xlu0 %v2517, 64
  %v2550 = vpop.permute.xlu0 %2549
  %2551 = vrot.lane.b32.xlu0 %v2518, 64
  %v2552 = vpop.permute.xlu0 %2551
  %2553 = vrot.lane.b32.xlu0 %v2519, 64
  %v2554 = vpop.permute.xlu0 %2553
  %2555 = vrot.lane.b32.xlu0 %v2520, 64
  %v2556 = vpop.permute.xlu0 %2555
  %2557 = vrot.lane.b32.xlu0 %v2521, 64
  %v2558 = vpop.permute.xlu0 %2557
  %2559 = vrot.lane.b32.xlu0 %v2522, 64
  %v2560 = vpop.permute.xlu0 %2559
  %2561 = vrot.lane.b32.xlu0 %v2523, 64
  %v2562 = vpop.permute.xlu0 %2561
  %2563 = vrot.lane.b32.xlu0 %v2524, 64
  %v2564 = vpop.permute.xlu0 %2563
  %2565 = vrot.lane.b32.xlu0 %v2525, 64
  %v2566 = vpop.permute.xlu0 %2565
  %2567 = vrot.lane.b32.xlu0 %v2526, 64
  %v2568 = vpop.permute.xlu0 %2567
  %v2569 = vsel %vm477, %v2542, %v2544
  %v2570 = vsel %vm477, %v2544, %v2546
  %v2571 = vsel %vm477, %v2546, %v2548
  %v2572 = vsel %vm477, %v2548, %v2550
  %v2573 = vsel %vm477, %v2550, %v2552
  %v2574 = vsel %vm477, %v2552, %v2554
  %v2575 = vsel %vm477, %v2554, %v2556
  %v2576 = vsel %vm477, %v2556, %v2558
  %v2577 = vsel %vm477, %v2558, %v2560
  %v2578 = vsel %vm477, %v2560, %v2562
  %v2579 = vsel %vm477, %v2562, %v2564
  %v2580 = vsel %vm477, %v2564, %v2566
  %v2581 = vsel %vm477, %v2566, %v2568
  %v2596 = vmax.f32 %v2513, %v2569
  %v2597 = vmax.f32 %v2514, %v2570
  %v2598 = vmax.f32 %v2515, %v2571
  %v2599 = vmax.f32 %v2516, %v2572
  %v2600 = vmax.f32 %v2517, %v2573
  %v2601 = vmax.f32 %v2518, %v2574
  %v2602 = vmax.f32 %v2519, %v2575
  %v2603 = vmax.f32 %v2520, %v2576
  %v2604 = vmax.f32 %v2521, %v2577
  %v2605 = vmax.f32 %v2522, %v2578
  %v2606 = vmax.f32 %v2523, %v2579
  %v2607 = vmax.f32 %v2524, %v2580
  %v2608 = vmax.f32 %v2525, %v2581
  %v2609 = vmax.f32 %v2526, %v2568
  %2610 = vst [vmem:[#allocation3] sm:$0x3f] %v2596
  %2611 = vst [vmem:[#allocation3 + $0x8] sm:$0x3f] %v2597
  %2612 = vst [vmem:[#allocation3 + $0x10] sm:$0x3f] %v2598
  %2613 = vst [vmem:[#allocation3 + $0x18] sm:$0x3f] %v2599
  %2614 = vst [vmem:[#allocation3 + $0x20] sm:$0x3f] %v2600
  %2615 = vst [vmem:[#allocation3 + $0x28] sm:$0x3f] %v2601
  %2616 = vst [vmem:[#allocation3 + $0x30] sm:$0x3f] %v2602
  %2617 = vst [vmem:[#allocation3 + $0x38] sm:$0x3f] %v2603
  %2618 = vst [vmem:[#allocation3 + $0x40] sm:$0x3f] %v2604
  %vm2619 = vcmask 308224
  %2620 = vst.msk [vmem:[#allocation3 + $0x48] sm:$0x3f] %vm2619, %v2605
  %v2631 = vrot.slane %v2596, 2
  %v2632 = vrot.slane %v2597, 2
  %v2633 = vrot.slane %v2598, 2
  %v2634 = vrot.slane %v2599, 2
  %v2635 = vrot.slane %v2600, 2
  %v2636 = vrot.slane %v2601, 2
  %v2637 = vrot.slane %v2602, 2
  %v2638 = vrot.slane %v2603, 2
  %v2639 = vrot.slane %v2604, 2
  %v2640 = vrot.slane %v2605, 2
  %2641 = vrot.lane.b32.xlu0 %v2631, 124
  %v2642 = vpop.permute.xlu0 %2641
  %2643 = vrot.lane.b32.xlu0 %v2632, 124
  %v2644 = vpop.permute.xlu0 %2643
  %2645 = vrot.lane.b32.xlu0 %v2633, 124
  %v2646 = vpop.permute.xlu0 %2645
  %2647 = vrot.lane.b32.xlu0 %v2634, 124
  %v2648 = vpop.permute.xlu0 %2647
  %2649 = vrot.lane.b32.xlu0 %v2635, 124
  %v2650 = vpop.permute.xlu0 %2649
  %2651 = vrot.lane.b32.xlu0 %v2636, 124
  %v2652 = vpop.permute.xlu0 %2651
  %2653 = vrot.lane.b32.xlu0 %v2637, 124
  %v2654 = vpop.permute.xlu0 %2653
  %2655 = vrot.lane.b32.xlu0 %v2638, 124
  %v2656 = vpop.permute.xlu0 %2655
  %2657 = vrot.lane.b32.xlu0 %v2639, 124
  %v2658 = vpop.permute.xlu0 %2657
  %2659 = vrot.lane.b32.xlu0 %v2640, 124
  %v2660 = vpop.permute.xlu0 %2659
  %v2661 = vsel %vm210, %v2642, %v2644
  %v2662 = vsel %vm210, %v2644, %v2646
  %v2663 = vsel %vm210, %v2646, %v2648
  %v2664 = vsel %vm210, %v2648, %v2650
  %v2665 = vsel %vm210, %v2650, %v2652
  %v2666 = vsel %vm210, %v2652, %v2654
  %v2667 = vsel %vm210, %v2654, %v2656
  %v2668 = vsel %vm210, %v2656, %v2658
  %v2669 = vsel %vm210, %v2658, %v2660
  %2680 = vst [vmem:[#allocation3] sm:$0xc0] %v2661
  %2681 = vst [vmem:[#allocation3 + $0x8] sm:$0xc0] %v2662
  %2682 = vst [vmem:[#allocation3 + $0x10] sm:$0xc0] %v2663
  %2683 = vst [vmem:[#allocation3 + $0x18] sm:$0xc0] %v2664
  %2684 = vst [vmem:[#allocation3 + $0x20] sm:$0xc0] %v2665
  %2685 = vst [vmem:[#allocation3 + $0x28] sm:$0xc0] %v2666
  %2686 = vst [vmem:[#allocation3 + $0x30] sm:$0xc0] %v2667
  %2687 = vst [vmem:[#allocation3 + $0x38] sm:$0xc0] %v2668
  %2688 = vst [vmem:[#allocation3 + $0x40] sm:$0xc0] %v2669
  %vm2689 = vcmask 310278
  %2690 = vst.msk [vmem:[#allocation3 + $0x48] sm:$0xc0] %vm2689, %v2660
  %2691 = vst [vmem:[#allocation3 + $0x50] sm:$0xf] %v2661
  %2692 = vst [vmem:[#allocation3 + $0x58] sm:$0xf] %v2662
  %2693 = vst [vmem:[#allocation3 + $0x60] sm:$0xf] %v2663
  %2694 = vst [vmem:[#allocation3 + $0x68] sm:$0xf] %v2664
  %2695 = vst [vmem:[#allocation3 + $0x70] sm:$0xf] %v2665
  %2696 = vst [vmem:[#allocation3 + $0x78] sm:$0xf] %v2666
  %2697 = vst [vmem:[#allocation3 + $0x80] sm:$0xf] %v2667
  %2698 = vst [vmem:[#allocation3 + $0x88] sm:$0xf] %v2668
  %2699 = vst [vmem:[#allocation3 + $0x90] sm:$0xf] %v2669
  %vm2700 = vcmask 306176
  %2701 = vst.msk [vmem:[#allocation3 + $0x98] sm:$0xf] %vm2700, %v2660
  %v2702 = vrot.slane %v2596, 4
  %v2703 = vrot.slane %v2597, 4
  %v2704 = vrot.slane %v2598, 4
  %v2705 = vrot.slane %v2599, 4
  %v2706 = vrot.slane %v2600, 4
  %v2707 = vrot.slane %v2601, 4
  %v2708 = vrot.slane %v2602, 4
  %v2709 = vrot.slane %v2603, 4
  %v2710 = vrot.slane %v2604, 4
  %v2711 = vrot.slane %v2605, 4
  %2712 = vrot.lane.b32.xlu0 %v2702, 120
  %v2713 = vpop.permute.xlu0 %2712
  %2714 = vrot.lane.b32.xlu0 %v2703, 120
  %v2715 = vpop.permute.xlu0 %2714
  %2716 = vrot.lane.b32.xlu0 %v2704, 120
  %v2717 = vpop.permute.xlu0 %2716
  %2718 = vrot.lane.b32.xlu0 %v2705, 120
  %v2719 = vpop.permute.xlu0 %2718
  %2720 = vrot.lane.b32.xlu0 %v2706, 120
  %v2721 = vpop.permute.xlu0 %2720
  %2722 = vrot.lane.b32.xlu0 %v2707, 120
  %v2723 = vpop.permute.xlu0 %2722
  %2724 = vrot.lane.b32.xlu0 %v2708, 120
  %v2725 = vpop.permute.xlu0 %2724
  %2726 = vrot.lane.b32.xlu0 %v2709, 120
  %v2727 = vpop.permute.xlu0 %2726
  %2728 = vrot.lane.b32.xlu0 %v2710, 120
  %v2729 = vpop.permute.xlu0 %2728
  %2730 = vrot.lane.b32.xlu0 %v2711, 120
  %v2731 = vpop.permute.xlu0 %2730
  %v2732 = vsel %vm388, %v2713, %v2715
  %v2733 = vsel %vm388, %v2715, %v2717
  %v2734 = vsel %vm388, %v2717, %v2719
  %v2735 = vsel %vm388, %v2719, %v2721
  %v2736 = vsel %vm388, %v2721, %v2723
  %v2737 = vsel %vm388, %v2723, %v2725
  %v2738 = vsel %vm388, %v2725, %v2727
  %v2739 = vsel %vm388, %v2727, %v2729
  %v2740 = vsel %vm388, %v2729, %v2731
  %2751 = vst [vmem:[#allocation3 + $0x50] sm:$0xf0] %v2732
  %2752 = vst [vmem:[#allocation3 + $0x58] sm:$0xf0] %v2733
  %2753 = vst [vmem:[#allocation3 + $0x60] sm:$0xf0] %v2734
  %2754 = vst [vmem:[#allocation3 + $0x68] sm:$0xf0] %v2735
  %2755 = vst [vmem:[#allocation3 + $0x70] sm:$0xf0] %v2736
  %2756 = vst [vmem:[#allocation3 + $0x78] sm:$0xf0] %v2737
  %2757 = vst [vmem:[#allocation3 + $0x80] sm:$0xf0] %v2738
  %2758 = vst [vmem:[#allocation3 + $0x88] sm:$0xf0] %v2739
  %2759 = vst [vmem:[#allocation3 + $0x90] sm:$0xf0] %v2740
  %vm2760 = vcmask 310276
  %2761 = vst.msk [vmem:[#allocation3 + $0x98] sm:$0xf0] %vm2760, %v2731
  %2762 = vst [vmem:[#allocation3 + $0xa0] sm:$0x3] %v2732
  %2763 = vst [vmem:[#allocation3 + $0xa8] sm:$0x3] %v2733
  %2764 = vst [vmem:[#allocation3 + $0xb0] sm:$0x3] %v2734
  %2765 = vst [vmem:[#allocation3 + $0xb8] sm:$0x3] %v2735
  %2766 = vst [vmem:[#allocation3 + $0xc0] sm:$0x3] %v2736
  %2767 = vst [vmem:[#allocation3 + $0xc8] sm:$0x3] %v2737
  %2768 = vst [vmem:[#allocation3 + $0xd0] sm:$0x3] %v2738
  %2769 = vst [vmem:[#allocation3 + $0xd8] sm:$0x3] %v2739
  %2770 = vst [vmem:[#allocation3 + $0xe0] sm:$0x3] %v2740
  %vm2771 = vcmask 304128
  %2772 = vst.msk [vmem:[#allocation3 + $0xe8] sm:$0x3] %vm2771, %v2731
  %v2773 = vrot.slane %v2596, 6
  %v2774 = vrot.slane %v2597, 6
  %v2775 = vrot.slane %v2598, 6
  %v2776 = vrot.slane %v2599, 6
  %v2777 = vrot.slane %v2600, 6
  %v2778 = vrot.slane %v2601, 6
  %v2779 = vrot.slane %v2602, 6
  %v2780 = vrot.slane %v2603, 6
  %v2781 = vrot.slane %v2604, 6
  %v2782 = vrot.slane %v2605, 6
  %2783 = vrot.lane.b32.xlu0 %v2773, 116
  %v2784 = vpop.permute.xlu0 %2783
  %2785 = vrot.lane.b32.xlu0 %v2774, 116
  %v2786 = vpop.permute.xlu0 %2785
  %2787 = vrot.lane.b32.xlu0 %v2775, 116
  %v2788 = vpop.permute.xlu0 %2787
  %2789 = vrot.lane.b32.xlu0 %v2776, 116
  %v2790 = vpop.permute.xlu0 %2789
  %2791 = vrot.lane.b32.xlu0 %v2777, 116
  %v2792 = vpop.permute.xlu0 %2791
  %2793 = vrot.lane.b32.xlu0 %v2778, 116
  %v2794 = vpop.permute.xlu0 %2793
  %2795 = vrot.lane.b32.xlu0 %v2779, 116
  %v2796 = vpop.permute.xlu0 %2795
  %2797 = vrot.lane.b32.xlu0 %v2780, 116
  %v2798 = vpop.permute.xlu0 %2797
  %2799 = vrot.lane.b32.xlu0 %v2781, 116
  %v2800 = vpop.permute.xlu0 %2799
  %2801 = vrot.lane.b32.xlu0 %v2782, 116
  %v2802 = vpop.permute.xlu0 %2801
  %vm2803 = vcmask 949248
  %v2804 = vsel %vm2803, %v2784, %v2786
  %v2805 = vsel %vm2803, %v2786, %v2788
  %v2806 = vsel %vm2803, %v2788, %v2790
  %v2807 = vsel %vm2803, %v2790, %v2792
  %v2808 = vsel %vm2803, %v2792, %v2794
  %v2809 = vsel %vm2803, %v2794, %v2796
  %v2810 = vsel %vm2803, %v2796, %v2798
  %v2811 = vsel %vm2803, %v2798, %v2800
  %v2812 = vsel %vm2803, %v2800, %v2802
  %2823 = vst [vmem:[#allocation3 + $0xa0] sm:$0xfc] %v2804
  %2824 = vst [vmem:[#allocation3 + $0xa8] sm:$0xfc] %v2805
  %2825 = vst [vmem:[#allocation3 + $0xb0] sm:$0xfc] %v2806
  %2826 = vst [vmem:[#allocation3 + $0xb8] sm:$0xfc] %v2807
  %2827 = vst [vmem:[#allocation3 + $0xc0] sm:$0xfc] %v2808
  %2828 = vst [vmem:[#allocation3 + $0xc8] sm:$0xfc] %v2809
  %2829 = vst [vmem:[#allocation3 + $0xd0] sm:$0xfc] %v2810
  %2830 = vst [vmem:[#allocation3 + $0xd8] sm:$0xfc] %v2811
  %2831 = vst [vmem:[#allocation3 + $0xe0] sm:$0xfc] %v2812
  %vm2832 = vcmask 310274
  %2833 = vst.msk [vmem:[#allocation3 + $0xe8] sm:$0xfc] %vm2832, %v2802
  %2834 = vrot.lane.b32.xlu0 %v2596, 112
  %v2835 = vpop.permute.xlu0 %2834
  %2836 = vrot.lane.b32.xlu0 %v2597, 112
  %v2837 = vpop.permute.xlu0 %2836
  %2838 = vrot.lane.b32.xlu0 %v2598, 112
  %v2839 = vpop.permute.xlu0 %2838
  %2840 = vrot.lane.b32.xlu0 %v2599, 112
  %v2841 = vpop.permute.xlu0 %2840
  %2842 = vrot.lane.b32.xlu0 %v2600, 112
  %v2843 = vpop.permute.xlu0 %2842
  %2844 = vrot.lane.b32.xlu0 %v2601, 112
  %v2845 = vpop.permute.xlu0 %2844
  %2846 = vrot.lane.b32.xlu0 %v2602, 112
  %v2847 = vpop.permute.xlu0 %2846
  %2848 = vrot.lane.b32.xlu0 %v2603, 112
  %v2849 = vpop.permute.xlu0 %2848
  %2850 = vrot.lane.b32.xlu0 %v2604, 112
  %v2851 = vpop.permute.xlu0 %2850
  %2852 = vrot.lane.b32.xlu0 %v2605, 112
  %v2853 = vpop.permute.xlu0 %2852
  %vm2854 = vcmask 916480
  %v2855 = vsel %vm2854, %v2835, %v2837
  %v2856 = vsel %vm2854, %v2837, %v2839
  %v2857 = vsel %vm2854, %v2839, %v2841
  %v2858 = vsel %vm2854, %v2841, %v2843
  %v2859 = vsel %vm2854, %v2843, %v2845
  %v2860 = vsel %vm2854, %v2845, %v2847
  %v2861 = vsel %vm2854, %v2847, %v2849
  %v2862 = vsel %vm2854, %v2849, %v2851
  %v2863 = vsel %vm2854, %v2851, %v2853
  %2874 = vst [vmem:[#allocation3 + $0xf0] sm:$0x3f] %v2855
  %2875 = vst [vmem:[#allocation3 + $0xf8] sm:$0x3f] %v2856
  %2876 = vst [vmem:[#allocation3 + $0x100] sm:$0x3f] %v2857
  %2877 = vst [vmem:[#allocation3 + $0x108] sm:$0x3f] %v2858
  %2878 = vst [vmem:[#allocation3 + $0x110] sm:$0x3f] %v2859
  %2879 = vst [vmem:[#allocation3 + $0x118] sm:$0x3f] %v2860
  %2880 = vst [vmem:[#allocation3 + $0x120] sm:$0x3f] %v2861
  %2881 = vst [vmem:[#allocation3 + $0x128] sm:$0x3f] %v2862
  %2882 = vst [vmem:[#allocation3 + $0x130] sm:$0x3f] %v2863
  %2883 = vst.msk [vmem:[#allocation3 + $0x138] sm:$0x3f] %vm2619, %v2853
  %v2885 = vrot.slane %v2606, 2
  %2896 = vst [vmem:[#allocation3 + $0xf0] sm:$0xc0] %v2632
  %2897 = vst [vmem:[#allocation3 + $0xf8] sm:$0xc0] %v2633
  %2898 = vst [vmem:[#allocation3 + $0x100] sm:$0xc0] %v2634
  %2899 = vst [vmem:[#allocation3 + $0x108] sm:$0xc0] %v2635
  %2900 = vst [vmem:[#allocation3 + $0x110] sm:$0xc0] %v2636
  %2901 = vst [vmem:[#allocation3 + $0x118] sm:$0xc0] %v2637
  %2902 = vst [vmem:[#allocation3 + $0x120] sm:$0xc0] %v2638
  %2903 = vst [vmem:[#allocation3 + $0x128] sm:$0xc0] %v2639
  %2904 = vst [vmem:[#allocation3 + $0x130] sm:$0xc0] %v2640
  %2905 = vst.msk [vmem:[#allocation3 + $0x138] sm:$0xc0] %vm2689, %v2885
  %2906 = vst [vmem:[#allocation3 + $0x140] sm:$0xf] %v2632
  %2907 = vst [vmem:[#allocation3 + $0x148] sm:$0xf] %v2633
  %2908 = vst [vmem:[#allocation3 + $0x150] sm:$0xf] %v2634
  %2909 = vst [vmem:[#allocation3 + $0x158] sm:$0xf] %v2635
  %2910 = vst [vmem:[#allocation3 + $0x160] sm:$0xf] %v2636
  %2911 = vst [vmem:[#allocation3 + $0x168] sm:$0xf] %v2637
  %2912 = vst [vmem:[#allocation3 + $0x170] sm:$0xf] %v2638
  %2913 = vst [vmem:[#allocation3 + $0x178] sm:$0xf] %v2639
  %2914 = vst [vmem:[#allocation3 + $0x180] sm:$0xf] %v2640
  %2915 = vst.msk [vmem:[#allocation3 + $0x188] sm:$0xf] %vm2700, %v2885
  %v2916 = vrot.slane %v2606, 4
  %2917 = vrot.lane.b32.xlu0 %v2703, 124
  %v2918 = vpop.permute.xlu0 %2917
  %2919 = vrot.lane.b32.xlu0 %v2704, 124
  %v2920 = vpop.permute.xlu0 %2919
  %2921 = vrot.lane.b32.xlu0 %v2705, 124
  %v2922 = vpop.permute.xlu0 %2921
  %2923 = vrot.lane.b32.xlu0 %v2706, 124
  %v2924 = vpop.permute.xlu0 %2923
  %2925 = vrot.lane.b32.xlu0 %v2707, 124
  %v2926 = vpop.permute.xlu0 %2925
  %2927 = vrot.lane.b32.xlu0 %v2708, 124
  %v2928 = vpop.permute.xlu0 %2927
  %2929 = vrot.lane.b32.xlu0 %v2709, 124
  %v2930 = vpop.permute.xlu0 %2929
  %2931 = vrot.lane.b32.xlu0 %v2710, 124
  %v2932 = vpop.permute.xlu0 %2931
  %2933 = vrot.lane.b32.xlu0 %v2711, 124
  %v2934 = vpop.permute.xlu0 %2933
  %2935 = vrot.lane.b32.xlu0 %v2916, 124
  %v2936 = vpop.permute.xlu0 %2935
  %v2937 = vsel %vm210, %v2918, %v2920
  %v2938 = vsel %vm210, %v2920, %v2922
  %v2939 = vsel %vm210, %v2922, %v2924
  %v2940 = vsel %vm210, %v2924, %v2926
  %v2941 = vsel %vm210, %v2926, %v2928
  %v2942 = vsel %vm210, %v2928, %v2930
  %v2943 = vsel %vm210, %v2930, %v2932
  %v2944 = vsel %vm210, %v2932, %v2934
  %v2945 = vsel %vm210, %v2934, %v2936
  %2956 = vst [vmem:[#allocation3 + $0x140] sm:$0xf0] %v2937
  %2957 = vst [vmem:[#allocation3 + $0x148] sm:$0xf0] %v2938
  %2958 = vst [vmem:[#allocation3 + $0x150] sm:$0xf0] %v2939
  %2959 = vst [vmem:[#allocation3 + $0x158] sm:$0xf0] %v2940
  %2960 = vst [vmem:[#allocation3 + $0x160] sm:$0xf0] %v2941
  %2961 = vst [vmem:[#allocation3 + $0x168] sm:$0xf0] %v2942
  %2962 = vst [vmem:[#allocation3 + $0x170] sm:$0xf0] %v2943
  %2963 = vst [vmem:[#allocation3 + $0x178] sm:$0xf0] %v2944
  %2964 = vst [vmem:[#allocation3 + $0x180] sm:$0xf0] %v2945
  %2965 = vst.msk [vmem:[#allocation3 + $0x188] sm:$0xf0] %vm2760, %v2936
  %2966 = vst [vmem:[#allocation3 + $0x190] sm:$0x3] %v2937
  %2967 = vst [vmem:[#allocation3 + $0x198] sm:$0x3] %v2938
  %2968 = vst [vmem:[#allocation3 + $0x1a0] sm:$0x3] %v2939
  %2969 = vst [vmem:[#allocation3 + $0x1a8] sm:$0x3] %v2940
  %2970 = vst [vmem:[#allocation3 + $0x1b0] sm:$0x3] %v2941
  %2971 = vst [vmem:[#allocation3 + $0x1b8] sm:$0x3] %v2942
  %2972 = vst [vmem:[#allocation3 + $0x1c0] sm:$0x3] %v2943
  %2973 = vst [vmem:[#allocation3 + $0x1c8] sm:$0x3] %v2944
  %2974 = vst [vmem:[#allocation3 + $0x1d0] sm:$0x3] %v2945
  %2975 = vst.msk [vmem:[#allocation3 + $0x1d8] sm:$0x3] %vm2771, %v2936
  %v2976 = vrot.slane %v2606, 6
  %2977 = vrot.lane.b32.xlu0 %v2774, 120
  %v2978 = vpop.permute.xlu0 %2977
  %2979 = vrot.lane.b32.xlu0 %v2775, 120
  %v2980 = vpop.permute.xlu0 %2979
  %2981 = vrot.lane.b32.xlu0 %v2776, 120
  %v2982 = vpop.permute.xlu0 %2981
  %2983 = vrot.lane.b32.xlu0 %v2777, 120
  %v2984 = vpop.permute.xlu0 %2983
  %2985 = vrot.lane.b32.xlu0 %v2778, 120
  %v2986 = vpop.permute.xlu0 %2985
  %2987 = vrot.lane.b32.xlu0 %v2779, 120
  %v2988 = vpop.permute.xlu0 %2987
  %2989 = vrot.lane.b32.xlu0 %v2780, 120
  %v2990 = vpop.permute.xlu0 %2989
  %2991 = vrot.lane.b32.xlu0 %v2781, 120
  %v2992 = vpop.permute.xlu0 %2991
  %2993 = vrot.lane.b32.xlu0 %v2782, 120
  %v2994 = vpop.permute.xlu0 %2993
  %2995 = vrot.lane.b32.xlu0 %v2976, 120
  %v2996 = vpop.permute.xlu0 %2995
  %v2997 = vsel %vm388, %v2978, %v2980
  %v2998 = vsel %vm388, %v2980, %v2982
  %v2999 = vsel %vm388, %v2982, %v2984
  %v3000 = vsel %vm388, %v2984, %v2986
  %v3001 = vsel %vm388, %v2986, %v2988
  %v3002 = vsel %vm388, %v2988, %v2990
  %v3003 = vsel %vm388, %v2990, %v2992
  %v3004 = vsel %vm388, %v2992, %v2994
  %v3005 = vsel %vm388, %v2994, %v2996
  %3016 = vst [vmem:[#allocation3 + $0x190] sm:$0xfc] %v2997
  %3017 = vst [vmem:[#allocation3 + $0x198] sm:$0xfc] %v2998
  %3018 = vst [vmem:[#allocation3 + $0x1a0] sm:$0xfc] %v2999
  %3019 = vst [vmem:[#allocation3 + $0x1a8] sm:$0xfc] %v3000
  %3020 = vst [vmem:[#allocation3 + $0x1b0] sm:$0xfc] %v3001
  %3021 = vst [vmem:[#allocation3 + $0x1b8] sm:$0xfc] %v3002
  %3022 = vst [vmem:[#allocation3 + $0x1c0] sm:$0xfc] %v3003
  %3023 = vst [vmem:[#allocation3 + $0x1c8] sm:$0xfc] %v3004
  %3024 = vst [vmem:[#allocation3 + $0x1d0] sm:$0xfc] %v3005
  %3025 = vst.msk [vmem:[#allocation3 + $0x1d8] sm:$0xfc] %vm2832, %v2996
  %3026 = vrot.lane.b32.xlu0 %v2597, 116
  %v3027 = vpop.permute.xlu0 %3026
  %3028 = vrot.lane.b32.xlu0 %v2598, 116
  %v3029 = vpop.permute.xlu0 %3028
  %3030 = vrot.lane.b32.xlu0 %v2599, 116
  %v3031 = vpop.permute.xlu0 %3030
  %3032 = vrot.lane.b32.xlu0 %v2600, 116
  %v3033 = vpop.permute.xlu0 %3032
  %3034 = vrot.lane.b32.xlu0 %v2601, 116
  %v3035 = vpop.permute.xlu0 %3034
  %3036 = vrot.lane.b32.xlu0 %v2602, 116
  %v3037 = vpop.permute.xlu0 %3036
  %3038 = vrot.lane.b32.xlu0 %v2603, 116
  %v3039 = vpop.permute.xlu0 %3038
  %3040 = vrot.lane.b32.xlu0 %v2604, 116
  %v3041 = vpop.permute.xlu0 %3040
  %3042 = vrot.lane.b32.xlu0 %v2605, 116
  %v3043 = vpop.permute.xlu0 %3042
  %3044 = vrot.lane.b32.xlu0 %v2606, 116
  %v3045 = vpop.permute.xlu0 %3044
  %v3046 = vsel %vm2803, %v3027, %v3029
  %v3047 = vsel %vm2803, %v3029, %v3031
  %v3048 = vsel %vm2803, %v3031, %v3033
  %v3049 = vsel %vm2803, %v3033, %v3035
  %v3050 = vsel %vm2803, %v3035, %v3037
  %v3051 = vsel %vm2803, %v3037, %v3039
  %v3052 = vsel %vm2803, %v3039, %v3041
  %v3053 = vsel %vm2803, %v3041, %v3043
  %v3054 = vsel %vm2803, %v3043, %v3045
  %3065 = vst [vmem:[#allocation3 + $0x1e0] sm:$0x3f] %v3046
  %3066 = vst [vmem:[#allocation3 + $0x1e8] sm:$0x3f] %v3047
  %3067 = vst [vmem:[#allocation3 + $0x1f0] sm:$0x3f] %v3048
  %3068 = vst [vmem:[#allocation3 + $0x1f8] sm:$0x3f] %v3049
  %3069 = vst [vmem:[#allocation3 + $0x200] sm:$0x3f] %v3050
  %3070 = vst [vmem:[#allocation3 + $0x208] sm:$0x3f] %v3051
  %3071 = vst [vmem:[#allocation3 + $0x210] sm:$0x3f] %v3052
  %3072 = vst [vmem:[#allocation3 + $0x218] sm:$0x3f] %v3053
  %3073 = vst [vmem:[#allocation3 + $0x220] sm:$0x3f] %v3054
  %3074 = vst.msk [vmem:[#allocation3 + $0x228] sm:$0x3f] %vm2619, %v3045
  %3075 = vrot.lane.b32.xlu0 %v2632, 112
  %v3076 = vpop.permute.xlu0 %3075
  %3077 = vrot.lane.b32.xlu0 %v2633, 112
  %v3078 = vpop.permute.xlu0 %3077
  %3079 = vrot.lane.b32.xlu0 %v2634, 112
  %v3080 = vpop.permute.xlu0 %3079
  %3081 = vrot.lane.b32.xlu0 %v2635, 112
  %v3082 = vpop.permute.xlu0 %3081
  %3083 = vrot.lane.b32.xlu0 %v2636, 112
  %v3084 = vpop.permute.xlu0 %3083
  %3085 = vrot.lane.b32.xlu0 %v2637, 112
  %v3086 = vpop.permute.xlu0 %3085
  %3087 = vrot.lane.b32.xlu0 %v2638, 112
  %v3088 = vpop.permute.xlu0 %3087
  %3089 = vrot.lane.b32.xlu0 %v2639, 112
  %v3090 = vpop.permute.xlu0 %3089
  %3091 = vrot.lane.b32.xlu0 %v2640, 112
  %v3092 = vpop.permute.xlu0 %3091
  %3093 = vrot.lane.b32.xlu0 %v2885, 112
  %v3094 = vpop.permute.xlu0 %3093
  %v3095 = vsel %vm2854, %v3076, %v3078
  %v3096 = vsel %vm2854, %v3078, %v3080
  %v3097 = vsel %vm2854, %v3080, %v3082
  %v3098 = vsel %vm2854, %v3082, %v3084
  %v3099 = vsel %vm2854, %v3084, %v3086
  %v3100 = vsel %vm2854, %v3086, %v3088
  %v3101 = vsel %vm2854, %v3088, %v3090
  %v3102 = vsel %vm2854, %v3090, %v3092
  %v3103 = vsel %vm2854, %v3092, %v3094
  %3114 = vst [vmem:[#allocation3 + $0x1e0] sm:$0xc0] %v3095
  %3115 = vst [vmem:[#allocation3 + $0x1e8] sm:$0xc0] %v3096
  %3116 = vst [vmem:[#allocation3 + $0x1f0] sm:$0xc0] %v3097
  %3117 = vst [vmem:[#allocation3 + $0x1f8] sm:$0xc0] %v3098
  %3118 = vst [vmem:[#allocation3 + $0x200] sm:$0xc0] %v3099
  %3119 = vst [vmem:[#allocation3 + $0x208] sm:$0xc0] %v3100
  %3120 = vst [vmem:[#allocation3 + $0x210] sm:$0xc0] %v3101
  %3121 = vst [vmem:[#allocation3 + $0x218] sm:$0xc0] %v3102
  %3122 = vst [vmem:[#allocation3 + $0x220] sm:$0xc0] %v3103
  %3123 = vst.msk [vmem:[#allocation3 + $0x228] sm:$0xc0] %vm2689, %v3094
  %3124 = vst [vmem:[#allocation3 + $0x230] sm:$0xf] %v3095
  %3125 = vst [vmem:[#allocation3 + $0x238] sm:$0xf] %v3096
  %3126 = vst [vmem:[#allocation3 + $0x240] sm:$0xf] %v3097
  %3127 = vst [vmem:[#allocation3 + $0x248] sm:$0xf] %v3098
  %3128 = vst [vmem:[#allocation3 + $0x250] sm:$0xf] %v3099
  %3129 = vst [vmem:[#allocation3 + $0x258] sm:$0xf] %v3100
  %3130 = vst [vmem:[#allocation3 + $0x260] sm:$0xf] %v3101
  %3131 = vst [vmem:[#allocation3 + $0x268] sm:$0xf] %v3102
  %3132 = vst [vmem:[#allocation3 + $0x270] sm:$0xf] %v3103
  %3133 = vst.msk [vmem:[#allocation3 + $0x278] sm:$0xf] %vm2700, %v3094
  %v3135 = vrot.slane %v2607, 4
  %3146 = vst [vmem:[#allocation3 + $0x230] sm:$0xf0] %v2704
  %3147 = vst [vmem:[#allocation3 + $0x238] sm:$0xf0] %v2705
  %3148 = vst [vmem:[#allocation3 + $0x240] sm:$0xf0] %v2706
  %3149 = vst [vmem:[#allocation3 + $0x248] sm:$0xf0] %v2707
  %3150 = vst [vmem:[#allocation3 + $0x250] sm:$0xf0] %v2708
  %3151 = vst [vmem:[#allocation3 + $0x258] sm:$0xf0] %v2709
  %3152 = vst [vmem:[#allocation3 + $0x260] sm:$0xf0] %v2710
  %3153 = vst [vmem:[#allocation3 + $0x268] sm:$0xf0] %v2711
  %3154 = vst [vmem:[#allocation3 + $0x270] sm:$0xf0] %v2916
  %3155 = vst.msk [vmem:[#allocation3 + $0x278] sm:$0xf0] %vm2760, %v3135
  %3156 = vst [vmem:[#allocation3 + $0x280] sm:$0x3] %v2704
  %3157 = vst [vmem:[#allocation3 + $0x288] sm:$0x3] %v2705
  %3158 = vst [vmem:[#allocation3 + $0x290] sm:$0x3] %v2706
  %3159 = vst [vmem:[#allocation3 + $0x298] sm:$0x3] %v2707
  %3160 = vst [vmem:[#allocation3 + $0x2a0] sm:$0x3] %v2708
  %3161 = vst [vmem:[#allocation3 + $0x2a8] sm:$0x3] %v2709
  %3162 = vst [vmem:[#allocation3 + $0x2b0] sm:$0x3] %v2710
  %3163 = vst [vmem:[#allocation3 + $0x2b8] sm:$0x3] %v2711
  %3164 = vst [vmem:[#allocation3 + $0x2c0] sm:$0x3] %v2916
  %3165 = vst.msk [vmem:[#allocation3 + $0x2c8] sm:$0x3] %vm2771, %v3135
  %v3166 = vrot.slane %v2607, 6
  %3167 = vrot.lane.b32.xlu0 %v2775, 124
  %v3168 = vpop.permute.xlu0 %3167
  %3169 = vrot.lane.b32.xlu0 %v2776, 124
  %v3170 = vpop.permute.xlu0 %3169
  %3171 = vrot.lane.b32.xlu0 %v2777, 124
  %v3172 = vpop.permute.xlu0 %3171
  %3173 = vrot.lane.b32.xlu0 %v2778, 124
  %v3174 = vpop.permute.xlu0 %3173
  %3175 = vrot.lane.b32.xlu0 %v2779, 124
  %v3176 = vpop.permute.xlu0 %3175
  %3177 = vrot.lane.b32.xlu0 %v2780, 124
  %v3178 = vpop.permute.xlu0 %3177
  %3179 = vrot.lane.b32.xlu0 %v2781, 124
  %v3180 = vpop.permute.xlu0 %3179
  %3181 = vrot.lane.b32.xlu0 %v2782, 124
  %v3182 = vpop.permute.xlu0 %3181
  %3183 = vrot.lane.b32.xlu0 %v2976, 124
  %v3184 = vpop.permute.xlu0 %3183
  %3185 = vrot.lane.b32.xlu0 %v3166, 124
  %v3186 = vpop.permute.xlu0 %3185
  %v3187 = vsel %vm210, %v3168, %v3170
  %v3188 = vsel %vm210, %v3170, %v3172
  %v3189 = vsel %vm210, %v3172, %v3174
  %v3190 = vsel %vm210, %v3174, %v3176
  %v3191 = vsel %vm210, %v3176, %v3178
  %v3192 = vsel %vm210, %v3178, %v3180
  %v3193 = vsel %vm210, %v3180, %v3182
  %v3194 = vsel %vm210, %v3182, %v3184
  %v3195 = vsel %vm210, %v3184, %v3186
  %3206 = vst [vmem:[#allocation3 + $0x280] sm:$0xfc] %v3187
  %3207 = vst [vmem:[#allocation3 + $0x288] sm:$0xfc] %v3188
  %3208 = vst [vmem:[#allocation3 + $0x290] sm:$0xfc] %v3189
  %3209 = vst [vmem:[#allocation3 + $0x298] sm:$0xfc] %v3190
  %3210 = vst [vmem:[#allocation3 + $0x2a0] sm:$0xfc] %v3191
  %3211 = vst [vmem:[#allocation3 + $0x2a8] sm:$0xfc] %v3192
  %3212 = vst [vmem:[#allocation3 + $0x2b0] sm:$0xfc] %v3193
  %3213 = vst [vmem:[#allocation3 + $0x2b8] sm:$0xfc] %v3194
  %3214 = vst [vmem:[#allocation3 + $0x2c0] sm:$0xfc] %v3195
  %3215 = vst.msk [vmem:[#allocation3 + $0x2c8] sm:$0xfc] %vm2832, %v3186
  %3216 = vrot.lane.b32.xlu0 %v2598, 120
  %v3217 = vpop.permute.xlu0 %3216
  %3218 = vrot.lane.b32.xlu0 %v2599, 120
  %v3219 = vpop.permute.xlu0 %3218
  %3220 = vrot.lane.b32.xlu0 %v2600, 120
  %v3221 = vpop.permute.xlu0 %3220
  %3222 = vrot.lane.b32.xlu0 %v2601, 120
  %v3223 = vpop.permute.xlu0 %3222
  %3224 = vrot.lane.b32.xlu0 %v2602, 120
  %v3225 = vpop.permute.xlu0 %3224
  %3226 = vrot.lane.b32.xlu0 %v2603, 120
  %v3227 = vpop.permute.xlu0 %3226
  %3228 = vrot.lane.b32.xlu0 %v2604, 120
  %v3229 = vpop.permute.xlu0 %3228
  %3230 = vrot.lane.b32.xlu0 %v2605, 120
  %v3231 = vpop.permute.xlu0 %3230
  %3232 = vrot.lane.b32.xlu0 %v2606, 120
  %v3233 = vpop.permute.xlu0 %3232
  %3234 = vrot.lane.b32.xlu0 %v2607, 120
  %v3235 = vpop.permute.xlu0 %3234
  %v3236 = vsel %vm388, %v3217, %v3219
  %v3237 = vsel %vm388, %v3219, %v3221
  %v3238 = vsel %vm388, %v3221, %v3223
  %v3239 = vsel %vm388, %v3223, %v3225
  %v3240 = vsel %vm388, %v3225, %v3227
  %v3241 = vsel %vm388, %v3227, %v3229
  %v3242 = vsel %vm388, %v3229, %v3231
  %v3243 = vsel %vm388, %v3231, %v3233
  %v3244 = vsel %vm388, %v3233, %v3235
  %3255 = vst [vmem:[#allocation3 + $0x2d0] sm:$0x3f] %v3236
  %3256 = vst [vmem:[#allocation3 + $0x2d8] sm:$0x3f] %v3237
  %3257 = vst [vmem:[#allocation3 + $0x2e0] sm:$0x3f] %v3238
  %3258 = vst [vmem:[#allocation3 + $0x2e8] sm:$0x3f] %v3239
  %3259 = vst [vmem:[#allocation3 + $0x2f0] sm:$0x3f] %v3240
  %3260 = vst [vmem:[#allocation3 + $0x2f8] sm:$0x3f] %v3241
  %3261 = vst [vmem:[#allocation3 + $0x300] sm:$0x3f] %v3242
  %3262 = vst [vmem:[#allocation3 + $0x308] sm:$0x3f] %v3243
  %3263 = vst [vmem:[#allocation3 + $0x310] sm:$0x3f] %v3244
  %3264 = vst.msk [vmem:[#allocation3 + $0x318] sm:$0x3f] %vm2619, %v3235
  %v3265 = vrot.slane %v2607, 2
  %3266 = vrot.lane.b32.xlu0 %v2633, 116
  %v3267 = vpop.permute.xlu0 %3266
  %3268 = vrot.lane.b32.xlu0 %v2634, 116
  %v3269 = vpop.permute.xlu0 %3268
  %3270 = vrot.lane.b32.xlu0 %v2635, 116
  %v3271 = vpop.permute.xlu0 %3270
  %3272 = vrot.lane.b32.xlu0 %v2636, 116
  %v3273 = vpop.permute.xlu0 %3272
  %3274 = vrot.lane.b32.xlu0 %v2637, 116
  %v3275 = vpop.permute.xlu0 %3274
  %3276 = vrot.lane.b32.xlu0 %v2638, 116
  %v3277 = vpop.permute.xlu0 %3276
  %3278 = vrot.lane.b32.xlu0 %v2639, 116
  %v3279 = vpop.permute.xlu0 %3278
  %3280 = vrot.lane.b32.xlu0 %v2640, 116
  %v3281 = vpop.permute.xlu0 %3280
  %3282 = vrot.lane.b32.xlu0 %v2885, 116
  %v3283 = vpop.permute.xlu0 %3282
  %3284 = vrot.lane.b32.xlu0 %v3265, 116
  %v3285 = vpop.permute.xlu0 %3284
  %v3286 = vsel %vm2803, %v3267, %v3269
  %v3287 = vsel %vm2803, %v3269, %v3271
  %v3288 = vsel %vm2803, %v3271, %v3273
  %v3289 = vsel %vm2803, %v3273, %v3275
  %v3290 = vsel %vm2803, %v3275, %v3277
  %v3291 = vsel %vm2803, %v3277, %v3279
  %v3292 = vsel %vm2803, %v3279, %v3281
  %v3293 = vsel %vm2803, %v3281, %v3283
  %v3294 = vsel %vm2803, %v3283, %v3285
  %3305 = vst [vmem:[#allocation3 + $0x2d0] sm:$0xc0] %v3286
  %3306 = vst [vmem:[#allocation3 + $0x2d8] sm:$0xc0] %v3287
  %3307 = vst [vmem:[#allocation3 + $0x2e0] sm:$0xc0] %v3288
  %3308 = vst [vmem:[#allocation3 + $0x2e8] sm:$0xc0] %v3289
  %3309 = vst [vmem:[#allocation3 + $0x2f0] sm:$0xc0] %v3290
  %3310 = vst [vmem:[#allocation3 + $0x2f8] sm:$0xc0] %v3291
  %3311 = vst [vmem:[#allocation3 + $0x300] sm:$0xc0] %v3292
  %3312 = vst [vmem:[#allocation3 + $0x308] sm:$0xc0] %v3293
  %3313 = vst [vmem:[#allocation3 + $0x310] sm:$0xc0] %v3294
  %3314 = vst.msk [vmem:[#allocation3 + $0x318] sm:$0xc0] %vm2689, %v3285
  %3315 = vst [vmem:[#allocation3 + $0x320] sm:$0xf] %v3286
  %3316 = vst [vmem:[#allocation3 + $0x328] sm:$0xf] %v3287
  %3317 = vst [vmem:[#allocation3 + $0x330] sm:$0xf] %v3288
  %3318 = vst [vmem:[#allocation3 + $0x338] sm:$0xf] %v3289
  %3319 = vst [vmem:[#allocation3 + $0x340] sm:$0xf] %v3290
  %3320 = vst [vmem:[#allocation3 + $0x348] sm:$0xf] %v3291
  %3321 = vst [vmem:[#allocation3 + $0x350] sm:$0xf] %v3292
  %3322 = vst [vmem:[#allocation3 + $0x358] sm:$0xf] %v3293
  %3323 = vst [vmem:[#allocation3 + $0x360] sm:$0xf] %v3294
  %3324 = vst.msk [vmem:[#allocation3 + $0x368] sm:$0xf] %vm2700, %v3285
  %3325 = vrot.lane.b32.xlu0 %v2704, 112
  %v3326 = vpop.permute.xlu0 %3325
  %3327 = vrot.lane.b32.xlu0 %v2705, 112
  %v3328 = vpop.permute.xlu0 %3327
  %3329 = vrot.lane.b32.xlu0 %v2706, 112
  %v3330 = vpop.permute.xlu0 %3329
  %3331 = vrot.lane.b32.xlu0 %v2707, 112
  %v3332 = vpop.permute.xlu0 %3331
  %3333 = vrot.lane.b32.xlu0 %v2708, 112
  %v3334 = vpop.permute.xlu0 %3333
  %3335 = vrot.lane.b32.xlu0 %v2709, 112
  %v3336 = vpop.permute.xlu0 %3335
  %3337 = vrot.lane.b32.xlu0 %v2710, 112
  %v3338 = vpop.permute.xlu0 %3337
  %3339 = vrot.lane.b32.xlu0 %v2711, 112
  %v3340 = vpop.permute.xlu0 %3339
  %3341 = vrot.lane.b32.xlu0 %v2916, 112
  %v3342 = vpop.permute.xlu0 %3341
  %3343 = vrot.lane.b32.xlu0 %v3135, 112
  %v3344 = vpop.permute.xlu0 %3343
  %v3345 = vsel %vm2854, %v3326, %v3328
  %v3346 = vsel %vm2854, %v3328, %v3330
  %v3347 = vsel %vm2854, %v3330, %v3332
  %v3348 = vsel %vm2854, %v3332, %v3334
  %v3349 = vsel %vm2854, %v3334, %v3336
  %v3350 = vsel %vm2854, %v3336, %v3338
  %v3351 = vsel %vm2854, %v3338, %v3340
  %v3352 = vsel %vm2854, %v3340, %v3342
  %v3353 = vsel %vm2854, %v3342, %v3344
  %3364 = vst [vmem:[#allocation3 + $0x320] sm:$0xf0] %v3345
  %3365 = vst [vmem:[#allocation3 + $0x328] sm:$0xf0] %v3346
  %3366 = vst [vmem:[#allocation3 + $0x330] sm:$0xf0] %v3347
  %3367 = vst [vmem:[#allocation3 + $0x338] sm:$0xf0] %v3348
  %3368 = vst [vmem:[#allocation3 + $0x340] sm:$0xf0] %v3349
  %3369 = vst [vmem:[#allocation3 + $0x348] sm:$0xf0] %v3350
  %3370 = vst [vmem:[#allocation3 + $0x350] sm:$0xf0] %v3351
  %3371 = vst [vmem:[#allocation3 + $0x358] sm:$0xf0] %v3352
  %3372 = vst [vmem:[#allocation3 + $0x360] sm:$0xf0] %v3353
  %3373 = vst.msk [vmem:[#allocation3 + $0x368] sm:$0xf0] %vm2760, %v3344
  %3374 = vst [vmem:[#allocation3 + $0x370] sm:$0x3] %v3345
  %3375 = vst [vmem:[#allocation3 + $0x378] sm:$0x3] %v3346
  %3376 = vst [vmem:[#allocation3 + $0x380] sm:$0x3] %v3347
  %3377 = vst [vmem:[#allocation3 + $0x388] sm:$0x3] %v3348
  %3378 = vst [vmem:[#allocation3 + $0x390] sm:$0x3] %v3349
  %3379 = vst [vmem:[#allocation3 + $0x398] sm:$0x3] %v3350
  %3380 = vst [vmem:[#allocation3 + $0x3a0] sm:$0x3] %v3351
  %3381 = vst [vmem:[#allocation3 + $0x3a8] sm:$0x3] %v3352
  %3382 = vst [vmem:[#allocation3 + $0x3b0] sm:$0x3] %v3353
  %3383 = vst.msk [vmem:[#allocation3 + $0x3b8] sm:$0x3] %vm2771, %v3344
  %v3385 = vrot.slane %v2608, 6
  %3396 = vst [vmem:[#allocation3 + $0x370] sm:$0xfc] %v2776
  %3397 = vst [vmem:[#allocation3 + $0x378] sm:$0xfc] %v2777
  %3398 = vst [vmem:[#allocation3 + $0x380] sm:$0xfc] %v2778
  %3399 = vst [vmem:[#allocation3 + $0x388] sm:$0xfc] %v2779
  %3400 = vst [vmem:[#allocation3 + $0x390] sm:$0xfc] %v2780
  %3401 = vst [vmem:[#allocation3 + $0x398] sm:$0xfc] %v2781
  %3402 = vst [vmem:[#allocation3 + $0x3a0] sm:$0xfc] %v2782
  %3403 = vst [vmem:[#allocation3 + $0x3a8] sm:$0xfc] %v2976
  %3404 = vst [vmem:[#allocation3 + $0x3b0] sm:$0xfc] %v3166
  %3405 = vst.msk [vmem:[#allocation3 + $0x3b8] sm:$0xfc] %vm2832, %v3385
  %3406 = vrot.lane.b32.xlu0 %v2599, 124
  %v3407 = vpop.permute.xlu0 %3406
  %3408 = vrot.lane.b32.xlu0 %v2600, 124
  %v3409 = vpop.permute.xlu0 %3408
  %3410 = vrot.lane.b32.xlu0 %v2601, 124
  %v3411 = vpop.permute.xlu0 %3410
  %3412 = vrot.lane.b32.xlu0 %v2602, 124
  %v3413 = vpop.permute.xlu0 %3412
  %3414 = vrot.lane.b32.xlu0 %v2603, 124
  %v3415 = vpop.permute.xlu0 %3414
  %3416 = vrot.lane.b32.xlu0 %v2604, 124
  %v3417 = vpop.permute.xlu0 %3416
  %3418 = vrot.lane.b32.xlu0 %v2605, 124
  %v3419 = vpop.permute.xlu0 %3418
  %3420 = vrot.lane.b32.xlu0 %v2606, 124
  %v3421 = vpop.permute.xlu0 %3420
  %3422 = vrot.lane.b32.xlu0 %v2607, 124
  %v3423 = vpop.permute.xlu0 %3422
  %3424 = vrot.lane.b32.xlu0 %v2608, 124
  %v3425 = vpop.permute.xlu0 %3424
  %v3426 = vsel %vm210, %v3407, %v3409
  %v3427 = vsel %vm210, %v3409, %v3411
  %v3428 = vsel %vm210, %v3411, %v3413
  %v3429 = vsel %vm210, %v3413, %v3415
  %v3430 = vsel %vm210, %v3415, %v3417
  %v3431 = vsel %vm210, %v3417, %v3419
  %v3432 = vsel %vm210, %v3419, %v3421
  %v3433 = vsel %vm210, %v3421, %v3423
  %v3434 = vsel %vm210, %v3423, %v3425
  %3445 = vst [vmem:[#allocation3 + $0x3c0] sm:$0x3f] %v3426
  %3446 = vst [vmem:[#allocation3 + $0x3c8] sm:$0x3f] %v3427
  %3447 = vst [vmem:[#allocation3 + $0x3d0] sm:$0x3f] %v3428
  %3448 = vst [vmem:[#allocation3 + $0x3d8] sm:$0x3f] %v3429
  %3449 = vst [vmem:[#allocation3 + $0x3e0] sm:$0x3f] %v3430
  %3450 = vst [vmem:[#allocation3 + $0x3e8] sm:$0x3f] %v3431
  %3451 = vst [vmem:[#allocation3 + $0x3f0] sm:$0x3f] %v3432
  %3452 = vst [vmem:[#allocation3 + $0x3f8] sm:$0x3f] %v3433
  %3453 = vst [vmem:[#allocation3 + $0x400] sm:$0x3f] %v3434
  %3454 = vst.msk [vmem:[#allocation3 + $0x408] sm:$0x3f] %vm2619, %v3425
  %v3455 = vrot.slane %v2608, 2
  %3456 = vrot.lane.b32.xlu0 %v2634, 120
  %v3457 = vpop.permute.xlu0 %3456
  %3458 = vrot.lane.b32.xlu0 %v2635, 120
  %v3459 = vpop.permute.xlu0 %3458
  %3460 = vrot.lane.b32.xlu0 %v2636, 120
  %v3461 = vpop.permute.xlu0 %3460
  %3462 = vrot.lane.b32.xlu0 %v2637, 120
  %v3463 = vpop.permute.xlu0 %3462
  %3464 = vrot.lane.b32.xlu0 %v2638, 120
  %v3465 = vpop.permute.xlu0 %3464
  %3466 = vrot.lane.b32.xlu0 %v2639, 120
  %v3467 = vpop.permute.xlu0 %3466
  %3468 = vrot.lane.b32.xlu0 %v2640, 120
  %v3469 = vpop.permute.xlu0 %3468
  %3470 = vrot.lane.b32.xlu0 %v2885, 120
  %v3471 = vpop.permute.xlu0 %3470
  %3472 = vrot.lane.b32.xlu0 %v3265, 120
  %v3473 = vpop.permute.xlu0 %3472
  %3474 = vrot.lane.b32.xlu0 %v3455, 120
  %v3475 = vpop.permute.xlu0 %3474
  %v3476 = vsel %vm388, %v3457, %v3459
  %v3477 = vsel %vm388, %v3459, %v3461
  %v3478 = vsel %vm388, %v3461, %v3463
  %v3479 = vsel %vm388, %v3463, %v3465
  %v3480 = vsel %vm388, %v3465, %v3467
  %v3481 = vsel %vm388, %v3467, %v3469
  %v3482 = vsel %vm388, %v3469, %v3471
  %v3483 = vsel %vm388, %v3471, %v3473
  %v3484 = vsel %vm388, %v3473, %v3475
  %3495 = vst [vmem:[#allocation3 + $0x3c0] sm:$0xc0] %v3476
  %3496 = vst [vmem:[#allocation3 + $0x3c8] sm:$0xc0] %v3477
  %3497 = vst [vmem:[#allocation3 + $0x3d0] sm:$0xc0] %v3478
  %3498 = vst [vmem:[#allocation3 + $0x3d8] sm:$0xc0] %v3479
  %3499 = vst [vmem:[#allocation3 + $0x3e0] sm:$0xc0] %v3480
  %3500 = vst [vmem:[#allocation3 + $0x3e8] sm:$0xc0] %v3481
  %3501 = vst [vmem:[#allocation3 + $0x3f0] sm:$0xc0] %v3482
  %3502 = vst [vmem:[#allocation3 + $0x3f8] sm:$0xc0] %v3483
  %3503 = vst [vmem:[#allocation3 + $0x400] sm:$0xc0] %v3484
  %3504 = vst.msk [vmem:[#allocation3 + $0x408] sm:$0xc0] %vm2689, %v3475
  %3505 = vst [vmem:[#allocation3 + $0x410] sm:$0xf] %v3476
  %3506 = vst [vmem:[#allocation3 + $0x418] sm:$0xf] %v3477
  %3507 = vst [vmem:[#allocation3 + $0x420] sm:$0xf] %v3478
  %3508 = vst [vmem:[#allocation3 + $0x428] sm:$0xf] %v3479
  %3509 = vst [vmem:[#allocation3 + $0x430] sm:$0xf] %v3480
  %3510 = vst [vmem:[#allocation3 + $0x438] sm:$0xf] %v3481
  %3511 = vst [vmem:[#allocation3 + $0x440] sm:$0xf] %v3482
  %3512 = vst [vmem:[#allocation3 + $0x448] sm:$0xf] %v3483
  %3513 = vst [vmem:[#allocation3 + $0x450] sm:$0xf] %v3484
  %3514 = vst.msk [vmem:[#allocation3 + $0x458] sm:$0xf] %vm2700, %v3475
  %v3515 = vrot.slane %v2608, 4
  %3516 = vrot.lane.b32.xlu0 %v2705, 116
  %v3517 = vpop.permute.xlu0 %3516
  %3518 = vrot.lane.b32.xlu0 %v2706, 116
  %v3519 = vpop.permute.xlu0 %3518
  %3520 = vrot.lane.b32.xlu0 %v2707, 116
  %v3521 = vpop.permute.xlu0 %3520
  %3522 = vrot.lane.b32.xlu0 %v2708, 116
  %v3523 = vpop.permute.xlu0 %3522
  %3524 = vrot.lane.b32.xlu0 %v2709, 116
  %v3525 = vpop.permute.xlu0 %3524
  %3526 = vrot.lane.b32.xlu0 %v2710, 116
  %v3527 = vpop.permute.xlu0 %3526
  %3528 = vrot.lane.b32.xlu0 %v2711, 116
  %v3529 = vpop.permute.xlu0 %3528
  %3530 = vrot.lane.b32.xlu0 %v2916, 116
  %v3531 = vpop.permute.xlu0 %3530
  %3532 = vrot.lane.b32.xlu0 %v3135, 116
  %v3533 = vpop.permute.xlu0 %3532
  %3534 = vrot.lane.b32.xlu0 %v3515, 116
  %v3535 = vpop.permute.xlu0 %3534
  %v3536 = vsel %vm2803, %v3517, %v3519
  %v3537 = vsel %vm2803, %v3519, %v3521
  %v3538 = vsel %vm2803, %v3521, %v3523
  %v3539 = vsel %vm2803, %v3523, %v3525
  %v3540 = vsel %vm2803, %v3525, %v3527
  %v3541 = vsel %vm2803, %v3527, %v3529
  %v3542 = vsel %vm2803, %v3529, %v3531
  %v3543 = vsel %vm2803, %v3531, %v3533
  %v3544 = vsel %vm2803, %v3533, %v3535
  %3555 = vst [vmem:[#allocation3 + $0x410] sm:$0xf0] %v3536
  %3556 = vst [vmem:[#allocation3 + $0x418] sm:$0xf0] %v3537
  %3557 = vst [vmem:[#allocation3 + $0x420] sm:$0xf0] %v3538
  %3558 = vst [vmem:[#allocation3 + $0x428] sm:$0xf0] %v3539
  %3559 = vst [vmem:[#allocation3 + $0x430] sm:$0xf0] %v3540
  %3560 = vst [vmem:[#allocation3 + $0x438] sm:$0xf0] %v3541
  %3561 = vst [vmem:[#allocation3 + $0x440] sm:$0xf0] %v3542
  %3562 = vst [vmem:[#allocation3 + $0x448] sm:$0xf0] %v3543
  %3563 = vst [vmem:[#allocation3 + $0x450] sm:$0xf0] %v3544
  %3564 = vst.msk [vmem:[#allocation3 + $0x458] sm:$0xf0] %vm2760, %v3535
  %3565 = vst [vmem:[#allocation3 + $0x460] sm:$0x3] %v3536
  %3566 = vst [vmem:[#allocation3 + $0x468] sm:$0x3] %v3537
  %3567 = vst [vmem:[#allocation3 + $0x470] sm:$0x3] %v3538
  %3568 = vst [vmem:[#allocation3 + $0x478] sm:$0x3] %v3539
  %3569 = vst [vmem:[#allocation3 + $0x480] sm:$0x3] %v3540
  %3570 = vst [vmem:[#allocation3 + $0x488] sm:$0x3] %v3541
  %3571 = vst [vmem:[#allocation3 + $0x490] sm:$0x3] %v3542
  %3572 = vst [vmem:[#allocation3 + $0x498] sm:$0x3] %v3543
  %3573 = vst [vmem:[#allocation3 + $0x4a0] sm:$0x3] %v3544
  %3574 = vst.msk [vmem:[#allocation3 + $0x4a8] sm:$0x3] %vm2771, %v3535
  %3575 = vrot.lane.b32.xlu0 %v2776, 112
  %v3576 = vpop.permute.xlu0 %3575
  %3577 = vrot.lane.b32.xlu0 %v2777, 112
  %v3578 = vpop.permute.xlu0 %3577
  %3579 = vrot.lane.b32.xlu0 %v2778, 112
  %v3580 = vpop.permute.xlu0 %3579
  %3581 = vrot.lane.b32.xlu0 %v2779, 112
  %v3582 = vpop.permute.xlu0 %3581
  %3583 = vrot.lane.b32.xlu0 %v2780, 112
  %v3584 = vpop.permute.xlu0 %3583
  %3585 = vrot.lane.b32.xlu0 %v2781, 112
  %v3586 = vpop.permute.xlu0 %3585
  %3587 = vrot.lane.b32.xlu0 %v2782, 112
  %v3588 = vpop.permute.xlu0 %3587
  %3589 = vrot.lane.b32.xlu0 %v2976, 112
  %v3590 = vpop.permute.xlu0 %3589
  %3591 = vrot.lane.b32.xlu0 %v3166, 112
  %v3592 = vpop.permute.xlu0 %3591
  %3593 = vrot.lane.b32.xlu0 %v3385, 112
  %v3594 = vpop.permute.xlu0 %3593
  %v3595 = vsel %vm2854, %v3576, %v3578
  %v3596 = vsel %vm2854, %v3578, %v3580
  %v3597 = vsel %vm2854, %v3580, %v3582
  %v3598 = vsel %vm2854, %v3582, %v3584
  %v3599 = vsel %vm2854, %v3584, %v3586
  %v3600 = vsel %vm2854, %v3586, %v3588
  %v3601 = vsel %vm2854, %v3588, %v3590
  %v3602 = vsel %vm2854, %v3590, %v3592
  %v3603 = vsel %vm2854, %v3592, %v3594
  %3614 = vst [vmem:[#allocation3 + $0x460] sm:$0xfc] %v3595
  %3615 = vst [vmem:[#allocation3 + $0x468] sm:$0xfc] %v3596
  %3616 = vst [vmem:[#allocation3 + $0x470] sm:$0xfc] %v3597
  %3617 = vst [vmem:[#allocation3 + $0x478] sm:$0xfc] %v3598
  %3618 = vst [vmem:[#allocation3 + $0x480] sm:$0xfc] %v3599
  %3619 = vst [vmem:[#allocation3 + $0x488] sm:$0xfc] %v3600
  %3620 = vst [vmem:[#allocation3 + $0x490] sm:$0xfc] %v3601
  %3621 = vst [vmem:[#allocation3 + $0x498] sm:$0xfc] %v3602
  %3622 = vst [vmem:[#allocation3 + $0x4a0] sm:$0xfc] %v3603
  %3623 = vst.msk [vmem:[#allocation3 + $0x4a8] sm:$0xfc] %vm2832, %v3594
  %3624 = vst [vmem:[#allocation3 + $0x4b0] sm:$0x3f] %v2600
  %3625 = vst [vmem:[#allocation3 + $0x4b8] sm:$0x3f] %v2601
  %3626 = vst [vmem:[#allocation3 + $0x4c0] sm:$0x3f] %v2602
  %3627 = vst [vmem:[#allocation3 + $0x4c8] sm:$0x3f] %v2603
  %3628 = vst [vmem:[#allocation3 + $0x4d0] sm:$0x3f] %v2604
  %3629 = vst [vmem:[#allocation3 + $0x4d8] sm:$0x3f] %v2605
  %3630 = vst [vmem:[#allocation3 + $0x4e0] sm:$0x3f] %v2606
  %3631 = vst [vmem:[#allocation3 + $0x4e8] sm:$0x3f] %v2607
  %3632 = vst [vmem:[#allocation3 + $0x4f0] sm:$0x3f] %v2608
  %3633 = vst.msk [vmem:[#allocation3 + $0x4f8] sm:$0x3f] %vm2619, %v2609
  %v3635 = vrot.slane %v2609, 2
  %3636 = vrot.lane.b32.xlu0 %v2885, 124
  %v3637 = vpop.permute.xlu0 %3636
  %3638 = vrot.lane.b32.xlu0 %v3265, 124
  %v3639 = vpop.permute.xlu0 %3638
  %3640 = vrot.lane.b32.xlu0 %v3455, 124
  %v3641 = vpop.permute.xlu0 %3640
  %3642 = vrot.lane.b32.xlu0 %v3635, 124
  %v3643 = vpop.permute.xlu0 %3642
  %v3644 = vsel %vm210, %v2660, %v3637
  %v3645 = vsel %vm210, %v3637, %v3639
  %v3646 = vsel %vm210, %v3639, %v3641
  %v3647 = vsel %vm210, %v3641, %v3643
  %3653 = vst [vmem:[#allocation3 + $0x4b0] sm:$0xc0] %v2665
  %3654 = vst [vmem:[#allocation3 + $0x4b8] sm:$0xc0] %v2666
  %3655 = vst [vmem:[#allocation3 + $0x4c0] sm:$0xc0] %v2667
  %3656 = vst [vmem:[#allocation3 + $0x4c8] sm:$0xc0] %v2668
  %3657 = vst [vmem:[#allocation3 + $0x4d0] sm:$0xc0] %v2669
  %3658 = vst [vmem:[#allocation3 + $0x4d8] sm:$0xc0] %v3644
  %3659 = vst [vmem:[#allocation3 + $0x4e0] sm:$0xc0] %v3645
  %3660 = vst [vmem:[#allocation3 + $0x4e8] sm:$0xc0] %v3646
  %3661 = vst [vmem:[#allocation3 + $0x4f0] sm:$0xc0] %v3647
  %3662 = vst.msk [vmem:[#allocation3 + $0x4f8] sm:$0xc0] %vm2689, %v3643
  %3663 = vst [vmem:[#allocation3 + $0x500] sm:$0xf] %v2665
  %3664 = vst [vmem:[#allocation3 + $0x508] sm:$0xf] %v2666
  %3665 = vst [vmem:[#allocation3 + $0x510] sm:$0xf] %v2667
  %3666 = vst [vmem:[#allocation3 + $0x518] sm:$0xf] %v2668
  %3667 = vst [vmem:[#allocation3 + $0x520] sm:$0xf] %v2669
  %3668 = vst [vmem:[#allocation3 + $0x528] sm:$0xf] %v3644
  %3669 = vst [vmem:[#allocation3 + $0x530] sm:$0xf] %v3645
  %3670 = vst [vmem:[#allocation3 + $0x538] sm:$0xf] %v3646
  %3671 = vst [vmem:[#allocation3 + $0x540] sm:$0xf] %v3647
  %3672 = vst.msk [vmem:[#allocation3 + $0x548] sm:$0xf] %vm2700, %v3643
  %v3673 = vrot.slane %v2609, 4
  %3674 = vrot.lane.b32.xlu0 %v2916, 120
  %v3675 = vpop.permute.xlu0 %3674
  %3676 = vrot.lane.b32.xlu0 %v3135, 120
  %v3677 = vpop.permute.xlu0 %3676
  %3678 = vrot.lane.b32.xlu0 %v3515, 120
  %v3679 = vpop.permute.xlu0 %3678
  %3680 = vrot.lane.b32.xlu0 %v3673, 120
  %v3681 = vpop.permute.xlu0 %3680
  %v3682 = vsel %vm388, %v2731, %v3675
  %v3683 = vsel %vm388, %v3675, %v3677
  %v3684 = vsel %vm388, %v3677, %v3679
  %v3685 = vsel %vm388, %v3679, %v3681
  %3691 = vst [vmem:[#allocation3 + $0x500] sm:$0xf0] %v2736
  %3692 = vst [vmem:[#allocation3 + $0x508] sm:$0xf0] %v2737
  %3693 = vst [vmem:[#allocation3 + $0x510] sm:$0xf0] %v2738
  %3694 = vst [vmem:[#allocation3 + $0x518] sm:$0xf0] %v2739
  %3695 = vst [vmem:[#allocation3 + $0x520] sm:$0xf0] %v2740
  %3696 = vst [vmem:[#allocation3 + $0x528] sm:$0xf0] %v3682
  %3697 = vst [vmem:[#allocation3 + $0x530] sm:$0xf0] %v3683
  %3698 = vst [vmem:[#allocation3 + $0x538] sm:$0xf0] %v3684
  %3699 = vst [vmem:[#allocation3 + $0x540] sm:$0xf0] %v3685
  %3700 = vst.msk [vmem:[#allocation3 + $0x548] sm:$0xf0] %vm2760, %v3681
  %3701 = vst [vmem:[#allocation3 + $0x550] sm:$0x3] %v2736
  %3702 = vst [vmem:[#allocation3 + $0x558] sm:$0x3] %v2737
  %3703 = vst [vmem:[#allocation3 + $0x560] sm:$0x3] %v2738
  %3704 = vst [vmem:[#allocation3 + $0x568] sm:$0x3] %v2739
  %3705 = vst [vmem:[#allocation3 + $0x570] sm:$0x3] %v2740
  %3706 = vst [vmem:[#allocation3 + $0x578] sm:$0x3] %v3682
  %3707 = vst [vmem:[#allocation3 + $0x580] sm:$0x3] %v3683
  %3708 = vst [vmem:[#allocation3 + $0x588] sm:$0x3] %v3684
  %3709 = vst [vmem:[#allocation3 + $0x590] sm:$0x3] %v3685
  %3710 = vst.msk [vmem:[#allocation3 + $0x598] sm:$0x3] %vm2771, %v3681
  %v3711 = vrot.slane %v2609, 6
  %3712 = vrot.lane.b32.xlu0 %v2976, 116
  %v3713 = vpop.permute.xlu0 %3712
  %3714 = vrot.lane.b32.xlu0 %v3166, 116
  %v3715 = vpop.permute.xlu0 %3714
  %3716 = vrot.lane.b32.xlu0 %v3385, 116
  %v3717 = vpop.permute.xlu0 %3716
  %3718 = vrot.lane.b32.xlu0 %v3711, 116
  %v3719 = vpop.permute.xlu0 %3718
  %v3720 = vsel %vm2803, %v2802, %v3713
  %v3721 = vsel %vm2803, %v3713, %v3715
  %v3722 = vsel %vm2803, %v3715, %v3717
  %v3723 = vsel %vm2803, %v3717, %v3719
  %3729 = vst [vmem:[#allocation3 + $0x550] sm:$0xfc] %v2808
  %3730 = vst [vmem:[#allocation3 + $0x558] sm:$0xfc] %v2809
  %3731 = vst [vmem:[#allocation3 + $0x560] sm:$0xfc] %v2810
  %3732 = vst [vmem:[#allocation3 + $0x568] sm:$0xfc] %v2811
  %3733 = vst [vmem:[#allocation3 + $0x570] sm:$0xfc] %v2812
  %3734 = vst [vmem:[#allocation3 + $0x578] sm:$0xfc] %v3720
  %3735 = vst [vmem:[#allocation3 + $0x580] sm:$0xfc] %v3721
  %3736 = vst [vmem:[#allocation3 + $0x588] sm:$0xfc] %v3722
  %3737 = vst [vmem:[#allocation3 + $0x590] sm:$0xfc] %v3723
  %3738 = vst.msk [vmem:[#allocation3 + $0x598] sm:$0xfc] %vm2832, %v3719
  %3739 = vrot.lane.b32.xlu0 %v2606, 112
  %v3740 = vpop.permute.xlu0 %3739
  %3741 = vrot.lane.b32.xlu0 %v2607, 112
  %v3742 = vpop.permute.xlu0 %3741
  %3743 = vrot.lane.b32.xlu0 %v2608, 112
  %v3744 = vpop.permute.xlu0 %3743
  %3745 = vrot.lane.b32.xlu0 %v2609, 112
  %v3746 = vpop.permute.xlu0 %3745
  %v3747 = vsel %vm2854, %v2853, %v3740
  %v3748 = vsel %vm2854, %v3740, %v3742
  %v3749 = vsel %vm2854, %v3742, %v3744
  %v3750 = vsel %vm2854, %v3744, %v3746
  %3756 = vst [vmem:[#allocation3 + $0x5a0] sm:$0x3f] %v2859
  %3757 = vst [vmem:[#allocation3 + $0x5a8] sm:$0x3f] %v2860
  %3758 = vst [vmem:[#allocation3 + $0x5b0] sm:$0x3f] %v2861
  %3759 = vst [vmem:[#allocation3 + $0x5b8] sm:$0x3f] %v2862
  %3760 = vst [vmem:[#allocation3 + $0x5c0] sm:$0x3f] %v2863
  %3761 = vst [vmem:[#allocation3 + $0x5c8] sm:$0x3f] %v3747
  %3762 = vst [vmem:[#allocation3 + $0x5d0] sm:$0x3f] %v3748
  %3763 = vst [vmem:[#allocation3 + $0x5d8] sm:$0x3f] %v3749
  %3764 = vst [vmem:[#allocation3 + $0x5e0] sm:$0x3f] %v3750
  %3765 = vst.msk [vmem:[#allocation3 + $0x5e8] sm:$0x3f] %vm2619, %v3746
  %v3766 = vld [vmem:[#allocation3] sm:$0xff]
  %v3767 = vld [vmem:[#allocation3 + $0x8] sm:$0xff]
  %v3768 = vld [vmem:[#allocation3 + $0x10] sm:$0xff]
  %v3769 = vld [vmem:[#allocation3 + $0x18] sm:$0xff]
  %v3770 = vld [vmem:[#allocation3 + $0x20] sm:$0xff]
  %v3771 = vld [vmem:[#allocation3 + $0x28] sm:$0xff]
  %v3772 = vld [vmem:[#allocation3 + $0x30] sm:$0xff]
  %v3773 = vld [vmem:[#allocation3 + $0x38] sm:$0xff]
  %v3774 = vld [vmem:[#allocation3 + $0x40] sm:$0xff]
  %v3775 = vld [vmem:[#allocation3 + $0x48] sm:$0xff]
  %v3776 = vld [vmem:[#allocation3 + $0x50] sm:$0xff]
  %v3777 = vld [vmem:[#allocation3 + $0x58] sm:$0xff]
  %v3778 = vld [vmem:[#allocation3 + $0x60] sm:$0xff]
  %v3779 = vld [vmem:[#allocation3 + $0x68] sm:$0xff]
  %v3780 = vld [vmem:[#allocation3 + $0x70] sm:$0xff]
  %v3781 = vld [vmem:[#allocation3 + $0x78] sm:$0xff]
  %v3782 = vld [vmem:[#allocation3 + $0x80] sm:$0xff]
  %v3783 = vld [vmem:[#allocation3 + $0x88] sm:$0xff]
  %v3784 = vld [vmem:[#allocation3 + $0x90] sm:$0xff]
  %v3785 = vld [vmem:[#allocation3 + $0x98] sm:$0xff]
  %v3786 = vld [vmem:[#allocation3 + $0xa0] sm:$0xff]
  %v3787 = vld [vmem:[#allocation3 + $0xa8] sm:$0xff]
  %v3788 = vld [vmem:[#allocation3 + $0xb0] sm:$0xff]
  %v3789 = vld [vmem:[#allocation3 + $0xb8] sm:$0xff]
  %v3790 = vld [vmem:[#allocation3 + $0xc0] sm:$0xff]
  %v3791 = vld [vmem:[#allocation3 + $0xc8] sm:$0xff]
  %v3792 = vld [vmem:[#allocation3 + $0xd0] sm:$0xff]
  %v3793 = vld [vmem:[#allocation3 + $0xd8] sm:$0xff]
  %v3794 = vld [vmem:[#allocation3 + $0xe0] sm:$0xff]
  %v3795 = vld [vmem:[#allocation3 + $0xe8] sm:$0xff]
  %v3796 = vld [vmem:[#allocation3 + $0xf0] sm:$0xff]
  %v3797 = vld [vmem:[#allocation3 + $0xf8] sm:$0xff]
  %v3798 = vld [vmem:[#allocation3 + $0x100] sm:$0xff]
  %v3799 = vld [vmem:[#allocation3 + $0x108] sm:$0xff]
  %v3800 = vld [vmem:[#allocation3 + $0x110] sm:$0xff]
  %v3801 = vld [vmem:[#allocation3 + $0x118] sm:$0xff]
  %v3802 = vld [vmem:[#allocation3 + $0x120] sm:$0xff]
  %v3803 = vld [vmem:[#allocation3 + $0x128] sm:$0xff]
  %v3804 = vld [vmem:[#allocation3 + $0x130] sm:$0xff]
  %v3805 = vld [vmem:[#allocation3 + $0x138] sm:$0xff]
  %v3806 = vld [vmem:[#allocation3 + $0x140] sm:$0xff]
  %v3807 = vld [vmem:[#allocation3 + $0x148] sm:$0xff]
  %v3808 = vld [vmem:[#allocation3 + $0x150] sm:$0xff]
  %v3809 = vld [vmem:[#allocation3 + $0x158] sm:$0xff]
  %v3810 = vld [vmem:[#allocation3 + $0x160] sm:$0xff]
  %v3811 = vld [vmem:[#allocation3 + $0x168] sm:$0xff]
  %v3812 = vld [vmem:[#allocation3 + $0x170] sm:$0xff]
  %v3813 = vld [vmem:[#allocation3 + $0x178] sm:$0xff]
  %v3814 = vld [vmem:[#allocation3 + $0x180] sm:$0xff]
  %v3815 = vld [vmem:[#allocation3 + $0x188] sm:$0xff]
  %v3816 = vld [vmem:[#allocation3 + $0x190] sm:$0xff]
  %v3817 = vld [vmem:[#allocation3 + $0x198] sm:$0xff]
  %v3818 = vld [vmem:[#allocation3 + $0x1a0] sm:$0xff]
  %v3819 = vld [vmem:[#allocation3 + $0x1a8] sm:$0xff]
  %v3820 = vld [vmem:[#allocation3 + $0x1b0] sm:$0xff]
  %v3821 = vld [vmem:[#allocation3 + $0x1b8] sm:$0xff]
  %v3822 = vld [vmem:[#allocation3 + $0x1c0] sm:$0xff]
  %v3823 = vld [vmem:[#allocation3 + $0x1c8] sm:$0xff]
  %v3824 = vld [vmem:[#allocation3 + $0x1d0] sm:$0xff]
  %v3825 = vld [vmem:[#allocation3 + $0x1d8] sm:$0xff]
  %v3826 = vld [vmem:[#allocation3 + $0x1e0] sm:$0xff]
  %v3827 = vld [vmem:[#allocation3 + $0x1e8] sm:$0xff]
  %v3828 = vld [vmem:[#allocation3 + $0x1f0] sm:$0xff]
  %v3829 = vld [vmem:[#allocation3 + $0x1f8] sm:$0xff]
  %v3830 = vld [vmem:[#allocation3 + $0x200] sm:$0xff]
  %v3831 = vld [vmem:[#allocation3 + $0x208] sm:$0xff]
  %v3832 = vld [vmem:[#allocation3 + $0x210] sm:$0xff]
  %v3833 = vld [vmem:[#allocation3 + $0x218] sm:$0xff]
  %v3834 = vld [vmem:[#allocation3 + $0x220] sm:$0xff]
  %v3835 = vld [vmem:[#allocation3 + $0x228] sm:$0xff]
  %v3836 = vld [vmem:[#allocation3 + $0x230] sm:$0xff]
  %v3837 = vld [vmem:[#allocation3 + $0x238] sm:$0xff]
  %v3838 = vld [vmem:[#allocation3 + $0x240] sm:$0xff]
  %v3839 = vld [vmem:[#allocation3 + $0x248] sm:$0xff]
  %v3840 = vld [vmem:[#allocation3 + $0x250] sm:$0xff]
  %v3841 = vld [vmem:[#allocation3 + $0x258] sm:$0xff]
  %v3842 = vld [vmem:[#allocation3 + $0x260] sm:$0xff]
  %v3843 = vld [vmem:[#allocation3 + $0x268] sm:$0xff]
  %v3844 = vld [vmem:[#allocation3 + $0x270] sm:$0xff]
  %v3845 = vld [vmem:[#allocation3 + $0x278] sm:$0xff]
  %v3846 = vld [vmem:[#allocation3 + $0x280] sm:$0xff]
  %v3847 = vld [vmem:[#allocation3 + $0x288] sm:$0xff]
  %v3848 = vld [vmem:[#allocation3 + $0x290] sm:$0xff]
  %v3849 = vld [vmem:[#allocation3 + $0x298] sm:$0xff]
  %v3850 = vld [vmem:[#allocation3 + $0x2a0] sm:$0xff]
  %v3851 = vld [vmem:[#allocation3 + $0x2a8] sm:$0xff]
  %v3852 = vld [vmem:[#allocation3 + $0x2b0] sm:$0xff]
  %v3853 = vld [vmem:[#allocation3 + $0x2b8] sm:$0xff]
  %v3854 = vld [vmem:[#allocation3 + $0x2c0] sm:$0xff]
  %v3855 = vld [vmem:[#allocation3 + $0x2c8] sm:$0xff]
  %v3856 = vld [vmem:[#allocation3 + $0x2d0] sm:$0xff]
  %v3857 = vld [vmem:[#allocation3 + $0x2d8] sm:$0xff]
  %v3858 = vld [vmem:[#allocation3 + $0x2e0] sm:$0xff]
  %v3859 = vld [vmem:[#allocation3 + $0x2e8] sm:$0xff]
  %v3860 = vld [vmem:[#allocation3 + $0x2f0] sm:$0xff]
  %v3861 = vld [vmem:[#allocation3 + $0x2f8] sm:$0xff]
  %v3862 = vld [vmem:[#allocation3 + $0x300] sm:$0xff]
  %v3863 = vld [vmem:[#allocation3 + $0x308] sm:$0xff]
  %v3864 = vld [vmem:[#allocation3 + $0x310] sm:$0xff]
  %v3865 = vld [vmem:[#allocation3 + $0x318] sm:$0xff]
  %v3866 = vld [vmem:[#allocation3 + $0x320] sm:$0xff]
  %v3867 = vld [vmem:[#allocation3 + $0x328] sm:$0xff]
  %v3868 = vld [vmem:[#allocation3 + $0x330] sm:$0xff]
  %v3869 = vld [vmem:[#allocation3 + $0x338] sm:$0xff]
  %v3870 = vld [vmem:[#allocation3 + $0x340] sm:$0xff]
  %v3871 = vld [vmem:[#allocation3 + $0x348] sm:$0xff]
  %v3872 = vld [vmem:[#allocation3 + $0x350] sm:$0xff]
  %v3873 = vld [vmem:[#allocation3 + $0x358] sm:$0xff]
  %v3874 = vld [vmem:[#allocation3 + $0x360] sm:$0xff]
  %v3875 = vld [vmem:[#allocation3 + $0x368] sm:$0xff]
  %v3876 = vld [vmem:[#allocation3 + $0x370] sm:$0xff]
  %v3877 = vld [vmem:[#allocation3 + $0x378] sm:$0xff]
  %v3878 = vld [vmem:[#allocation3 + $0x380] sm:$0xff]
  %v3879 = vld [vmem:[#allocation3 + $0x388] sm:$0xff]
  %v3880 = vld [vmem:[#allocation3 + $0x390] sm:$0xff]
  %v3881 = vld [vmem:[#allocation3 + $0x398] sm:$0xff]
  %v3882 = vld [vmem:[#allocation3 + $0x3a0] sm:$0xff]
  %v3883 = vld [vmem:[#allocation3 + $0x3a8] sm:$0xff]
  %v3884 = vld [vmem:[#allocation3 + $0x3b0] sm:$0xff]
  %v3885 = vld [vmem:[#allocation3 + $0x3b8] sm:$0xff]
  %v3886 = vld [vmem:[#allocation3 + $0x3c0] sm:$0xff]
  %v3887 = vld [vmem:[#allocation3 + $0x3c8] sm:$0xff]
  %v3888 = vld [vmem:[#allocation3 + $0x3d0] sm:$0xff]
  %v3889 = vld [vmem:[#allocation3 + $0x3d8] sm:$0xff]
  %v3890 = vld [vmem:[#allocation3 + $0x3e0] sm:$0xff]
  %v3891 = vld [vmem:[#allocation3 + $0x3e8] sm:$0xff]
  %v3892 = vld [vmem:[#allocation3 + $0x3f0] sm:$0xff]
  %v3893 = vld [vmem:[#allocation3 + $0x3f8] sm:$0xff]
  %v3894 = vld [vmem:[#allocation3 + $0x400] sm:$0xff]
  %v3895 = vld [vmem:[#allocation3 + $0x408] sm:$0xff]
  %v3896 = vld [vmem:[#allocation3 + $0x410] sm:$0xff]
  %v3897 = vld [vmem:[#allocation3 + $0x418] sm:$0xff]
  %v3898 = vld [vmem:[#allocation3 + $0x420] sm:$0xff]
  %v3899 = vld [vmem:[#allocation3 + $0x428] sm:$0xff]
  %v3900 = vld [vmem:[#allocation3 + $0x430] sm:$0xff]
  %v3901 = vld [vmem:[#allocation3 + $0x438] sm:$0xff]
  %v3902 = vld [vmem:[#allocation3 + $0x440] sm:$0xff]
  %v3903 = vld [vmem:[#allocation3 + $0x448] sm:$0xff]
  %v3904 = vld [vmem:[#allocation3 + $0x450] sm:$0xff]
  %v3905 = vld [vmem:[#allocation3 + $0x458] sm:$0xff]
  %v3906 = vld [vmem:[#allocation3 + $0x460] sm:$0xff]
  %v3907 = vld [vmem:[#allocation3 + $0x468] sm:$0xff]
  %v3908 = vld [vmem:[#allocation3 + $0x470] sm:$0xff]
  %v3909 = vld [vmem:[#allocation3 + $0x478] sm:$0xff]
  %v3910 = vld [vmem:[#allocation3 + $0x480] sm:$0xff]
  %v3911 = vld [vmem:[#allocation3 + $0x488] sm:$0xff]
  %v3912 = vld [vmem:[#allocation3 + $0x490] sm:$0xff]
  %v3913 = vld [vmem:[#allocation3 + $0x498] sm:$0xff]
  %v3914 = vld [vmem:[#allocation3 + $0x4a0] sm:$0xff]
  %v3915 = vld [vmem:[#allocation3 + $0x4a8] sm:$0xff]
  %v3916 = vld [vmem:[#allocation3 + $0x4b0] sm:$0xff]
  %v3917 = vld [vmem:[#allocation3 + $0x4b8] sm:$0xff]
  %v3918 = vld [vmem:[#allocation3 + $0x4c0] sm:$0xff]
  %v3919 = vld [vmem:[#allocation3 + $0x4c8] sm:$0xff]
  %v3920 = vld [vmem:[#allocation3 + $0x4d0] sm:$0xff]
  %v3921 = vld [vmem:[#allocation3 + $0x4d8] sm:$0xff]
  %v3922 = vld [vmem:[#allocation3 + $0x4e0] sm:$0xff]
  %v3923 = vld [vmem:[#allocation3 + $0x4e8] sm:$0xff]
  %v3924 = vld [vmem:[#allocation3 + $0x4f0] sm:$0xff]
  %v3925 = vld [vmem:[#allocation3 + $0x4f8] sm:$0xff]
  %v3926 = vld [vmem:[#allocation3 + $0x500] sm:$0xff]
  %v3927 = vld [vmem:[#allocation3 + $0x508] sm:$0xff]
  %v3928 = vld [vmem:[#allocation3 + $0x510] sm:$0xff]
  %v3929 = vld [vmem:[#allocation3 + $0x518] sm:$0xff]
  %v3930 = vld [vmem:[#allocation3 + $0x520] sm:$0xff]
  %v3931 = vld [vmem:[#allocation3 + $0x528] sm:$0xff]
  %v3932 = vld [vmem:[#allocation3 + $0x530] sm:$0xff]
  %v3933 = vld [vmem:[#allocation3 + $0x538] sm:$0xff]
  %v3934 = vld [vmem:[#allocation3 + $0x540] sm:$0xff]
  %v3935 = vld [vmem:[#allocation3 + $0x548] sm:$0xff]
  %v3936 = vld [vmem:[#allocation3 + $0x550] sm:$0xff]
  %v3937 = vld [vmem:[#allocation3 + $0x558] sm:$0xff]
  %v3938 = vld [vmem:[#allocation3 + $0x560] sm:$0xff]
  %v3939 = vld [vmem:[#allocation3 + $0x568] sm:$0xff]
  %v3940 = vld [vmem:[#allocation3 + $0x570] sm:$0xff]
  %v3941 = vld [vmem:[#allocation3 + $0x578] sm:$0xff]
  %v3942 = vld [vmem:[#allocation3 + $0x580] sm:$0xff]
  %v3943 = vld [vmem:[#allocation3 + $0x588] sm:$0xff]
  %v3944 = vld [vmem:[#allocation3 + $0x590] sm:$0xff]
  %v3945 = vld [vmem:[#allocation3 + $0x598] sm:$0xff]
  %v3946 = vld [vmem:[#allocation3 + $0x5a0] sm:$0x3f]
  %v3947 = vld [vmem:[#allocation3 + $0x5a8] sm:$0x3f]
  %v3948 = vld [vmem:[#allocation3 + $0x5b0] sm:$0x3f]
  %v3949 = vld [vmem:[#allocation3 + $0x5b8] sm:$0x3f]
  %v3950 = vld [vmem:[#allocation3 + $0x5c0] sm:$0x3f]
  %v3951 = vld [vmem:[#allocation3 + $0x5c8] sm:$0x3f]
  %v3952 = vld [vmem:[#allocation3 + $0x5d0] sm:$0x3f]
  %v3953 = vld [vmem:[#allocation3 + $0x5d8] sm:$0x3f]
  %v3954 = vld [vmem:[#allocation3 + $0x5e0] sm:$0x3f]
  %v3955 = vld [vmem:[#allocation3 + $0x5e8] sm:$0x3f]
  %v3956 = vpack.c.bf16 %v3776, %v3766
  %v3957 = vpack.c.bf16 %v3777, %v3767
  %v3958 = vpack.c.bf16 %v3778, %v3768
  %v3959 = vpack.c.bf16 %v3779, %v3769
  %v3960 = vpack.c.bf16 %v3780, %v3770
  %v3961 = vpack.c.bf16 %v3781, %v3771
  %v3962 = vpack.c.bf16 %v3782, %v3772
  %v3963 = vpack.c.bf16 %v3783, %v3773
  %v3964 = vpack.c.bf16 %v3784, %v3774
  %v3965 = vpack.c.bf16 %v3785, %v3775
  %v3966 = vpack.c.bf16 %v3796, %v3786
  %v3967 = vpack.c.bf16 %v3797, %v3787
  %v3968 = vpack.c.bf16 %v3798, %v3788
  %v3969 = vpack.c.bf16 %v3799, %v3789
  %v3970 = vpack.c.bf16 %v3800, %v3790
  %v3971 = vpack.c.bf16 %v3801, %v3791
  %v3972 = vpack.c.bf16 %v3802, %v3792
  %v3973 = vpack.c.bf16 %v3803, %v3793
  %v3974 = vpack.c.bf16 %v3804, %v3794
  %v3975 = vpack.c.bf16 %v3805, %v3795
  %v3976 = vpack.c.bf16 %v3816, %v3806
  %v3977 = vpack.c.bf16 %v3817, %v3807
  %v3978 = vpack.c.bf16 %v3818, %v3808
  %v3979 = vpack.c.bf16 %v3819, %v3809
  %v3980 = vpack.c.bf16 %v3820, %v3810
  %v3981 = vpack.c.bf16 %v3821, %v3811
  %v3982 = vpack.c.bf16 %v3822, %v3812
  %v3983 = vpack.c.bf16 %v3823, %v3813
  %v3984 = vpack.c.bf16 %v3824, %v3814
  %v3985 = vpack.c.bf16 %v3825, %v3815
  %v3986 = vpack.c.bf16 %v3836, %v3826
  %v3987 = vpack.c.bf16 %v3837, %v3827
  %v3988 = vpack.c.bf16 %v3838, %v3828
  %v3989 = vpack.c.bf16 %v3839, %v3829
  %v3990 = vpack.c.bf16 %v3840, %v3830
  %v3991 = vpack.c.bf16 %v3841, %v3831
  %v3992 = vpack.c.bf16 %v3842, %v3832
  %v3993 = vpack.c.bf16 %v3843, %v3833
  %v3994 = vpack.c.bf16 %v3844, %v3834
  %v3995 = vpack.c.bf16 %v3845, %v3835
  %v3996 = vpack.c.bf16 %v3856, %v3846
  %v3997 = vpack.c.bf16 %v3857, %v3847
  %v3998 = vpack.c.bf16 %v3858, %v3848
  %v3999 = vpack.c.bf16 %v3859, %v3849
  %v4000 = vpack.c.bf16 %v3860, %v3850
  %v4001 = vpack.c.bf16 %v3861, %v3851
  %v4002 = vpack.c.bf16 %v3862, %v3852
  %v4003 = vpack.c.bf16 %v3863, %v3853
  %v4004 = vpack.c.bf16 %v3864, %v3854
  %v4005 = vpack.c.bf16 %v3865, %v3855
  %v4006 = vpack.c.bf16 %v3876, %v3866
  %v4007 = vpack.c.bf16 %v3877, %v3867
  %v4008 = vpack.c.bf16 %v3878, %v3868
  %v4009 = vpack.c.bf16 %v3879, %v3869
  %v4010 = vpack.c.bf16 %v3880, %v3870
  %v4011 = vpack.c.bf16 %v3881, %v3871
  %v4012 = vpack.c.bf16 %v3882, %v3872
  %v4013 = vpack.c.bf16 %v3883, %v3873
  %v4014 = vpack.c.bf16 %v3884, %v3874
  %v4015 = vpack.c.bf16 %v3885, %v3875
  %v4016 = vpack.c.bf16 %v3896, %v3886
  %v4017 = vpack.c.bf16 %v3897, %v3887
  %v4018 = vpack.c.bf16 %v3898, %v3888
  %v4019 = vpack.c.bf16 %v3899, %v3889
  %v4020 = vpack.c.bf16 %v3900, %v3890
  %v4021 = vpack.c.bf16 %v3901, %v3891
  %v4022 = vpack.c.bf16 %v3902, %v3892
  %v4023 = vpack.c.bf16 %v3903, %v3893
  %v4024 = vpack.c.bf16 %v3904, %v3894
  %v4025 = vpack.c.bf16 %v3905, %v3895
  %v4026 = vpack.c.bf16 %v3916, %v3906
  %v4027 = vpack.c.bf16 %v3917, %v3907
  %v4028 = vpack.c.bf16 %v3918, %v3908
  %v4029 = vpack.c.bf16 %v3919, %v3909
  %v4030 = vpack.c.bf16 %v3920, %v3910
  %v4031 = vpack.c.bf16 %v3921, %v3911
  %v4032 = vpack.c.bf16 %v3922, %v3912
  %v4033 = vpack.c.bf16 %v3923, %v3913
  %v4034 = vpack.c.bf16 %v3924, %v3914
  %v4035 = vpack.c.bf16 %v3925, %v3915
  %v4036 = vpack.c.bf16 %v3936, %v3926
  %v4037 = vpack.c.bf16 %v3937, %v3927
  %v4038 = vpack.c.bf16 %v3938, %v3928
  %v4039 = vpack.c.bf16 %v3939, %v3929
  %v4040 = vpack.c.bf16 %v3940, %v3930
  %v4041 = vpack.c.bf16 %v3941, %v3931
  %v4042 = vpack.c.bf16 %v3942, %v3932
  %v4043 = vpack.c.bf16 %v3943, %v3933
  %v4044 = vpack.c.bf16 %v3944, %v3934
  %v4045 = vpack.c.bf16 %v3945, %v3935
  %v4046 = vpack.c.bf16 %v3946, %v3946
  %v4047 = vpack.c.bf16 %v3947, %v3947
  %v4048 = vpack.c.bf16 %v3948, %v3948
  %v4049 = vpack.c.bf16 %v3949, %v3949
  %v4050 = vpack.c.bf16 %v3950, %v3950
  %v4051 = vpack.c.bf16 %v3951, %v3951
  %v4052 = vpack.c.bf16 %v3952, %v3952
  %v4053 = vpack.c.bf16 %v3953, %v3953
  %v4054 = vpack.c.bf16 %v3954, %v3954
  %v4055 = vpack.c.bf16 %v3955, %v3955
  %v4056 = vld [vmem:[%s3] sm:$0xff]
  %v4057 = vld [vmem:[%s3 + $0x8] sm:$0xff]
  %v4058 = vld [vmem:[%s4] sm:$0xff]
  %v4059 = vld [vmem:[%s4 + $0x8] sm:$0xff]
  %4061 = vset.pattern.permute.xlu0 0
  %4062 = vperm.xlu0 %4061, %v4058
  %v4063 = vpop.permute.xlu0 %4062
  %4066 = vset.pattern.permute.xlu0 0
  %4067 = vperm.xlu0 %4066, %v4059
  %v4068 = vpop.permute.xlu0 %4067
  %v4072 = vunpack.c.l.b16 %v4056
  %v4073 = vunpack.c.h.b16 %v4056
  %v4074 = vunpack.c.l.b16 %v4057
  %v4075 = vunpack.c.h.b16 %v4057
  %v4076 = vpack.c.b16 %v4074, %v4072
  %v4077 = vpack.c.b16 %v4075, %v4073
  %vm4079 = vcmask 179200
  %v4081 = vsel %vm4079, %v4077, 0
  %vm4083 = vcmask 1042432
  %v4085 = vsel %vm4083, %v4046, 0
  %v4088 = vsel %vm4083, %v4047, 0
  %v4091 = vsel %vm4083, %v4048, 0
  %v4094 = vsel %vm4083, %v4049, 0
  %v4097 = vsel %vm4083, %v4050, 0
  %v4100 = vsel %vm4083, %v4051, 0
  %v4103 = vsel %vm4083, %v4052, 0
  %v4106 = vsel %vm4083, %v4053, 0
  %v4109 = vsel %vm4083, %v4054, 0
  %v4112 = vsel %vm4083, %v4055, 0
  %4114 = vmatprep.subr.bf16.mxu0 %v3957
  %4115 = vmatpush1.bf16.msra.mxu0 %v3956
  %4116 = vmatprep.subr.bf16.mxu0 %v3967
  %4117 = vmatpush1.bf16.msra.mxu0 %v3966
  %4118 = vmatprep.subr.bf16.mxu0 %v3977
  %4119 = vmatpush1.bf16.msra.mxu0 %v3976
  %4120 = vmatprep.subr.bf16.mxu0 %v3987
  %4121 = vmatpush1.bf16.msra.mxu0 %v3986
  %4122 = vmatprep.subr.bf16.mxu0 %v3997
  %4123 = vmatpush1.bf16.msra.mxu0 %v3996
  %4124 = vmatprep.subr.bf16.mxu0 %v4007
  %4125 = vmatpush1.bf16.msra.mxu0 %v4006
  %4126 = vmatprep.subr.bf16.mxu0 %v4017
  %4127 = vmatpush1.bf16.msra.mxu0 %v4016
  %4128 = vmatprep.subr.bf16.mxu0 %v4027
  %4129 = vmatpush1.bf16.msra.mxu0 %v4026
  %4130 = vmatprep.subr.bf16.mxu0 %v4037
  %4131 = vmatpush1.bf16.msra.mxu0 %v4036
  %4132 = vmatprep.subr.bf16.mxu0 %v4088
  %4133 = vmatpush1.bf16.msra.mxu0 %v4085
  %4134 = vmatprep.subr.bf16.mxu0 0
  %4135 = vmatpush1.bf16.msra.mxu0 0
  %4136 = vmatprep.subr.bf16.mxu0 0
  %4137 = vmatpush1.bf16.msra.mxu0 0
  %4138 = vmatprep.subr.bf16.mxu0 0
  %4139 = vmatpush1.bf16.msra.mxu0 0
  %4140 = vmatprep.subr.bf16.mxu0 0
  %4141 = vmatpush1.bf16.msra.mxu0 0
  %4142 = vmatprep.subr.bf16.mxu0 0
  %4143 = vmatpush1.bf16.msra.mxu0 0
  %4144 = vmatprep.subr.bf16.mxu0 0
  %4145 = vmatpush1.bf16.msra.mxu0 0
  %4146 = vmatprep.mubr.bf16.mxu0 %v4081
  %4147 = vmatmul.mubr.bf16.gmra.mrb[0].mxu0 %v4076
  %v4148 = vpop.f32.mrb[0].mxu0
  %v4149 = vadd.f32 %v4063, %v4148
  %v4150 = vpop.f32.mrb[0].mxu0
  %v4151 = vadd.f32 %v4063, %v4150
  %v4152 = vpop.f32.mrb[0].mxu0
  %v4153 = vadd.f32 %v4068, %v4152
  %v4154 = vpop.f32.mrb[0].mxu0
  %v4155 = vadd.f32 %v4068, %v4154
  %4156 = vdwg.mxu0
  %4157 = vmatprep.subr.bf16.mxu0 %v3959
  %4158 = vmatpush1.bf16.msra.mxu0 %v3958
  %4159 = vmatprep.subr.bf16.mxu0 %v3969
  %4160 = vmatpush1.bf16.msra.mxu0 %v3968
  %4161 = vmatprep.subr.bf16.mxu0 %v3979
  %4162 = vmatpush1.bf16.msra.mxu0 %v3978
  %4163 = vmatprep.subr.bf16.mxu0 %v3989
  %4164 = vmatpush1.bf16.msra.mxu0 %v3988
  %4165 = vmatprep.subr.bf16.mxu0 %v3999
  %4166 = vmatpush1.bf16.msra.mxu0 %v3998
  %4167 = vmatprep.subr.bf16.mxu0 %v4009
  %4168 = vmatpush1.bf16.msra.mxu0 %v4008
  %4169 = vmatprep.subr.bf16.mxu0 %v4019
  %4170 = vmatpush1.bf16.msra.mxu0 %v4018
  %4171 = vmatprep.subr.bf16.mxu0 %v4029
  %4172 = vmatpush1.bf16.msra.mxu0 %v4028
  %4173 = vmatprep.subr.bf16.mxu0 %v4039
  %4174 = vmatpush1.bf16.msra.mxu0 %v4038
  %4175 = vmatprep.subr.bf16.mxu0 %v4094
  %4176 = vmatpush1.bf16.msra.mxu0 %v4091
  %4177 = vmatprep.subr.bf16.mxu0 0
  %4178 = vmatpush1.bf16.msra.mxu0 0
  %4179 = vmatprep.subr.bf16.mxu0 0
  %4180 = vmatpush1.bf16.msra.mxu0 0
  %4181 = vmatprep.subr.bf16.mxu0 0
  %4182 = vmatpush1.bf16.msra.mxu0 0
  %4183 = vmatprep.subr.bf16.mxu0 0
  %4184 = vmatpush1.bf16.msra.mxu0 0
  %4185 = vmatprep.subr.bf16.mxu0 0
  %4186 = vmatpush1.bf16.msra.mxu0 0
  %4187 = vmatprep.subr.bf16.mxu0 0
  %4188 = vmatpush1.bf16.msra.mxu0 0
  %4189 = vmatprep.mubr.bf16.mxu0 %v4081
  %4190 = vmatmul.mubr.bf16.gmra.mrb[0].mxu0 %v4076
  %v4191 = vpop.f32.mrb[0].mxu0
  %v4192 = vadd.f32 %v4063, %v4191
  %v4193 = vpop.f32.mrb[0].mxu0
  %v4194 = vadd.f32 %v4063, %v4193
  %v4195 = vpop.f32.mrb[0].mxu0
  %v4196 = vadd.f32 %v4068, %v4195
  %v4197 = vpop.f32.mrb[0].mxu0
  %v4198 = vadd.f32 %v4068, %v4197
  %4199 = vdwg.mxu0
  %4200 = vmatprep.subr.bf16.mxu0 %v3961
  %4201 = vmatpush1.bf16.msra.mxu0 %v3960
  %4202 = vmatprep.subr.bf16.mxu0 %v3971
  %4203 = vmatpush1.bf16.msra.mxu0 %v3970
  %4204 = vmatprep.subr.bf16.mxu0 %v3981
  %4205 = vmatpush1.bf16.msra.mxu0 %v3980
  %4206 = vmatprep.subr.bf16.mxu0 %v3991
  %4207 = vmatpush1.bf16.msra.mxu0 %v3990
  %4208 = vmatprep.subr.bf16.mxu0 %v4001
  %4209 = vmatpush1.bf16.msra.mxu0 %v4000
  %4210 = vmatprep.subr.bf16.mxu0 %v4011
  %4211 = vmatpush1.bf16.msra.mxu0 %v4010
  %4212 = vmatprep.subr.bf16.mxu0 %v4021
  %4213 = vmatpush1.bf16.msra.mxu0 %v4020
  %4214 = vmatprep.subr.bf16.mxu0 %v4031
  %4215 = vmatpush1.bf16.msra.mxu0 %v4030
  %4216 = vmatprep.subr.bf16.mxu0 %v4041
  %4217 = vmatpush1.bf16.msra.mxu0 %v4040
  %4218 = vmatprep.subr.bf16.mxu0 %v4100
  %4219 = vmatpush1.bf16.msra.mxu0 %v4097
  %4220 = vmatprep.subr.bf16.mxu0 0
  %4221 = vmatpush1.bf16.msra.mxu0 0
  %4222 = vmatprep.subr.bf16.mxu0 0
  %4223 = vmatpush1.bf16.msra.mxu0 0
  %4224 = vmatprep.subr.bf16.mxu0 0
  %4225 = vmatpush1.bf16.msra.mxu0 0
  %4226 = vmatprep.subr.bf16.mxu0 0
  %4227 = vmatpush1.bf16.msra.mxu0 0
  %4228 = vmatprep.subr.bf16.mxu0 0
  %4229 = vmatpush1.bf16.msra.mxu0 0
  %4230 = vmatprep.subr.bf16.mxu0 0
  %4231 = vmatpush1.bf16.msra.mxu0 0
  %4232 = vmatprep.mubr.bf16.mxu0 %v4081
  %4233 = vmatmul.mubr.bf16.gmra.mrb[0].mxu0 %v4076
  %v4234 = vpop.f32.mrb[0].mxu0
  %v4235 = vadd.f32 %v4063, %v4234
  %v4236 = vpop.f32.mrb[0].mxu0
  %v4237 = vadd.f32 %v4063, %v4236
  %v4238 = vpop.f32.mrb[0].mxu0
  %v4239 = vadd.f32 %v4068, %v4238
  %v4240 = vpop.f32.mrb[0].mxu0
  %v4241 = vadd.f32 %v4068, %v4240
  %4242 = vdwg.mxu0
  %4243 = vmatprep.subr.bf16.mxu0 %v3963
  %4244 = vmatpush1.bf16.msra.mxu0 %v3962
  %4245 = vmatprep.subr.bf16.mxu0 %v3973
  %4246 = vmatpush1.bf16.msra.mxu0 %v3972
  %4247 = vmatprep.subr.bf16.mxu0 %v3983
  %4248 = vmatpush1.bf16.msra.mxu0 %v3982
  %4249 = vmatprep.subr.bf16.mxu0 %v3993
  %4250 = vmatpush1.bf16.msra.mxu0 %v3992
  %4251 = vmatprep.subr.bf16.mxu0 %v4003
  %4252 = vmatpush1.bf16.msra.mxu0 %v4002
  %4253 = vmatprep.subr.bf16.mxu0 %v4013
  %4254 = vmatpush1.bf16.msra.mxu0 %v4012
  %4255 = vmatprep.subr.bf16.mxu0 %v4023
  %4256 = vmatpush1.bf16.msra.mxu0 %v4022
  %4257 = vmatprep.subr.bf16.mxu0 %v4033
  %4258 = vmatpush1.bf16.msra.mxu0 %v4032
  %4259 = vmatprep.subr.bf16.mxu0 %v4043
  %4260 = vmatpush1.bf16.msra.mxu0 %v4042
  %4261 = vmatprep.subr.bf16.mxu0 %v4106
  %4262 = vmatpush1.bf16.msra.mxu0 %v4103
  %4263 = vmatprep.subr.bf16.mxu0 0
  %4264 = vmatpush1.bf16.msra.mxu0 0
  %4265 = vmatprep.subr.bf16.mxu0 0
  %4266 = vmatpush1.bf16.msra.mxu0 0
  %4267 = vmatprep.subr.bf16.mxu0 0
  %4268 = vmatpush1.bf16.msra.mxu0 0
  %4269 = vmatprep.subr.bf16.mxu0 0
  %4270 = vmatpush1.bf16.msra.mxu0 0
  %4271 = vmatprep.subr.bf16.mxu0 0
  %4272 = vmatpush1.bf16.msra.mxu0 0
  %4273 = vmatprep.subr.bf16.mxu0 0
  %4274 = vmatpush1.bf16.msra.mxu0 0
  %4275 = vmatprep.mubr.bf16.mxu0 %v4081
  %4276 = vmatmul.mubr.bf16.gmra.mrb[0].mxu0 %v4076
  %v4277 = vpop.f32.mrb[0].mxu0
  %v4278 = vadd.f32 %v4063, %v4277
  %v4279 = vpop.f32.mrb[0].mxu0
  %v4280 = vadd.f32 %v4063, %v4279
  %v4281 = vpop.f32.mrb[0].mxu0
  %v4282 = vadd.f32 %v4068, %v4281
  %v4283 = vpop.f32.mrb[0].mxu0
  %v4284 = vadd.f32 %v4068, %v4283
  %4285 = vdwg.mxu0
  %4286 = vmatprep.subr.bf16.mxu0 %v3965
  %4287 = vmatpush1.bf16.msra.mxu0 %v3964
  %4288 = vmatprep.subr.bf16.mxu0 %v3975
  %4289 = vmatpush1.bf16.msra.mxu0 %v3974
  %4290 = vmatprep.subr.bf16.mxu0 %v3985
  %4291 = vmatpush1.bf16.msra.mxu0 %v3984
  %4292 = vmatprep.subr.bf16.mxu0 %v3995
  %4293 = vmatpush1.bf16.msra.mxu0 %v3994
  %4294 = vmatprep.subr.bf16.mxu0 %v4005
  %4295 = vmatpush1.bf16.msra.mxu0 %v4004
  %4296 = vmatprep.subr.bf16.mxu0 %v4015
  %4297 = vmatpush1.bf16.msra.mxu0 %v4014
  %4298 = vmatprep.subr.bf16.mxu0 %v4025
  %4299 = vmatpush1.bf16.msra.mxu0 %v4024
  %4300 = vmatprep.subr.bf16.mxu0 %v4035
  %4301 = vmatpush1.bf16.msra.mxu0 %v4034
  %4302 = vmatprep.subr.bf16.mxu0 %v4045
  %4303 = vmatpush1.bf16.msra.mxu0 %v4044
  %4304 = vmatprep.subr.bf16.mxu0 %v4112
  %4305 = vmatpush1.bf16.msra.mxu0 %v4109
  %4306 = vmatprep.subr.bf16.mxu0 0
  %4307 = vmatpush1.bf16.msra.mxu0 0
  %4308 = vmatprep.subr.bf16.mxu0 0
  %4309 = vmatpush1.bf16.msra.mxu0 0
  %4310 = vmatprep.subr.bf16.mxu0 0
  %4311 = vmatpush1.bf16.msra.mxu0 0
  %4312 = vmatprep.subr.bf16.mxu0 0
  %4313 = vmatpush1.bf16.msra.mxu0 0
  %4314 = vmatprep.subr.bf16.mxu0 0
  %4315 = vmatpush1.bf16.msra.mxu0 0
  %4316 = vmatprep.subr.bf16.mxu0 0
  %4317 = vmatpush1.bf16.msra.mxu0 0
  %4318 = vmatprep.mubr.bf16.mxu0 %v4081
  %4319 = vmatmul.mubr.bf16.gmra.mrb[0].mxu0 %v4076
  %v4320 = vpop.f32.mrb[0].mxu0
  %v4321 = vadd.f32 %v4063, %v4320
  %v4322 = vpop.f32.mrb[0].mxu0
  %v4323 = vadd.f32 %v4063, %v4322
  %v4324 = vpop.f32.mrb[0].mxu0
  %v4325 = vadd.f32 %v4068, %v4324
  %v4326 = vpop.f32.mrb[0].mxu0
  %v4327 = vadd.f32 %v4068, %v4326
  %4328 = vdwg.mxu0
  %v4329 = vmax.f32 %v4149, 0.0
  %v4330 = vmax.f32 %v4151, 0.0
  %v4331 = vmax.f32 %v4192, 0.0
  %v4332 = vmax.f32 %v4194, 0.0
  %v4333 = vmax.f32 %v4235, 0.0
  %v4334 = vmax.f32 %v4237, 0.0
  %v4335 = vmax.f32 %v4278, 0.0
  %v4336 = vmax.f32 %v4280, 0.0
  %v4337 = vmax.f32 %v4321, 0.0
  %v4338 = vmax.f32 %v4323, 0.0
  %v4339 = vmax.f32 %v4153, 0.0
  %v4340 = vmax.f32 %v4155, 0.0
  %v4341 = vmax.f32 %v4196, 0.0
  %v4342 = vmax.f32 %v4198, 0.0
  %v4343 = vmax.f32 %v4239, 0.0
  %v4344 = vmax.f32 %v4241, 0.0
  %v4345 = vmax.f32 %v4282, 0.0
  %v4346 = vmax.f32 %v4284, 0.0
  %v4347 = vmax.f32 %v4325, 0.0
  %v4348 = vmax.f32 %v4327, 0.0
  %4367 = vrot.lane.b32.xlu0 %v4329, 124
  %v4368 = vpop.permute.xlu0 %4367
  %4369 = vrot.lane.b32.xlu0 %v4330, 124
  %v4370 = vpop.permute.xlu0 %4369
  %4371 = vrot.lane.b32.xlu0 %v4331, 124
  %v4372 = vpop.permute.xlu0 %4371
  %4373 = vrot.lane.b32.xlu0 %v4332, 124
  %v4374 = vpop.permute.xlu0 %4373
  %4375 = vrot.lane.b32.xlu0 %v4333, 124
  %v4376 = vpop.permute.xlu0 %4375
  %4377 = vrot.lane.b32.xlu0 %v4334, 124
  %v4378 = vpop.permute.xlu0 %4377
  %4379 = vrot.lane.b32.xlu0 %v4335, 124
  %v4380 = vpop.permute.xlu0 %4379
  %4381 = vrot.lane.b32.xlu0 %v4336, 124
  %v4382 = vpop.permute.xlu0 %4381
  %4383 = vrot.lane.b32.xlu0 %v4337, 124
  %v4384 = vpop.permute.xlu0 %4383
  %4385 = vrot.lane.b32.xlu0 %v4339, 124
  %v4386 = vpop.permute.xlu0 %4385
  %4387 = vrot.lane.b32.xlu0 %v4340, 124
  %v4388 = vpop.permute.xlu0 %4387
  %4389 = vrot.lane.b32.xlu0 %v4341, 124
  %v4390 = vpop.permute.xlu0 %4389
  %4391 = vrot.lane.b32.xlu0 %v4342, 124
  %v4392 = vpop.permute.xlu0 %4391
  %4393 = vrot.lane.b32.xlu0 %v4343, 124
  %v4394 = vpop.permute.xlu0 %4393
  %4395 = vrot.lane.b32.xlu0 %v4344, 124
  %v4396 = vpop.permute.xlu0 %4395
  %4397 = vrot.lane.b32.xlu0 %v4345, 124
  %v4398 = vpop.permute.xlu0 %4397
  %4399 = vrot.lane.b32.xlu0 %v4346, 124
  %v4400 = vpop.permute.xlu0 %4399
  %4401 = vrot.lane.b32.xlu0 %v4347, 124
  %v4402 = vpop.permute.xlu0 %4401
  %v4403 = vsel %vm210, %v4368, %v4370
  %v4404 = vsel %vm210, %v4372, %v4374
  %v4405 = vsel %vm210, %v4376, %v4378
  %v4406 = vsel %vm210, %v4380, %v4382
  %v4407 = vsel %vm210, %v4386, %v4388
  %v4408 = vsel %vm210, %v4390, %v4392
  %v4409 = vsel %vm210, %v4394, %v4396
  %v4410 = vsel %vm210, %v4398, %v4400
  %v4421 = vmax.f32 %v4329, %v4403
  %v4422 = vmax.f32 %v4331, %v4404
  %v4423 = vmax.f32 %v4333, %v4405
  %v4424 = vmax.f32 %v4335, %v4406
  %v4425 = vmax.f32 %v4337, %v4384
  %v4426 = vmax.f32 %v4339, %v4407
  %v4427 = vmax.f32 %v4341, %v4408
  %v4428 = vmax.f32 %v4343, %v4409
  %v4429 = vmax.f32 %v4345, %v4410
  %v4430 = vmax.f32 %v4347, %v4402
  %4433 = vrot.lane.b32.xlu0 %v4338, 124
  %v4434 = vpop.permute.xlu0 %4433
  %4435 = vrot.lane.b32.xlu0 %v4348, 124
  %v4436 = vpop.permute.xlu0 %4435
  %v4437 = vsel %vm210, %v4370, %v4372
  %v4438 = vsel %vm210, %v4374, %v4376
  %v4439 = vsel %vm210, %v4378, %v4380
  %v4440 = vsel %vm210, %v4382, %v4384
  %v4441 = vsel %vm210, %v4388, %v4390
  %v4442 = vsel %vm210, %v4392, %v4394
  %v4443 = vsel %vm210, %v4396, %v4398
  %v4444 = vsel %vm210, %v4400, %v4402
  %v4455 = vmax.f32 %v4330, %v4437
  %v4456 = vmax.f32 %v4332, %v4438
  %v4457 = vmax.f32 %v4334, %v4439
  %v4458 = vmax.f32 %v4336, %v4440
  %v4459 = vmax.f32 %v4338, %v4434
  %v4460 = vmax.f32 %v4340, %v4441
  %v4461 = vmax.f32 %v4342, %v4442
  %v4462 = vmax.f32 %v4344, %v4443
  %v4463 = vmax.f32 %v4346, %v4444
  %v4464 = vmax.f32 %v4348, %v4436
  %v4465 = vmax.f32 %v4421, %v4455
  %v4466 = vmax.f32 %v4422, %v4456
  %v4467 = vmax.f32 %v4423, %v4457
  %v4468 = vmax.f32 %v4424, %v4458
  %v4469 = vmax.f32 %v4425, %v4459
  %v4470 = vmax.f32 %v4426, %v4460
  %v4471 = vmax.f32 %v4427, %v4461
  %v4472 = vmax.f32 %v4428, %v4462
  %v4473 = vmax.f32 %v4429, %v4463
  %v4474 = vmax.f32 %v4430, %v4464
  %vm4475 = vcmask 15360
  %4476 = vst.msk [vmem:[#allocation4] sm:$0xff] %vm4475, %v4465
  %4477 = vst.msk [vmem:[#allocation4 + $0x8] sm:$0xff] %vm4475, %v4470
  %4480 = vrot.lane.b32.xlu0 %v4465, 120
  %v4481 = vpop.permute.xlu0 %4480
  %4482 = vrot.lane.b32.xlu0 %v4470, 120
  %v4483 = vpop.permute.xlu0 %4482
  %4486 = vst.msk [vmem:[#allocation4 + $0x10] sm:$0xff] %vm4475, %v4481
  %4487 = vst.msk [vmem:[#allocation4 + $0x18] sm:$0xff] %vm4475, %v4483
  %4488 = vrot.lane.b32.xlu0 %v4465, 112
  %v4489 = vpop.permute.xlu0 %4488
  %4490 = vrot.lane.b32.xlu0 %v4470, 112
  %v4491 = vpop.permute.xlu0 %4490
  %4494 = vst.msk [vmem:[#allocation4 + $0x20] sm:$0xff] %vm4475, %v4489
  %4495 = vst.msk [vmem:[#allocation4 + $0x28] sm:$0xff] %vm4475, %v4491
  %4496 = vrot.lane.b32.xlu0 %v4465, 104
  %v4497 = vpop.permute.xlu0 %4496
  %4498 = vrot.lane.b32.xlu0 %v4470, 104
  %v4499 = vpop.permute.xlu0 %4498
  %4502 = vst.msk [vmem:[#allocation4 + $0x30] sm:$0xff] %vm4475, %v4497
  %4503 = vst.msk [vmem:[#allocation4 + $0x38] sm:$0xff] %vm4475, %v4499
  %4504 = vrot.lane.b32.xlu0 %v4465, 96
  %v4505 = vpop.permute.xlu0 %4504
  %4506 = vrot.lane.b32.xlu0 %v4470, 96
  %v4507 = vpop.permute.xlu0 %4506
  %4510 = vst.msk [vmem:[#allocation4 + $0x40] sm:$0xff] %vm4475, %v4505
  %4511 = vst.msk [vmem:[#allocation4 + $0x48] sm:$0xff] %vm4475, %v4507
  %4512 = vst.msk [vmem:[#allocation4 + $0x50] sm:$0xff] %vm4475, %v4466
  %4513 = vst.msk [vmem:[#allocation4 + $0x58] sm:$0xff] %vm4475, %v4471
  %4516 = vrot.lane.b32.xlu0 %v4466, 120
  %v4517 = vpop.permute.xlu0 %4516
  %4518 = vrot.lane.b32.xlu0 %v4471, 120
  %v4519 = vpop.permute.xlu0 %4518
  %4522 = vst.msk [vmem:[#allocation4 + $0x60] sm:$0xff] %vm4475, %v4517
  %4523 = vst.msk [vmem:[#allocation4 + $0x68] sm:$0xff] %vm4475, %v4519
  %4524 = vrot.lane.b32.xlu0 %v4466, 112
  %v4525 = vpop.permute.xlu0 %4524
  %4526 = vrot.lane.b32.xlu0 %v4471, 112
  %v4527 = vpop.permute.xlu0 %4526
  %4530 = vst.msk [vmem:[#allocation4 + $0x70] sm:$0xff] %vm4475, %v4525
  %4531 = vst.msk [vmem:[#allocation4 + $0x78] sm:$0xff] %vm4475, %v4527
  %4532 = vrot.lane.b32.xlu0 %v4466, 104
  %v4533 = vpop.permute.xlu0 %4532
  %4534 = vrot.lane.b32.xlu0 %v4471, 104
  %v4535 = vpop.permute.xlu0 %4534
  %4538 = vst.msk [vmem:[#allocation4 + $0x80] sm:$0xff] %vm4475, %v4533
  %4539 = vst.msk [vmem:[#allocation4 + $0x88] sm:$0xff] %vm4475, %v4535
  %4540 = vrot.lane.b32.xlu0 %v4466, 96
  %v4541 = vpop.permute.xlu0 %4540
  %4542 = vrot.lane.b32.xlu0 %v4471, 96
  %v4543 = vpop.permute.xlu0 %4542
  %4546 = vst.msk [vmem:[#allocation4 + $0x90] sm:$0xff] %vm4475, %v4541
  %4547 = vst.msk [vmem:[#allocation4 + $0x98] sm:$0xff] %vm4475, %v4543
  %4548 = vst.msk [vmem:[#allocation4 + $0xa0] sm:$0xff] %vm4475, %v4467
  %4549 = vst.msk [vmem:[#allocation4 + $0xa8] sm:$0xff] %vm4475, %v4472
  %4552 = vrot.lane.b32.xlu0 %v4467, 120
  %v4553 = vpop.permute.xlu0 %4552
  %4554 = vrot.lane.b32.xlu0 %v4472, 120
  %v4555 = vpop.permute.xlu0 %4554
  %4558 = vst.msk [vmem:[#allocation4 + $0xb0] sm:$0xff] %vm4475, %v4553
  %4559 = vst.msk [vmem:[#allocation4 + $0xb8] sm:$0xff] %vm4475, %v4555
  %4560 = vrot.lane.b32.xlu0 %v4467, 112
  %v4561 = vpop.permute.xlu0 %4560
  %4562 = vrot.lane.b32.xlu0 %v4472, 112
  %v4563 = vpop.permute.xlu0 %4562
  %4566 = vst.msk [vmem:[#allocation4 + $0xc0] sm:$0xff] %vm4475, %v4561
  %4567 = vst.msk [vmem:[#allocation4 + $0xc8] sm:$0xff] %vm4475, %v4563
  %4568 = vrot.lane.b32.xlu0 %v4467, 104
  %v4569 = vpop.permute.xlu0 %4568
  %4570 = vrot.lane.b32.xlu0 %v4472, 104
  %v4571 = vpop.permute.xlu0 %4570
  %4574 = vst.msk [vmem:[#allocation4 + $0xd0] sm:$0xff] %vm4475, %v4569
  %4575 = vst.msk [vmem:[#allocation4 + $0xd8] sm:$0xff] %vm4475, %v4571
  %4576 = vrot.lane.b32.xlu0 %v4467, 96
  %v4577 = vpop.permute.xlu0 %4576
  %4578 = vrot.lane.b32.xlu0 %v4472, 96
  %v4579 = vpop.permute.xlu0 %4578
  %4582 = vst.msk [vmem:[#allocation4 + $0xe0] sm:$0xff] %vm4475, %v4577
  %4583 = vst.msk [vmem:[#allocation4 + $0xe8] sm:$0xff] %vm4475, %v4579
  %4584 = vst.msk [vmem:[#allocation4 + $0xf0] sm:$0xff] %vm4475, %v4468
  %4585 = vst.msk [vmem:[#allocation4 + $0xf8] sm:$0xff] %vm4475, %v4473
  %4588 = vrot.lane.b32.xlu0 %v4468, 120
  %v4589 = vpop.permute.xlu0 %4588
  %4590 = vrot.lane.b32.xlu0 %v4473, 120
  %v4591 = vpop.permute.xlu0 %4590
  %4594 = vst.msk [vmem:[#allocation4 + $0x100] sm:$0xff] %vm4475, %v4589
  %4595 = vst.msk [vmem:[#allocation4 + $0x108] sm:$0xff] %vm4475, %v4591
  %4596 = vrot.lane.b32.xlu0 %v4468, 112
  %v4597 = vpop.permute.xlu0 %4596
  %4598 = vrot.lane.b32.xlu0 %v4473, 112
  %v4599 = vpop.permute.xlu0 %4598
  %4602 = vst.msk [vmem:[#allocation4 + $0x110] sm:$0xff] %vm4475, %v4597
  %4603 = vst.msk [vmem:[#allocation4 + $0x118] sm:$0xff] %vm4475, %v4599
  %4604 = vrot.lane.b32.xlu0 %v4468, 104
  %v4605 = vpop.permute.xlu0 %4604
  %4606 = vrot.lane.b32.xlu0 %v4473, 104
  %v4607 = vpop.permute.xlu0 %4606
  %4610 = vst.msk [vmem:[#allocation4 + $0x120] sm:$0xff] %vm4475, %v4605
  %4611 = vst.msk [vmem:[#allocation4 + $0x128] sm:$0xff] %vm4475, %v4607
  %4612 = vrot.lane.b32.xlu0 %v4468, 96
  %v4613 = vpop.permute.xlu0 %4612
  %4614 = vrot.lane.b32.xlu0 %v4473, 96
  %v4615 = vpop.permute.xlu0 %4614
  %4618 = vst.msk [vmem:[#allocation4 + $0x130] sm:$0xff] %vm4475, %v4613
  %4619 = vst.msk [vmem:[#allocation4 + $0x138] sm:$0xff] %vm4475, %v4615
  %4620 = vst.msk [vmem:[#allocation4 + $0x140] sm:$0xff] %vm4475, %v4469
  %4621 = vst.msk [vmem:[#allocation4 + $0x148] sm:$0xff] %vm4475, %v4474
  %4624 = vrot.lane.b32.xlu0 %v4469, 120
  %v4625 = vpop.permute.xlu0 %4624
  %4626 = vrot.lane.b32.xlu0 %v4474, 120
  %v4627 = vpop.permute.xlu0 %4626
  %4630 = vst.msk [vmem:[#allocation4 + $0x150] sm:$0xff] %vm4475, %v4625
  %4631 = vst.msk [vmem:[#allocation4 + $0x158] sm:$0xff] %vm4475, %v4627
  %4632 = vrot.lane.b32.xlu0 %v4469, 112
  %v4633 = vpop.permute.xlu0 %4632
  %4634 = vrot.lane.b32.xlu0 %v4474, 112
  %v4635 = vpop.permute.xlu0 %4634
  %4638 = vst.msk [vmem:[#allocation4 + $0x160] sm:$0xff] %vm4475, %v4633
  %4639 = vst.msk [vmem:[#allocation4 + $0x168] sm:$0xff] %vm4475, %v4635
  %4640 = vrot.lane.b32.xlu0 %v4469, 104
  %v4641 = vpop.permute.xlu0 %4640
  %4642 = vrot.lane.b32.xlu0 %v4474, 104
  %v4643 = vpop.permute.xlu0 %4642
  %4646 = vst.msk [vmem:[#allocation4 + $0x170] sm:$0xff] %vm4475, %v4641
  %4647 = vst.msk [vmem:[#allocation4 + $0x178] sm:$0xff] %vm4475, %v4643
  %4648 = vrot.lane.b32.xlu0 %v4469, 96
  %v4649 = vpop.permute.xlu0 %4648
  %4650 = vrot.lane.b32.xlu0 %v4474, 96
  %v4651 = vpop.permute.xlu0 %4650
  %4654 = vst.msk [vmem:[#allocation4 + $0x180] sm:$0xff] %vm4475, %v4649
  %4655 = vst.msk [vmem:[#allocation4 + $0x188] sm:$0xff] %vm4475, %v4651
  %v4656 = vld [vmem:[#allocation4] sm:$0xff]
  %v4657 = vld [vmem:[#allocation4 + $0x8] sm:$0xff]
  %v4658 = vld [vmem:[#allocation4 + $0x10] sm:$0xff]
  %v4659 = vld [vmem:[#allocation4 + $0x18] sm:$0xff]
  %v4660 = vld [vmem:[#allocation4 + $0x20] sm:$0xff]
  %v4661 = vld [vmem:[#allocation4 + $0x28] sm:$0xff]
  %v4662 = vld [vmem:[#allocation4 + $0x30] sm:$0xff]
  %v4663 = vld [vmem:[#allocation4 + $0x38] sm:$0xff]
  %v4664 = vld [vmem:[#allocation4 + $0x40] sm:$0xff]
  %v4665 = vld [vmem:[#allocation4 + $0x48] sm:$0xff]
  %v4666 = vld [vmem:[#allocation4 + $0x50] sm:$0xff]
  %v4667 = vld [vmem:[#allocation4 + $0x58] sm:$0xff]
  %v4668 = vld [vmem:[#allocation4 + $0x60] sm:$0xff]
  %v4669 = vld [vmem:[#allocation4 + $0x68] sm:$0xff]
  %v4670 = vld [vmem:[#allocation4 + $0x70] sm:$0xff]
  %v4671 = vld [vmem:[#allocation4 + $0x78] sm:$0xff]
  %v4672 = vld [vmem:[#allocation4 + $0x80] sm:$0xff]
  %v4673 = vld [vmem:[#allocation4 + $0x88] sm:$0xff]
  %v4674 = vld [vmem:[#allocation4 + $0x90] sm:$0xff]
  %v4675 = vld [vmem:[#allocation4 + $0x98] sm:$0xff]
  %v4676 = vld [vmem:[#allocation4 + $0xa0] sm:$0xff]
  %v4677 = vld [vmem:[#allocation4 + $0xa8] sm:$0xff]
  %v4678 = vld [vmem:[#allocation4 + $0xb0] sm:$0xff]
  %v4679 = vld [vmem:[#allocation4 + $0xb8] sm:$0xff]
  %v4680 = vld [vmem:[#allocation4 + $0xc0] sm:$0xff]
  %v4681 = vld [vmem:[#allocation4 + $0xc8] sm:$0xff]
  %v4682 = vld [vmem:[#allocation4 + $0xd0] sm:$0xff]
  %v4683 = vld [vmem:[#allocation4 + $0xd8] sm:$0xff]
  %v4684 = vld [vmem:[#allocation4 + $0xe0] sm:$0xff]
  %v4685 = vld [vmem:[#allocation4 + $0xe8] sm:$0xff]
  %v4686 = vld [vmem:[#allocation4 + $0xf0] sm:$0xff]
  %v4687 = vld [vmem:[#allocation4 + $0xf8] sm:$0xff]
  %v4688 = vld [vmem:[#allocation4 + $0x100] sm:$0xff]
  %v4689 = vld [vmem:[#allocation4 + $0x108] sm:$0xff]
  %v4690 = vld [vmem:[#allocation4 + $0x110] sm:$0xff]
  %v4691 = vld [vmem:[#allocation4 + $0x118] sm:$0xff]
  %v4692 = vld [vmem:[#allocation4 + $0x120] sm:$0xff]
  %v4693 = vld [vmem:[#allocation4 + $0x128] sm:$0xff]
  %v4694 = vld [vmem:[#allocation4 + $0x130] sm:$0xff]
  %v4695 = vld [vmem:[#allocation4 + $0x138] sm:$0xff]
  %v4696 = vld [vmem:[#allocation4 + $0x140] sm:$0xff]
  %v4697 = vld [vmem:[#allocation4 + $0x148] sm:$0xff]
  %v4698 = vld [vmem:[#allocation4 + $0x150] sm:$0xff]
  %v4699 = vld [vmem:[#allocation4 + $0x158] sm:$0xff]
  %v4700 = vld [vmem:[#allocation4 + $0x160] sm:$0xff]
  %v4701 = vld [vmem:[#allocation4 + $0x168] sm:$0xff]
  %v4702 = vld [vmem:[#allocation4 + $0x170] sm:$0xff]
  %v4703 = vld [vmem:[#allocation4 + $0x178] sm:$0xff]
  %v4704 = vld [vmem:[#allocation4 + $0x180] sm:$0xff]
  %v4705 = vld [vmem:[#allocation4 + $0x188] sm:$0xff]
  %v4706 = vpack.c.bf16 %v4657, %v4656
  %v4707 = vpack.c.bf16 %v4659, %v4658
  %v4708 = vpack.c.bf16 %v4661, %v4660
  %v4709 = vpack.c.bf16 %v4663, %v4662
  %v4710 = vpack.c.bf16 %v4665, %v4664
  %v4711 = vpack.c.bf16 %v4667, %v4666
  %v4712 = vpack.c.bf16 %v4669, %v4668
  %v4713 = vpack.c.bf16 %v4671, %v4670
  %v4714 = vpack.c.bf16 %v4673, %v4672
  %v4715 = vpack.c.bf16 %v4675, %v4674
  %v4716 = vpack.c.bf16 %v4677, %v4676
  %v4717 = vpack.c.bf16 %v4679, %v4678
  %v4718 = vpack.c.bf16 %v4681, %v4680
  %v4719 = vpack.c.bf16 %v4683, %v4682
  %v4720 = vpack.c.bf16 %v4685, %v4684
  %v4721 = vpack.c.bf16 %v4687, %v4686
  %v4722 = vpack.c.bf16 %v4689, %v4688
  %v4723 = vpack.c.bf16 %v4691, %v4690
  %v4724 = vpack.c.bf16 %v4693, %v4692
  %v4725 = vpack.c.bf16 %v4695, %v4694
  %v4726 = vpack.c.bf16 %v4697, %v4696
  %v4727 = vpack.c.bf16 %v4699, %v4698
  %v4728 = vpack.c.bf16 %v4701, %v4700
  %v4729 = vpack.c.bf16 %v4703, %v4702
  %v4730 = vpack.c.bf16 %v4705, %v4704
  %v4731 = vld [vmem:[%s5] sm:$0xff]
  %v4732 = vld [vmem:[%s5 + $0x8] sm:$0xff]
  %v4733 = vld [vmem:[%s5 + $0x10] sm:$0xff]
  %v4734 = vld [vmem:[%s5 + $0x18] sm:$0xff]
  %v4735 = vld [vmem:[%s5 + $0x20] sm:$0xff]
  %v4736 = vld [vmem:[%s5 + $0x28] sm:$0xff]
  %v4737 = vld [vmem:[%s5 + $0x30] sm:$0xff]
  %v4738 = vld [vmem:[%s5 + $0x38] sm:$0xff]
  %v4739 = vld [vmem:[%s5 + $0x40] sm:$0xff]
  %v4740 = vld [vmem:[%s5 + $0x48] sm:$0xff]
  %v4741 = vld [vmem:[%s5 + $0x50] sm:$0xff]
  %v4742 = vld [vmem:[%s5 + $0x58] sm:$0xff]
  %v4743 = vld [vmem:[%s5 + $0x60] sm:$0xff]
  %v4744 = vld [vmem:[%s5 + $0x68] sm:$0xff]
  %v4745 = vld [vmem:[%s5 + $0x70] sm:$0xff]
  %v4746 = vld [vmem:[%s5 + $0x78] sm:$0xff]
  %v4747 = vld [vmem:[%s5 + $0x80] sm:$0xff]
  %v4748 = vld [vmem:[%s5 + $0x88] sm:$0xff]
  %v4749 = vld [vmem:[%s5 + $0x90] sm:$0xff]
  %v4750 = vld [vmem:[%s5 + $0x98] sm:$0xff]
  %v4751 = vld [vmem:[%s5 + $0xa0] sm:$0xff]
  %v4752 = vld [vmem:[%s5 + $0xa8] sm:$0xff]
  %v4753 = vld [vmem:[%s5 + $0xb0] sm:$0xff]
  %v4754 = vld [vmem:[%s5 + $0xb8] sm:$0xff]
  %v4755 = vld [vmem:[%s5 + $0xc0] sm:$0xff]
  %v4756 = vld [vmem:[%s5 + $0xc8] sm:$0xff]
  %v4757 = vld [vmem:[%s5 + $0xd0] sm:$0xff]
  %v4758 = vld [vmem:[%s5 + $0xd8] sm:$0xff]
  %v4759 = vld [vmem:[%s5 + $0xe0] sm:$0xff]
  %v4760 = vld [vmem:[%s5 + $0xe8] sm:$0xff]
  %v4761 = vld [vmem:[%s6] sm:$0xff]
  %v4762 = vld [vmem:[%s6 + $0x8] sm:$0xff]
  %v4763 = vld [vmem:[%s6 + $0x10] sm:$0xff]
  %v4764 = vld [vmem:[%s6 + $0x18] sm:$0xff]
  %v4765 = vld [vmem:[%s6 + $0x20] sm:$0xff]
  %v4766 = vld [vmem:[%s6 + $0x28] sm:$0xff]
  %v4767 = vld [vmem:[%s6 + $0x30] sm:$0xff]
  %v4768 = vld [vmem:[%s6 + $0x38] sm:$0xff]
  %v4769 = vld [vmem:[%s6 + $0x40] sm:$0xff]
  %v4770 = vld [vmem:[%s6 + $0x48] sm:$0xff]
  %v4771 = vld [vmem:[%s6 + $0x50] sm:$0xff]
  %v4772 = vld [vmem:[%s6 + $0x58] sm:$0xff]
  %v4773 = vld [vmem:[%s6 + $0x60] sm:$0xff]
  %v4774 = vld [vmem:[%s6 + $0x68] sm:$0xff]
  %v4775 = vld [vmem:[%s6 + $0x70] sm:$0xff]
  %4777 = vset.pattern.permute.xlu0 0
  %4778 = vperm.xlu0 %4777, %v4761
  %v4779 = vpop.permute.xlu0 %4778
  %4782 = vset.pattern.permute.xlu0 0
  %4783 = vperm.xlu0 %4782, %v4762
  %v4784 = vpop.permute.xlu0 %4783
  %4787 = vset.pattern.permute.xlu0 0
  %4788 = vperm.xlu0 %4787, %v4763
  %v4789 = vpop.permute.xlu0 %4788
  %4792 = vset.pattern.permute.xlu0 0
  %4793 = vperm.xlu0 %4792, %v4764
  %v4794 = vpop.permute.xlu0 %4793
  %4797 = vset.pattern.permute.xlu0 0
  %4798 = vperm.xlu0 %4797, %v4765
  %v4799 = vpop.permute.xlu0 %4798
  %4802 = vset.pattern.permute.xlu0 0
  %4803 = vperm.xlu0 %4802, %v4766
  %v4804 = vpop.permute.xlu0 %4803
  %4807 = vset.pattern.permute.xlu0 0
  %4808 = vperm.xlu0 %4807, %v4767
  %v4809 = vpop.permute.xlu0 %4808
  %4812 = vset.pattern.permute.xlu0 0
  %4813 = vperm.xlu0 %4812, %v4768
  %v4814 = vpop.permute.xlu0 %4813
  %4817 = vset.pattern.permute.xlu0 0
  %4818 = vperm.xlu0 %4817, %v4769
  %v4819 = vpop.permute.xlu0 %4818
  %4822 = vset.pattern.permute.xlu0 0
  %4823 = vperm.xlu0 %4822, %v4770
  %v4824 = vpop.permute.xlu0 %4823
  %4827 = vset.pattern.permute.xlu0 0
  %4828 = vperm.xlu0 %4827, %v4771
  %v4829 = vpop.permute.xlu0 %4828
  %4832 = vset.pattern.permute.xlu0 0
  %4833 = vperm.xlu0 %4832, %v4772
  %v4834 = vpop.permute.xlu0 %4833
  %4837 = vset.pattern.permute.xlu0 0
  %4838 = vperm.xlu0 %4837, %v4773
  %v4839 = vpop.permute.xlu0 %4838
  %4842 = vset.pattern.permute.xlu0 0
  %4843 = vperm.xlu0 %4842, %v4774
  %v4844 = vpop.permute.xlu0 %4843
  %4847 = vset.pattern.permute.xlu0 0
  %4848 = vperm.xlu0 %4847, %v4775
  %v4849 = vpop.permute.xlu0 %4848
  %v4881 = vunpack.c.l.b16 %v4731
  %v4882 = vunpack.c.h.b16 %v4731
  %v4883 = vunpack.c.l.b16 %v4732
  %v4884 = vunpack.c.h.b16 %v4732
  %v4885 = vunpack.c.l.b16 %v4733
  %v4886 = vunpack.c.h.b16 %v4733
  %v4887 = vunpack.c.l.b16 %v4734
  %v4888 = vunpack.c.h.b16 %v4734
  %v4889 = vunpack.c.l.b16 %v4735
  %v4890 = vunpack.c.h.b16 %v4735
  %v4891 = vunpack.c.l.b16 %v4736
  %v4892 = vunpack.c.h.b16 %v4736
  %v4893 = vunpack.c.l.b16 %v4737
  %v4894 = vunpack.c.h.b16 %v4737
  %v4895 = vunpack.c.l.b16 %v4738
  %v4896 = vunpack.c.h.b16 %v4738
  %v4897 = vunpack.c.l.b16 %v4739
  %v4898 = vunpack.c.h.b16 %v4739
  %v4899 = vunpack.c.l.b16 %v4740
  %v4900 = vunpack.c.h.b16 %v4740
  %v4901 = vunpack.c.l.b16 %v4741
  %v4902 = vunpack.c.h.b16 %v4741
  %v4903 = vunpack.c.l.b16 %v4742
  %v4904 = vunpack.c.h.b16 %v4742
  %v4905 = vunpack.c.l.b16 %v4743
  %v4906 = vunpack.c.h.b16 %v4743
  %v4907 = vunpack.c.l.b16 %v4744
  %v4908 = vunpack.c.h.b16 %v4744
  %v4909 = vunpack.c.l.b16 %v4745
  %v4910 = vunpack.c.h.b16 %v4745
  %v4911 = vunpack.c.l.b16 %v4746
  %v4912 = vunpack.c.h.b16 %v4746
  %v4913 = vunpack.c.l.b16 %v4747
  %v4914 = vunpack.c.h.b16 %v4747
  %v4915 = vunpack.c.l.b16 %v4748
  %v4916 = vunpack.c.h.b16 %v4748
  %v4917 = vunpack.c.l.b16 %v4749
  %v4918 = vunpack.c.h.b16 %v4749
  %v4919 = vunpack.c.l.b16 %v4750
  %v4920 = vunpack.c.h.b16 %v4750
  %v4921 = vunpack.c.l.b16 %v4751
  %v4922 = vunpack.c.h.b16 %v4751
  %v4923 = vunpack.c.l.b16 %v4752
  %v4924 = vunpack.c.h.b16 %v4752
  %v4925 = vunpack.c.l.b16 %v4753
  %v4926 = vunpack.c.h.b16 %v4753
  %v4927 = vunpack.c.l.b16 %v4754
  %v4928 = vunpack.c.h.b16 %v4754
  %v4929 = vunpack.c.l.b16 %v4755
  %v4930 = vunpack.c.h.b16 %v4755
  %v4931 = vunpack.c.l.b16 %v4756
  %v4932 = vunpack.c.h.b16 %v4756
  %v4933 = vunpack.c.l.b16 %v4757
  %v4934 = vunpack.c.h.b16 %v4757
  %v4935 = vunpack.c.l.b16 %v4758
  %v4936 = vunpack.c.h.b16 %v4758
  %v4937 = vunpack.c.l.b16 %v4759
  %v4938 = vunpack.c.h.b16 %v4759
  %v4939 = vunpack.c.l.b16 %v4760
  %v4940 = vunpack.c.h.b16 %v4760
  %v4941 = vpack.c.b16 %v4885, %v4881
  %v4942 = vpack.c.b16 %v4886, %v4882
  %v4943 = vpack.c.b16 %v4887, %v4883
  %v4944 = vpack.c.b16 %v4888, %v4884
  %v4945 = vpack.c.b16 %v4893, %v4889
  %v4946 = vpack.c.b16 %v4894, %v4890
  %v4947 = vpack.c.b16 %v4895, %v4891
  %v4948 = vpack.c.b16 %v4896, %v4892
  %v4949 = vpack.c.b16 %v4901, %v4897
  %v4950 = vpack.c.b16 %v4902, %v4898
  %v4951 = vpack.c.b16 %v4903, %v4899
  %v4952 = vpack.c.b16 %v4904, %v4900
  %v4953 = vpack.c.b16 %v4909, %v4905
  %v4954 = vpack.c.b16 %v4910, %v4906
  %v4955 = vpack.c.b16 %v4911, %v4907
  %v4956 = vpack.c.b16 %v4912, %v4908
  %v4957 = vpack.c.b16 %v4917, %v4913
  %v4958 = vpack.c.b16 %v4918, %v4914
  %v4959 = vpack.c.b16 %v4919, %v4915
  %v4960 = vpack.c.b16 %v4920, %v4916
  %v4961 = vpack.c.b16 %v4925, %v4921
  %v4962 = vpack.c.b16 %v4926, %v4922
  %v4963 = vpack.c.b16 %v4927, %v4923
  %v4964 = vpack.c.b16 %v4928, %v4924
  %v4965 = vpack.c.b16 %v4933, %v4929
  %v4966 = vpack.c.b16 %v4934, %v4930
  %v4967 = vpack.c.b16 %v4935, %v4931
  %v4968 = vpack.c.b16 %v4936, %v4932
  %v4969 = vpack.c.b16 %v4937, %v4937
  %v4970 = vpack.c.b16 %v4938, %v4938
  %v4971 = vpack.c.b16 %v4939, %v4939
  %v4972 = vpack.c.b16 %v4940, %v4940
  %vm4997 = vcmask 130048
  %v4999 = vsel %vm4997, %v4944, 0
  %v5002 = vsel %vm4997, %v4948, 0
  %v5005 = vsel %vm4997, %v4952, 0
  %v5008 = vsel %vm4997, %v4956, 0
  %v5011 = vsel %vm4997, %v4960, 0
  %v5014 = vsel %vm4997, %v4964, 0
  %v5017 = vsel %vm4997, %v4968, 0
  %v5020 = vsel %vm4997, %v4972, 0
  %5022 = vmatprep.subr.bf16.mxu0 0
  %5023 = vmatpush1.bf16.msra.mxu0 %v4706
  %5024 = vmatprep.subr.bf16.mxu0 0
  %5025 = vmatpush1.bf16.msra.mxu0 %v4707
  %5026 = vmatprep.subr.bf16.mxu0 0
  %5027 = vmatpush1.bf16.msra.mxu0 %v4708
  %5028 = vmatprep.subr.bf16.mxu0 0
  %5029 = vmatpush1.bf16.msra.mxu0 %v4709
  %5030 = vmatprep.subr.bf16.mxu0 0
  %5031 = vmatpush1.bf16.msra.mxu0 %v4710
  %5032 = vmatprep.subr.bf16.mxu0 0
  %5033 = vmatpush1.bf16.msra.mxu0 %v4711
  %5034 = vmatprep.subr.bf16.mxu0 0
  %5035 = vmatpush1.bf16.msra.mxu0 %v4712
  %5036 = vmatprep.subr.bf16.mxu0 0
  %5037 = vmatpush1.bf16.msra.mxu0 %v4713
  %5038 = vmatprep.subr.bf16.mxu0 0
  %5039 = vmatpush1.bf16.msra.mxu0 %v4714
  %5040 = vmatprep.subr.bf16.mxu0 0
  %5041 = vmatpush1.bf16.msra.mxu0 %v4715
  %5042 = vmatprep.subr.bf16.mxu0 0
  %5043 = vmatpush1.bf16.msra.mxu0 %v4716
  %5044 = vmatprep.subr.bf16.mxu0 0
  %5045 = vmatpush1.bf16.msra.mxu0 %v4717
  %5046 = vmatprep.subr.bf16.mxu0 0
  %5047 = vmatpush1.bf16.msra.mxu0 %v4718
  %5048 = vmatprep.subr.bf16.mxu0 0
  %5049 = vmatpush1.bf16.msra.mxu0 %v4719
  %5050 = vmatprep.subr.bf16.mxu0 0
  %5051 = vmatpush1.bf16.msra.mxu0 %v4720
  %5052 = vmatprep.subr.bf16.mxu0 0
  %5053 = vmatpush1.bf16.msra.mxu0 %v4721
  %5054 = vmatprep.mubr.bf16.mxu0 %v4942
  %5055 = vmatmul.mubr.bf16.gmra.mrb[0].mxu0 %v4941
  %v5056 = vpop.f32.mrb[0].mxu0
  %v5057 = vadd.f32 %v4779, %v5056
  %v5058 = vpop.f32.mrb[0].mxu0
  %v5059 = vpop.f32.mrb[0].mxu0
  %v5060 = vadd.f32 %v4784, %v5059
  %v5061 = vpop.f32.mrb[0].mxu0
  %5062 = vmatprep.mubr.bf16.mxu0 %v4946
  %5063 = vmatmul.mubr.bf16.gmra.mrb[0].mxu0 %v4945
  %v5064 = vpop.f32.mrb[0].mxu0
  %v5065 = vadd.f32 %v4789, %v5064
  %v5066 = vpop.f32.mrb[0].mxu0
  %v5067 = vpop.f32.mrb[0].mxu0
  %v5068 = vadd.f32 %v4794, %v5067
  %v5069 = vpop.f32.mrb[0].mxu0
  %5070 = vmatprep.mubr.bf16.mxu0 %v4950
  %5071 = vmatmul.mubr.bf16.gmra.mrb[0].mxu0 %v4949
  %v5072 = vpop.f32.mrb[0].mxu0
  %v5073 = vadd.f32 %v4799, %v5072
  %v5074 = vpop.f32.mrb[0].mxu0
  %v5075 = vpop.f32.mrb[0].mxu0
  %v5076 = vadd.f32 %v4804, %v5075
  %v5077 = vpop.f32.mrb[0].mxu0
  %5078 = vmatprep.mubr.bf16.mxu0 %v4954
  %5079 = vmatmul.mubr.bf16.gmra.mrb[0].mxu0 %v4953
  %v5080 = vpop.f32.mrb[0].mxu0
  %v5081 = vadd.f32 %v4809, %v5080
  %v5082 = vpop.f32.mrb[0].mxu0
  %v5083 = vpop.f32.mrb[0].mxu0
  %v5084 = vadd.f32 %v4814, %v5083
  %v5085 = vpop.f32.mrb[0].mxu0
  %5086 = vmatprep.mubr.bf16.mxu0 %v4958
  %5087 = vmatmul.mubr.bf16.gmra.mrb[0].mxu0 %v4957
  %v5088 = vpop.f32.mrb[0].mxu0
  %v5089 = vadd.f32 %v4819, %v5088
  %v5090 = vpop.f32.mrb[0].mxu0
  %v5091 = vpop.f32.mrb[0].mxu0
  %v5092 = vadd.f32 %v4824, %v5091
  %v5093 = vpop.f32.mrb[0].mxu0
  %5094 = vmatprep.mubr.bf16.mxu0 %v4962
  %5095 = vmatmul.mubr.bf16.gmra.mrb[0].mxu0 %v4961
  %v5096 = vpop.f32.mrb[0].mxu0
  %v5097 = vadd.f32 %v4829, %v5096
  %v5098 = vpop.f32.mrb[0].mxu0
  %v5099 = vpop.f32.mrb[0].mxu0
  %v5100 = vadd.f32 %v4834, %v5099
  %v5101 = vpop.f32.mrb[0].mxu0
  %5102 = vmatprep.mubr.bf16.mxu0 %v4966
  %5103 = vmatmul.mubr.bf16.gmra.mrb[0].mxu0 %v4965
  %v5104 = vpop.f32.mrb[0].mxu0
  %v5105 = vadd.f32 %v4839, %v5104
  %v5106 = vpop.f32.mrb[0].mxu0
  %v5107 = vpop.f32.mrb[0].mxu0
  %v5108 = vadd.f32 %v4844, %v5107
  %v5109 = vpop.f32.mrb[0].mxu0
  %5110 = vmatprep.mubr.bf16.mxu0 %v4970
  %5111 = vmatmul.mubr.bf16.gmra.mrb[0].mxu0 %v4969
  %v5112 = vpop.f32.mrb[0].mxu0
  %v5113 = vadd.f32 %v4849, %v5112
  %v5114 = vpop.f32.mrb[0].mxu0
  %v5115 = vpop.f32.mrb[0].mxu0
  %v5116 = vpop.f32.mrb[0].mxu0
  %5117 = vdwg.mxu0
  %5118 = vmatprep.subr.bf16.mxu0 0
  %5119 = vmatpush1.bf16.msra.mxu0 %v4722
  %5120 = vmatprep.subr.bf16.mxu0 0
  %5121 = vmatpush1.bf16.msra.mxu0 %v4723
  %5122 = vmatprep.subr.bf16.mxu0 0
  %5123 = vmatpush1.bf16.msra.mxu0 %v4724
  %5124 = vmatprep.subr.bf16.mxu0 0
  %5125 = vmatpush1.bf16.msra.mxu0 %v4725
  %5126 = vmatprep.subr.bf16.mxu0 0
  %5127 = vmatpush1.bf16.msra.mxu0 %v4726
  %5128 = vmatprep.subr.bf16.mxu0 0
  %5129 = vmatpush1.bf16.msra.mxu0 %v4727
  %5130 = vmatprep.subr.bf16.mxu0 0
  %5131 = vmatpush1.bf16.msra.mxu0 %v4728
  %5132 = vmatprep.subr.bf16.mxu0 0
  %5133 = vmatpush1.bf16.msra.mxu0 %v4729
  %5134 = vmatprep.subr.bf16.mxu0 0
  %5135 = vmatpush1.bf16.msra.mxu0 %v4730
  %5136 = vmatprep.subr.bf16.mxu0 0
  %5137 = vmatpush1.bf16.msra.mxu0 0
  %5138 = vmatprep.subr.bf16.mxu0 0
  %5139 = vmatpush1.bf16.msra.mxu0 0
  %5140 = vmatprep.subr.bf16.mxu0 0
  %5141 = vmatpush1.bf16.msra.mxu0 0
  %5142 = vmatprep.subr.bf16.mxu0 0
  %5143 = vmatpush1.bf16.msra.mxu0 0
  %5144 = vmatprep.subr.bf16.mxu0 0
  %5145 = vmatpush1.bf16.msra.mxu0 0
  %5146 = vmatprep.subr.bf16.mxu0 0
  %5147 = vmatpush1.bf16.msra.mxu0 0
  %5148 = vmatprep.subr.bf16.mxu0 0
  %5149 = vmatpush1.bf16.msra.mxu0 0
  %5150 = vmatprep.mubr.bf16.mxu0 %v4999
  %5151 = vmatmul.mubr.bf16.gmra.mrb[0].mxu0 %v4943
  %v5152 = vpop.f32.mrb[0].mxu0
  %v5153 = vadd.f32 %v5057, %v5152
  %v5154 = vpop.f32.mrb[0].mxu0
  %v5155 = vpop.f32.mrb[0].mxu0
  %v5156 = vadd.f32 %v5060, %v5155
  %v5157 = vpop.f32.mrb[0].mxu0
  %5158 = vmatprep.mubr.bf16.mxu0 %v5002
  %5159 = vmatmul.mubr.bf16.gmra.mrb[0].mxu0 %v4947
  %v5160 = vpop.f32.mrb[0].mxu0
  %v5161 = vadd.f32 %v5065, %v5160
  %v5162 = vpop.f32.mrb[0].mxu0
  %v5163 = vpop.f32.mrb[0].mxu0
  %v5164 = vadd.f32 %v5068, %v5163
  %v5165 = vpop.f32.mrb[0].mxu0
  %5166 = vmatprep.mubr.bf16.mxu0 %v5005
  %5167 = vmatmul.mubr.bf16.gmra.mrb[0].mxu0 %v4951
  %v5168 = vpop.f32.mrb[0].mxu0
  %v5169 = vadd.f32 %v5073, %v5168
  %v5170 = vpop.f32.mrb[0].mxu0
  %v5171 = vpop.f32.mrb[0].mxu0
  %v5172 = vadd.f32 %v5076, %v5171
  %v5173 = vpop.f32.mrb[0].mxu0
  %5174 = vmatprep.mubr.bf16.mxu0 %v5008
  %5175 = vmatmul.mubr.bf16.gmra.mrb[0].mxu0 %v4955
  %v5176 = vpop.f32.mrb[0].mxu0
  %v5177 = vadd.f32 %v5081, %v5176
  %v5178 = vpop.f32.mrb[0].mxu0
  %v5179 = vpop.f32.mrb[0].mxu0
  %v5180 = vadd.f32 %v5084, %v5179
  %v5181 = vpop.f32.mrb[0].mxu0
  %5182 = vmatprep.mubr.bf16.mxu0 %v5011
  %5183 = vmatmul.mubr.bf16.gmra.mrb[0].mxu0 %v4959
  %v5184 = vpop.f32.mrb[0].mxu0
  %v5185 = vadd.f32 %v5089, %v5184
  %v5186 = vpop.f32.mrb[0].mxu0
  %v5187 = vpop.f32.mrb[0].mxu0
  %v5188 = vadd.f32 %v5092, %v5187
  %v5189 = vpop.f32.mrb[0].mxu0
  %5190 = vmatprep.mubr.bf16.mxu0 %v5014
  %5191 = vmatmul.mubr.bf16.gmra.mrb[0].mxu0 %v4963
  %v5192 = vpop.f32.mrb[0].mxu0
  %v5193 = vadd.f32 %v5097, %v5192
  %v5194 = vpop.f32.mrb[0].mxu0
  %v5195 = vpop.f32.mrb[0].mxu0
  %v5196 = vadd.f32 %v5100, %v5195
  %v5197 = vpop.f32.mrb[0].mxu0
  %5198 = vmatprep.mubr.bf16.mxu0 %v5017
  %5199 = vmatmul.mubr.bf16.gmra.mrb[0].mxu0 %v4967
  %v5200 = vpop.f32.mrb[0].mxu0
  %v5201 = vadd.f32 %v5105, %v5200
  %v5202 = vpop.f32.mrb[0].mxu0
  %v5203 = vpop.f32.mrb[0].mxu0
  %v5204 = vadd.f32 %v5108, %v5203
  %v5205 = vpop.f32.mrb[0].mxu0
  %5206 = vmatprep.mubr.bf16.mxu0 %v5020
  %5207 = vmatmul.mubr.bf16.gmra.mrb[0].mxu0 %v4971
  %v5208 = vpop.f32.mrb[0].mxu0
  %v5209 = vadd.f32 %v5113, %v5208
  %v5210 = vpop.f32.mrb[0].mxu0
  %v5211 = vpop.f32.mrb[0].mxu0
  %v5212 = vpop.f32.mrb[0].mxu0
  %5213 = vdwg.mxu0
  %v5214 = vmax.f32 %v5153, 0.0
  %v5215 = vmax.f32 %v5156, 0.0
  %v5216 = vmax.f32 %v5161, 0.0
  %v5217 = vmax.f32 %v5164, 0.0
  %v5218 = vmax.f32 %v5169, 0.0
  %v5219 = vmax.f32 %v5172, 0.0
  %v5220 = vmax.f32 %v5177, 0.0
  %v5221 = vmax.f32 %v5180, 0.0
  %v5222 = vmax.f32 %v5185, 0.0
  %v5223 = vmax.f32 %v5188, 0.0
  %v5224 = vmax.f32 %v5193, 0.0
  %v5225 = vmax.f32 %v5196, 0.0
  %v5226 = vmax.f32 %v5201, 0.0
  %v5227 = vmax.f32 %v5204, 0.0
  %v5228 = vmax.f32 %v5209, 0.0
  %v5229 = vld [vmem:[%s7] sm:$0xf]
  %v5230 = vld [vmem:[%s7 + $0x4] sm:$0xf]
  %v5231 = vld [vmem:[%s7 + $0x8] sm:$0xf]
  %v5232 = vld [vmem:[%s7 + $0xc] sm:$0xf]
  %v5233 = vld [vmem:[%s7 + $0x10] sm:$0xf]
  %v5234 = vld [vmem:[%s7 + $0x14] sm:$0xf]
  %v5235 = vld [vmem:[%s7 + $0x18] sm:$0xf]
  %v5236 = vld [vmem:[%s7 + $0x1c] sm:$0xf]
  %v5237 = vld [vmem:[%s7 + $0x20] sm:$0xf]
  %v5238 = vld [vmem:[%s7 + $0x24] sm:$0xf]
  %v5239 = vld [vmem:[%s7 + $0x28] sm:$0x3]
  %v5240 = vpack.c.bf16 %v5215, %v5214
  %v5241 = vpack.c.bf16 %v5217, %v5216
  %v5242 = vpack.c.bf16 %v5219, %v5218
  %v5243 = vpack.c.bf16 %v5221, %v5220
  %v5244 = vpack.c.bf16 %v5223, %v5222
  %v5245 = vpack.c.bf16 %v5225, %v5224
  %v5246 = vpack.c.bf16 %v5227, %v5226
  %v5247 = vpack.c.bf16 %v5228, %v5228
  %v5248 = vld [vmem:[%s8] sm:$0xff]
  %v5249 = vld [vmem:[%s8 + $0x8] sm:$0xff]
  %v5250 = vld [vmem:[%s8 + $0x10] sm:$0xff]
  %v5251 = vld [vmem:[%s8 + $0x18] sm:$0xff]
  %v5252 = vld [vmem:[%s8 + $0x20] sm:$0xff]
  %v5253 = vld [vmem:[%s8 + $0x28] sm:$0xff]
  %v5254 = vld [vmem:[%s8 + $0x30] sm:$0xff]
  %v5255 = vld [vmem:[%s8 + $0x38] sm:$0xff]
  %v5256 = vld [vmem:[%s8 + $0x40] sm:$0xff]
  %v5257 = vld [vmem:[%s8 + $0x48] sm:$0xff]
  %v5258 = vld [vmem:[%s8 + $0x50] sm:$0xf]
  %5260 = vset.pattern.permute.xlu0 0
  %5261 = vperm.xlu0 %5260, %v5248
  %v5262 = vpop.permute.xlu0 %5261
  %5265 = vset.pattern.permute.xlu0 0
  %5266 = vperm.xlu0 %5265, %v5249
  %v5267 = vpop.permute.xlu0 %5266
  %5270 = vset.pattern.permute.xlu0 0
  %5271 = vperm.xlu0 %5270, %v5250
  %v5272 = vpop.permute.xlu0 %5271
  %5275 = vset.pattern.permute.xlu0 0
  %5276 = vperm.xlu0 %5275, %v5251
  %v5277 = vpop.permute.xlu0 %5276
  %5280 = vset.pattern.permute.xlu0 0
  %5281 = vperm.xlu0 %5280, %v5252
  %v5282 = vpop.permute.xlu0 %5281
  %5285 = vset.pattern.permute.xlu0 0
  %5286 = vperm.xlu0 %5285, %v5253
  %v5287 = vpop.permute.xlu0 %5286
  %5290 = vset.pattern.permute.xlu0 0
  %5291 = vperm.xlu0 %5290, %v5254
  %v5292 = vpop.permute.xlu0 %5291
  %5295 = vset.pattern.permute.xlu0 0
  %5296 = vperm.xlu0 %5295, %v5255
  %v5297 = vpop.permute.xlu0 %5296
  %5300 = vset.pattern.permute.xlu0 0
  %5301 = vperm.xlu0 %5300, %v5256
  %v5302 = vpop.permute.xlu0 %5301
  %5305 = vset.pattern.permute.xlu0 0
  %5306 = vperm.xlu0 %5305, %v5257
  %v5307 = vpop.permute.xlu0 %5306
  %5310 = vset.pattern.permute.xlu0 0
  %5311 = vperm.xlu0 %5310, %v5258
  %v5312 = vpop.permute.xlu0 %5311
  %v5325 = vunpack.c.l.b16 %v5229
  %v5326 = vunpack.c.l.b16 %v5230
  %v5327 = vunpack.c.l.b16 %v5231
  %v5328 = vunpack.c.l.b16 %v5232
  %v5329 = vunpack.c.l.b16 %v5233
  %v5330 = vunpack.c.l.b16 %v5234
  %v5331 = vunpack.c.l.b16 %v5235
  %v5332 = vunpack.c.l.b16 %v5236
  %v5333 = vunpack.c.l.b16 %v5237
  %v5334 = vunpack.c.l.b16 %v5238
  %v5335 = vunpack.c.l.b16 %v5239
  %v5336 = vpack.c.b16 %v5326, %v5325
  %v5337 = vpack.c.b16 %v5328, %v5327
  %v5338 = vpack.c.b16 %v5330, %v5329
  %v5339 = vpack.c.b16 %v5332, %v5331
  %v5340 = vpack.c.b16 %v5334, %v5333
  %v5341 = vpack.c.b16 %v5335, %v5335
  %v5343 = vsel %vm388, %v5336, 0
  %v5346 = vsel %vm388, %v5337, 0
  %v5349 = vsel %vm388, %v5338, 0
  %v5352 = vsel %vm388, %v5339, 0
  %v5355 = vsel %vm388, %v5340, 0
  %v5358 = vsel %vm388, %v5341, 0
  %vm5360 = vcmask 1043456
  %v5362 = vsel %vm5360, %v5247, 0
  %5364 = vmatprep.subr.bf16.mxu0 0
  %5365 = vmatpush1.bf16.msra.mxu0 %v5240
  %5366 = vmatprep.subr.bf16.mxu0 0
  %5367 = vmatpush1.bf16.msra.mxu0 %v5241
  %5368 = vmatprep.subr.bf16.mxu0 0
  %5369 = vmatpush1.bf16.msra.mxu0 %v5242
  %5370 = vmatprep.subr.bf16.mxu0 0
  %5371 = vmatpush1.bf16.msra.mxu0 %v5243
  %5372 = vmatprep.subr.bf16.mxu0 0
  %5373 = vmatpush1.bf16.msra.mxu0 %v5244
  %5374 = vmatprep.subr.bf16.mxu0 0
  %5375 = vmatpush1.bf16.msra.mxu0 %v5245
  %5376 = vmatprep.subr.bf16.mxu0 0
  %5377 = vmatpush1.bf16.msra.mxu0 %v5246
  %5378 = vmatprep.subr.bf16.mxu0 0
  %5379 = vmatpush1.bf16.msra.mxu0 %v5362
  %5380 = vmatprep.subr.bf16.mxu0 0
  %5381 = vmatpush1.bf16.msra.mxu0 0
  %5382 = vmatprep.subr.bf16.mxu0 0
  %5383 = vmatpush1.bf16.msra.mxu0 0
  %5384 = vmatprep.subr.bf16.mxu0 0
  %5385 = vmatpush1.bf16.msra.mxu0 0
  %5386 = vmatprep.subr.bf16.mxu0 0
  %5387 = vmatpush1.bf16.msra.mxu0 0
  %5388 = vmatprep.subr.bf16.mxu0 0
  %5389 = vmatpush1.bf16.msra.mxu0 0
  %5390 = vmatprep.subr.bf16.mxu0 0
  %5391 = vmatpush1.bf16.msra.mxu0 0
  %5392 = vmatprep.subr.bf16.mxu0 0
  %5393 = vmatpush1.bf16.msra.mxu0 0
  %5394 = vmatprep.subr.bf16.mxu0 0
  %5395 = vmatpush1.bf16.msra.mxu0 0
  %5396 = vmatprep.mubr.bf16.mxu0 0
  %5397 = vmatmul.mubr.bf16.gmra.mrb[0].mxu0 %v5343
  %v5398 = vpop.f32.mrb[0].mxu0
  %v5399 = vadd.f32 %v5262, %v5398
  %v5400 = vpop.f32.mrb[0].mxu0
  %v5401 = vpop.f32.mrb[0].mxu0
  %v5402 = vadd.f32 %v5267, %v5401
  %v5403 = vpop.f32.mrb[0].mxu0
  %5404 = vmatprep.mubr.bf16.mxu0 0
  %5405 = vmatmul.mubr.bf16.gmra.mrb[0].mxu0 %v5346
  %v5406 = vpop.f32.mrb[0].mxu0
  %v5407 = vadd.f32 %v5272, %v5406
  %v5408 = vpop.f32.mrb[0].mxu0
  %v5409 = vpop.f32.mrb[0].mxu0
  %v5410 = vadd.f32 %v5277, %v5409
  %v5411 = vpop.f32.mrb[0].mxu0
  %5412 = vmatprep.mubr.bf16.mxu0 0
  %5413 = vmatmul.mubr.bf16.gmra.mrb[0].mxu0 %v5349
  %v5414 = vpop.f32.mrb[0].mxu0
  %v5415 = vadd.f32 %v5282, %v5414
  %v5416 = vpop.f32.mrb[0].mxu0
  %v5417 = vpop.f32.mrb[0].mxu0
  %v5418 = vadd.f32 %v5287, %v5417
  %v5419 = vpop.f32.mrb[0].mxu0
  %5420 = vmatprep.mubr.bf16.mxu0 0
  %5421 = vmatmul.mubr.bf16.gmra.mrb[0].mxu0 %v5352
  %v5422 = vpop.f32.mrb[0].mxu0
  %v5423 = vadd.f32 %v5292, %v5422
  %v5424 = vpop.f32.mrb[0].mxu0
  %v5425 = vpop.f32.mrb[0].mxu0
  %v5426 = vadd.f32 %v5297, %v5425
  %v5427 = vpop.f32.mrb[0].mxu0
  %5428 = vmatprep.mubr.bf16.mxu0 0
  %5429 = vmatmul.mubr.bf16.gmra.mrb[0].mxu0 %v5355
  %v5430 = vpop.f32.mrb[0].mxu0
  %v5431 = vadd.f32 %v5302, %v5430
  %v5432 = vpop.f32.mrb[0].mxu0
  %v5433 = vpop.f32.mrb[0].mxu0
  %v5434 = vadd.f32 %v5307, %v5433
  %v5435 = vpop.f32.mrb[0].mxu0
  %5436 = vmatprep.mubr.bf16.mxu0 0
  %5437 = vmatmul.mubr.bf16.gmra.mrb[0].mxu0 %v5358
  %v5438 = vpop.f32.mrb[0].mxu0
  %v5439 = vadd.f32 %v5312, %v5438
  %v5440 = vpop.f32.mrb[0].mxu0
  %v5441 = vpop.f32.mrb[0].mxu0
  %v5442 = vpop.f32.mrb[0].mxu0
  %5443 = vdwg.mxu0
  %v5444 = vmax.f32 %v5399, 0.0
  %v5445 = vmax.f32 %v5402, 0.0
  %v5446 = vmax.f32 %v5407, 0.0
  %v5447 = vmax.f32 %v5410, 0.0
  %v5448 = vmax.f32 %v5415, 0.0
  %v5449 = vmax.f32 %v5418, 0.0
  %v5450 = vmax.f32 %v5423, 0.0
  %v5451 = vmax.f32 %v5426, 0.0
  %v5452 = vmax.f32 %v5431, 0.0
  %v5453 = vmax.f32 %v5434, 0.0
  %v5454 = vmax.f32 %v5439, 0.0
  %v5455 = vld [vmem:[%s9] sm:$0xf]
  %v5456 = vld [vmem:[%s9 + $0x4] sm:$0x1]
  %v5457 = vpack.c.bf16 %v5445, %v5444
  %v5458 = vpack.c.bf16 %v5447, %v5446
  %v5459 = vpack.c.bf16 %v5449, %v5448
  %v5460 = vpack.c.bf16 %v5451, %v5450
  %v5461 = vpack.c.bf16 %v5453, %v5452
  %v5462 = vpack.c.bf16 %v5454, %v5454
  %v5463 = vld [vmem:[%s10] sm:$0xff]
  %v5464 = vld [vmem:[%s10 + $0x8] sm:$0x3]
  %5466 = vset.pattern.permute.xlu0 0
  %5467 = vperm.xlu0 %5466, %v5463
  %v5468 = vpop.permute.xlu0 %5467
  %5471 = vset.pattern.permute.xlu0 0
  %5472 = vperm.xlu0 %5471, %v5464
  %v5473 = vpop.permute.xlu0 %5472
  %v5477 = vunpack.c.l.b16 %v5455
  %v5478 = vunpack.c.l.b16 %v5456
  %v5479 = vpack.c.b16 %v5478, %v5477
  %vm5480 = vcmask 687104
  %v5482 = vsel %vm5480, %v5479, 0
  %vm5484 = vcmask 1041408
  %v5486 = vsel %vm5484, %v5462, 0
  %5488 = vmatprep.subr.bf16.mxu0 0
  %5489 = vmatpush1.bf16.msra.mxu0 %v5457
  %5490 = vmatprep.subr.bf16.mxu0 0
  %5491 = vmatpush1.bf16.msra.mxu0 %v5458
  %5492 = vmatprep.subr.bf16.mxu0 0
  %5493 = vmatpush1.bf16.msra.mxu0 %v5459
  %5494 = vmatprep.subr.bf16.mxu0 0
  %5495 = vmatpush1.bf16.msra.mxu0 %v5460
  %5496 = vmatprep.subr.bf16.mxu0 0
  %5497 = vmatpush1.bf16.msra.mxu0 %v5461
  %5498 = vmatprep.subr.bf16.mxu0 0
  %5499 = vmatpush1.bf16.msra.mxu0 %v5486
  %5500 = vmatprep.subr.bf16.mxu0 0
  %5501 = vmatpush1.bf16.msra.mxu0 0
  %5502 = vmatprep.subr.bf16.mxu0 0
  %5503 = vmatpush1.bf16.msra.mxu0 0
  %5504 = vmatprep.subr.bf16.mxu0 0
  %5505 = vmatpush1.bf16.msra.mxu0 0
  %5506 = vmatprep.subr.bf16.mxu0 0
  %5507 = vmatpush1.bf16.msra.mxu0 0
  %5508 = vmatprep.subr.bf16.mxu0 0
  %5509 = vmatpush1.bf16.msra.mxu0 0
  %5510 = vmatprep.subr.bf16.mxu0 0
  %5511 = vmatpush1.bf16.msra.mxu0 0
  %5512 = vmatprep.subr.bf16.mxu0 0
  %5513 = vmatpush1.bf16.msra.mxu0 0
  %5514 = vmatprep.subr.bf16.mxu0 0
  %5515 = vmatpush1.bf16.msra.mxu0 0
  %5516 = vmatprep.subr.bf16.mxu0 0
  %5517 = vmatpush1.bf16.msra.mxu0 0
  %5518 = vmatprep.subr.bf16.mxu0 0
  %5519 = vmatpush1.bf16.msra.mxu0 0
  %5520 = vmatprep.mubr.bf16.mxu0 0
  %5521 = vmatmul.mubr.bf16.gmra.mrb[0].mxu0 %v5482
  %v5522 = vpop.f32.mrb[0].mxu0
  %v5523 = vadd.f32 %v5468, %v5522
  %v5524 = vpop.f32.mrb[0].mxu0
  %v5525 = vpop.f32.mrb[0].mxu0
  %v5526 = vadd.f32 %v5473, %v5525
  %v5527 = vpop.f32.mrb[0].mxu0
  %5528 = vdwg.mxu0
  %5529 = vst.msk [vmem:[%s11] sm:$0xff] %vm4475, %v5523
  %vm5530 = vcmask 9216
  %5531 = vst.msk [vmem:[%s11 + $0x8] sm:$0x3] %vm5530, %v5526
  // Predicated region
  $region46: #{lenet_tail_forward.1} parent=0 // pred_check
    _
  $region47: #{lenet_tail_forward.1} parent=0 // pred_check_branch
    %5533 = sbr.rel (0) target = $region49
  $region48: #{lenet_tail_forward.1} parent=0 // pred_region
    _
  $region49: #{lenet_tail_forward.1} parent=0 // pred_fallthru
    _
  // Predicated region
  $region50: #{lenet_tail_forward.1} parent=0 // pred_check
    _
  $region51: #{lenet_tail_forward.1} parent=0 // pred_check_branch
    %5535 = sbr.rel (0) target = $region53
  $region52: #{lenet_tail_forward.1} parent=0 // pred_region
    _
  $region53: #{lenet_tail_forward.1} parent=0 // pred_fallthru
    _

</llo_original>
